<compile_context>
chip_gen: v7x
topology: tpu7x:2x2x1
jax: 0.10.0
libtpu: 0.0.40
codegen_flags: <defaults>
</compile_context>

<pallas_src>
import functools

import jax
import jax.numpy as jnp
from jax.experimental import pallas as pl
from jax.experimental.pallas import tpu as pltpu

# ----------------------------------------------------------------------------
# Configuration consistent with DINOv2 ViT-S/14 structure (shrunk dims).
# ----------------------------------------------------------------------------
PATCH = 14            # dinov2_vits14 patch size
DEPTH = 12            # 12 blocks -> range(12) in the torch concat
EMBED_DIM = 128       # lane-dense toy dim (real ViT-S is 384 = 3*128)
NUM_HEADS = 2         # real ViT-S has 6 heads (head_dim = 64 in both cases)
HEAD_DIM = EMBED_DIM // NUM_HEADS
MLP_HIDDEN = 4 * EMBED_DIM
LN_EPS = 1e-6         # DINOv2 LayerNorm eps
LS_INIT = 1e-5        # DINOv2 LayerScale init value


def _round_up(v, m):
    return (v + m - 1) // m * m


# ----------------------------------------------------------------------------
# Kernel 1: patch embedding matmul (Conv2d kernel=stride=patch, after im2col).
# Row-tiled; bf16 operands, f32 accumulation.
# ----------------------------------------------------------------------------
def _patch_embed_kernel(xp_ref, w_ref, b_ref, o_ref):
    o_ref[...] = (
        jnp.dot(xp_ref[...], w_ref[...], preferred_element_type=jnp.float32)
        + b_ref[...]
    ).astype(o_ref.dtype)


# ----------------------------------------------------------------------------
# Kernel 2: all 12 transformer blocks fused into one kernel.
#   grid = (B, DEPTH)   batch axis "parallel" (megacore), depth axis "arbitrary"
#   residual token stream for the current image lives in VMEM scratch across the
#   whole depth sweep; per-block bf16 weights stream via BlockSpec index_map over
#   stacked [DEPTH, ...] arrays; each block writes its tokens to out block (b, d).
# ----------------------------------------------------------------------------
def _vit_blocks_kernel(
    key_bias_ref, tok0_ref,
    ln1_g_ref, ln1_b_ref,
    q_w_ref, q_b_ref, k_w_ref, k_b_ref, v_w_ref, v_b_ref,
    proj_w_ref, proj_b_ref, ls1_ref,
    ln2_g_ref, ln2_b_ref,
    fc1_w_ref, fc1_b_ref, fc2_w_ref, fc2_b_ref, ls2_ref,
    out_ref,
    tok_scratch,
    *, num_heads, head_dim, dim,
):
    d = pl.program_id(1)

    @pl.when(d == 0)
    def _():
        # load this image's embedded tokens into the resident residual stream.
        tok_scratch[...] = tok0_ref[...]

    x = tok_scratch[...]                                   # [TP, D] f32
    tp = x.shape[0]
    inv_d = 1.0 / dim

    def layer_norm(v, g, b):
        # one-pass stats: var = E[x^2] - E[x]^2  (halves lane-axis reductions)
        mu = jnp.sum(v, axis=-1, keepdims=True) * inv_d
        ms = jnp.sum(v * v, axis=-1, keepdims=True) * inv_d
        var = jnp.maximum(ms - mu * mu, 0.0)
        return (v - mu) * jax.lax.rsqrt(var + LN_EPS) * g + b

    # ---------------- attention branch: x + ls1 * proj(attn(ln1(x))) --------
    h = layer_norm(x, ln1_g_ref[...], ln1_b_ref[...]).astype(jnp.bfloat16)
    q = jnp.dot(h, q_w_ref[...], preferred_element_type=jnp.float32) + q_b_ref[...]
    k = jnp.dot(h, k_w_ref[...], preferred_element_type=jnp.float32) + k_b_ref[...]
    v = jnp.dot(h, v_w_ref[...], preferred_element_type=jnp.float32) + v_b_ref[...]

    scale = float(head_dim) ** -0.5
    qb = (q * scale).astype(jnp.bfloat16)                  # [TP, D]
    kb = k.astype(jnp.bfloat16)
    vb = v.astype(jnp.bfloat16)
    kbias = key_bias_ref[...]                              # [1, TP] pad-key mask

    def dot_nt(a, b):  # a @ b.T (contraction on last dim of both)
        return jax.lax.dot_general(
            a, b, (((1,), (1,)), ((), ())), preferred_element_type=jnp.float32)

    # Small static loop over heads only (batch is on the grid).  The head-merge
    # concat is avoided by accumulating per-head partials against sublane slices
    # of proj_w:  attn @ proj_w == sum_h head_h @ proj_w[h*Dh:(h+1)*Dh, :].
    attn = None
    for hi in range(num_heads):
        c0 = hi * head_dim
        s = dot_nt(qb[:, c0:c0 + head_dim], kb[:, c0:c0 + head_dim]) + kbias
        s = s - jnp.max(s, axis=-1, keepdims=True)
        p = jnp.exp(s)
        p = p * pl.reciprocal(jnp.sum(p, axis=-1, keepdims=True), approx=True)
        ho = jnp.dot(p.astype(jnp.bfloat16), vb[:, c0:c0 + head_dim],
                     preferred_element_type=jnp.float32)   # [TP, Dh]
        part = jnp.dot(ho.astype(jnp.bfloat16),
                       proj_w_ref[c0:c0 + head_dim, :],
                       preferred_element_type=jnp.float32)  # [TP, D]
        attn = part if attn is None else attn + part
    attn = attn + proj_b_ref[...]
    x = x + attn * ls1_ref[...]          # fused LayerScale + residual

    # ---------------- MLP branch: x + ls2 * fc2(gelu(fc1(ln2(x)))) ----------
    h2 = layer_norm(x, ln2_g_ref[...], ln2_b_ref[...]).astype(jnp.bfloat16)
    h2 = (jnp.dot(h2, fc1_w_ref[...], preferred_element_type=jnp.float32)
          + fc1_b_ref[...])
    # TODO(synk): torch nn.GELU() default is exact erf; tanh approximation used to
    # guarantee TPU EUP lowering inside the kernel.
    h2 = jax.nn.gelu(h2, approximate=True).astype(jnp.bfloat16)
    h2 = (jnp.dot(h2, fc2_w_ref[...], preferred_element_type=jnp.float32)
          + fc2_b_ref[...])
    x = x + h2 * ls2_ref[...]

    tok_scratch[...] = x                                   # carry to block d+1
    out_ref[...] = x.astype(out_ref.dtype)                 # features['blocks.d']


# ----------------------------------------------------------------------------
# Model wrapper.
# ----------------------------------------------------------------------------
def vit_feature_extractor(x, params):
    """x: NCHW float32 [B, 3, H, W] with H, W multiples of PATCH."""
    B, C, H, W = x.shape
    p = PATCH
    gh, gw = H // p, W // p
    N = gh * gw
    T = N + 1                         # cls + patch tokens
    TP = _round_up(T, 8)              # sublane-aligned token count
    D = EMBED_DIM
    Hm = MLP_HIDDEN

    # Patch embedding = Conv2d(C, D, kernel=p, stride=p): im2col (glue) with
    # per-patch flatten order (C, ph, pw) to match torch conv weight, bf16 feed.
    # TODO(synk): at real resolution fold this im2col into the patch-embed kernel
    # via an index_map over (B, gh, gw) to avoid the wrapper-side HBM relayout.
    xp = (
        x.reshape(B, C, gh, p, gw, p)
        .transpose(0, 2, 4, 1, 3, 5)
        .reshape(B * N, C * p * p)
    ).astype(jnp.bfloat16)

    BN = B * N
    K = C * p * p
    TM = min(256, _round_up(BN, 8))   # feed the MXU >=256 rows/step at real sizes
    emb = pl.pallas_call(
        _patch_embed_kernel,
        grid=(pl.cdiv(BN, TM),),
        in_specs=[
            pl.BlockSpec((TM, K), lambda i: (i, 0)),
            pl.BlockSpec((K, D), lambda i: (0, 0)),
            pl.BlockSpec((1, D), lambda i: (0, 0)),
        ],
        out_specs=pl.BlockSpec((TM, D), lambda i: (i, 0)),
        out_shape=jax.ShapeDtypeStruct((BN, D), jnp.float32),
        compiler_params=pltpu.CompilerParams(dimension_semantics=("parallel",)),
    )(xp, params["patch_w"], params["patch_b"])

    # One-time token assembly (glue): [cls | patches] + pos embed, pad to TP tokens.
    tok = jnp.concatenate(
        [jnp.broadcast_to(params["cls_token"], (B, 1, D)), emb.reshape(B, N, D)],
        axis=1,
    ) + params["pos_embed"]                                 # [B, T, D]
    tok = jnp.pad(tok, ((0, 0), (0, TP - T), (0, 0)))       # [B, TP, D] f32

    # additive mask for zero-padded key tokens: computed once, resident in VMEM.
    key_bias = jnp.where(jnp.arange(TP) < T, 0.0, -1e30).astype(jnp.float32)
    key_bias = key_bias.reshape(1, TP)

    # ---- single fused kernel over (batch, DEPTH) ----
    w = params["stacked"]
    kernel = functools.partial(
        _vit_blocks_kernel, num_heads=NUM_HEADS, head_dim=HEAD_DIM, dim=D)

    def per_block(shape):
        nd = len(shape)
        return pl.BlockSpec((None,) + shape, lambda b, d: (d,) + (0,) * nd)

    in_specs = [
        pl.BlockSpec((1, TP), lambda b, d: (0, 0)),          # key_bias (resident)
        pl.BlockSpec((None, TP, D), lambda b, d: (b, 0, 0)),  # tok0 (per image)
        per_block((1, D)),        # ln1_g
        per_block((1, D)),        # ln1_b
        per_block((D, D)),        # q_w  (bf16)
        per_block((1, D)),        # q_b
        per_block((D, D)),        # k_w  (bf16)
        per_block((1, D)),        # k_b
        per_block((D, D)),        # v_w  (bf16)
        per_block((1, D)),        # v_b
        per_block((D, D)),        # proj_w (bf16)
        per_block((1, D)),        # proj_b
        per_block((1, D)),        # ls1
        per_block((1, D)),        # ln2_g
        per_block((1, D)),        # ln2_b
        per_block((D, Hm)),       # fc1_w (bf16)
        per_block((1, Hm)),       # fc1_b
        per_block((Hm, D)),       # fc2_w (bf16)
        per_block((1, D)),        # fc2_b
        per_block((1, D)),        # ls2
    ]

    feats = pl.pallas_call(
        kernel,
        grid=(B, DEPTH),
        in_specs=in_specs,
        out_specs=pl.BlockSpec((None, None, TP, D), lambda b, d: (b, d, 0, 0)),
        out_shape=jax.ShapeDtypeStruct((B, DEPTH, TP, D), jnp.float32),
        scratch_shapes=[pltpu.VMEM((TP, D), jnp.float32)],  # resident residual stream
        compiler_params=pltpu.CompilerParams(
            # batch tiles split across TensorCores; depth carries the residual.
            dimension_semantics=("parallel", "arbitrary"),
            vmem_limit_bytes=32 * 1024 * 1024,
        ),
    )(
        key_bias, tok,
        w["ln1_g"], w["ln1_b"],
        w["q_w"], w["q_b"], w["k_w"], w["k_b"], w["v_w"], w["v_b"],
        w["proj_w"], w["proj_b"], w["ls1"],
        w["ln2_g"], w["ln2_b"],
        w["fc1_w"], w["fc1_b"], w["fc2_w"], w["fc2_b"], w["ls2"],
    )

    # TODO(synk): `get_intermediate_features` is not in the public DINOv2 API; each
    # block's raw token output (cls + patch tokens, no final norm) is used as
    # features['blocks.i'].  Strip padded tokens and emulate torch.cat(dim=1).
    feats = feats[:, :, :T, :]                              # [B, DEPTH, T, D]
    return feats.reshape(B, DEPTH * T, D)


# ----------------------------------------------------------------------------
# Deterministic parameter init (synthetic weights, DINOv2-shaped, stacked per block).
# Matmul weights stored bf16; LN / bias / LayerScale / embeddings stay f32.
# ----------------------------------------------------------------------------
def init_params(key, num_patches):
    D = EMBED_DIM
    Hm = MLP_HIDDEN
    patch_dim = 3 * PATCH * PATCH
    keys = jax.random.split(key, 9)
    bf = jnp.bfloat16

    def nrm(k, shape, dtype=jnp.float32, scale=0.02):
        return (scale * jax.random.normal(k, shape)).astype(dtype)

    return {
        "patch_w": nrm(keys[0], (patch_dim, D), bf),  # Conv2d weight flattened + T
        "patch_b": jnp.zeros((1, D), jnp.float32),
        "cls_token": nrm(keys[1], (1, 1, D)),
        "pos_embed": nrm(keys[2], (1, num_patches + 1, D)),
        "stacked": {
            "ln1_g": jnp.ones((DEPTH, 1, D), jnp.float32),
            "ln1_b": jnp.zeros((DEPTH, 1, D), jnp.float32),
            "q_w": nrm(keys[3], (DEPTH, D, D), bf),
            "q_b": jnp.zeros((DEPTH, 1, D), jnp.float32),
            "k_w": nrm(keys[4], (DEPTH, D, D), bf),
            "k_b": jnp.zeros((DEPTH, 1, D), jnp.float32),
            "v_w": nrm(keys[5], (DEPTH, D, D), bf),
            "v_b": jnp.zeros((DEPTH, 1, D), jnp.float32),
            "proj_w": nrm(keys[6], (DEPTH, D, D), bf),
            "proj_b": jnp.zeros((DEPTH, 1, D), jnp.float32),
            "ls1": jnp.full((DEPTH, 1, D), LS_INIT, jnp.float32),
            "ln2_g": jnp.ones((DEPTH, 1, D), jnp.float32),
            "ln2_b": jnp.zeros((DEPTH, 1, D), jnp.float32),
            "fc1_w": nrm(keys[7], (DEPTH, D, Hm), bf),
            "fc1_b": jnp.zeros((DEPTH, 1, Hm), jnp.float32),
            "fc2_w": nrm(keys[8], (DEPTH, Hm, D), bf),
            "fc2_b": jnp.zeros((DEPTH, 1, D), jnp.float32),
            "ls2": jnp.full((DEPTH, 1, D), LS_INIT, jnp.float32),
        },
    }


if __name__ == "__main__":
    key = jax.random.PRNGKey(0)
    kx, kp = jax.random.split(key)

    B, C, IMG = 2, 3, 28                      # 28x28 with patch 14 -> 2x2 = 4 patches
    x = jax.random.normal(kx, (B, C, IMG, IMG), dtype=jnp.float32)

    num_patches = (IMG // PATCH) ** 2
    params = init_params(kp, num_patches)

    fn = jax.jit(lambda xx: vit_feature_extractor(xx, params))
    out = jax.block_until_ready(fn(x))

    expected = (B, DEPTH * (num_patches + 1), EMBED_DIM)
    assert out.shape == expected, (out.shape, expected)
    assert bool(jnp.all(jnp.isfinite(out)))
    print("KERNEL_OK")
</pallas_src>

<mosaic_0001>
module attributes {stable_mosaic.version = 11 : i64} {
  func.func @_patch_embed_kernel(%arg0: i32, %arg1: memref<8x588xbf16, #tpu.memory_space<vmem>>, %arg2: memref<588x128xbf16, #tpu.memory_space<vmem>>, %arg3: memref<1x128xf32, #tpu.memory_space<vmem>>, %arg4: memref<8x128xf32, #tpu.memory_space<vmem>>) attributes {dimension_semantics = [#tpu.dimension_semantics<parallel>], iteration_bounds = array<i64: 1>, scalar_prefetch = 0 : i64, scratch_operands = 0 : i64, tpu.core_type = #tpu.core_type<tc>, window_params = [{transform_indices = @transform_0, window_bounds = array<i64: 8, 588>}, {pipeline_mode = #tpu.pipeline_mode<synchronous>, transform_indices = @transform_1, window_bounds = array<i64: 588, 128>}, {pipeline_mode = #tpu.pipeline_mode<synchronous>, transform_indices = @transform_2, window_bounds = array<i64: 1, 128>}, {transform_indices = @transform_3, window_bounds = array<i64: 8, 128>}]} {
    %c0 = arith.constant 0 : index
    %c0_0 = arith.constant 0 : index
    %0 = vector.load %arg1[%c0, %c0_0] : memref<8x588xbf16, #tpu.memory_space<vmem>>, vector<8x588xbf16>
    %c0_1 = arith.constant 0 : index
    %c0_2 = arith.constant 0 : index
    %1 = vector.load %arg2[%c0_1, %c0_2] : memref<588x128xbf16, #tpu.memory_space<vmem>>, vector<588x128xbf16>
    %cst = arith.constant dense<0.000000e+00> : vector<8x128xf32>
    %2 = tpu.matmul %0, %1, %cst {dimension_numbers = #tpu.dot_dimension_numbers<[1], [0], [0], [1], [0, 0, 1, 1], [], []>} : vector<8x588xbf16>, vector<588x128xbf16>, vector<8x128xf32> -> vector<8x128xf32>
    %c0_3 = arith.constant 0 : index
    %c0_4 = arith.constant 0 : index
    %3 = vector.load %arg3[%c0_3, %c0_4] : memref<1x128xf32, #tpu.memory_space<vmem>>, vector<1x128xf32>
    %4 = vector.broadcast %3 : vector<1x128xf32> to vector<8x128xf32>
    %5 = arith.addf %2, %4 : vector<8x128xf32>
    %c0_5 = arith.constant 0 : index
    %c0_6 = arith.constant 0 : index
    %6 = vector.load %arg4[%c0_5, %c0_6] : memref<8x128xf32, #tpu.memory_space<vmem>>, vector<8x128xf32>
    tpu.vector_store %arg4[%c0_5, %c0_6], %5 {strides = array<i32>} : memref<8x128xf32, #tpu.memory_space<vmem>>, vector<8x128xf32>,
    return
  }
  func.func @transform_0(%arg0: i32) -> (i32, i32) {
    %c0_i32 = arith.constant 0 : i32
    %c0_i32_0 = arith.constant 0 : i32
    return %arg0, %c0_i32 : i32, i32
  }
  func.func @transform_1(%arg0: i32) -> (i32, i32) {
    %c0_i32 = arith.constant 0 : i32
    %c0_i32_0 = arith.constant 0 : i32
    %c0_i32_1 = arith.constant 0 : i32
    return %c0_i32, %c0_i32_0 : i32, i32
  }
  func.func @transform_2(%arg0: i32) -> (i32, i32) {
    %c0_i32 = arith.constant 0 : i32
    %c0_i32_0 = arith.constant 0 : i32
    %c0_i32_1 = arith.constant 0 : i32
    return %c0_i32, %c0_i32_0 : i32, i32
  }
  func.func @transform_3(%arg0: i32) -> (i32, i32) {
    %c0_i32 = arith.constant 0 : i32
    %c0_i32_0 = arith.constant 0 : i32
    return %arg0, %c0_i32 : i32, i32
  }
}

module attributes {stable_mosaic.version = 11 : i64} {
  func.func @_vit_blocks_kernel(%arg0: i32, %arg1: i32, %arg2: memref<1x8xf32, #tpu.memory_space<vmem>>, %arg3: memref<1x8x128xf32, #tpu.memory_space<vmem>>, %arg4: memref<1x1x128xf32, #tpu.memory_space<vmem>>, %arg5: memref<1x1x128xf32, #tpu.memory_space<vmem>>, %arg6: memref<1x128x128xbf16, #tpu.memory_space<vmem>>, %arg7: memref<1x1x128xf32, #tpu.memory_space<vmem>>, %arg8: memref<1x128x128xbf16, #tpu.memory_space<vmem>>, %arg9: memref<1x1x128xf32, #tpu.memory_space<vmem>>, %arg10: memref<1x128x128xbf16, #tpu.memory_space<vmem>>, %arg11: memref<1x1x128xf32, #tpu.memory_space<vmem>>, %arg12: memref<1x128x128xbf16, #tpu.memory_space<vmem>>, %arg13: memref<1x1x128xf32, #tpu.memory_space<vmem>>, %arg14: memref<1x1x128xf32, #tpu.memory_space<vmem>>, %arg15: memref<1x1x128xf32, #tpu.memory_space<vmem>>, %arg16: memref<1x1x128xf32, #tpu.memory_space<vmem>>, %arg17: memref<1x128x512xbf16, #tpu.memory_space<vmem>>, %arg18: memref<1x1x512xf32, #tpu.memory_space<vmem>>, %arg19: memref<1x512x128xbf16, #tpu.memory_space<vmem>>, %arg20: memref<1x1x128xf32, #tpu.memory_space<vmem>>, %arg21: memref<1x1x128xf32, #tpu.memory_space<vmem>>, %arg22: memref<1x1x8x128xf32, #tpu.memory_space<vmem>>, %arg23: memref<8x128xf32, #tpu.memory_space<vmem>>) attributes {dimension_semantics = [#tpu.dimension_semantics<parallel>, #tpu.dimension_semantics<arbitrary>], iteration_bounds = array<i64: 2, 12>, scalar_prefetch = 0 : i64, scratch_operands = 1 : i64, tpu.core_type = #tpu.core_type<tc>, window_params = [{pipeline_mode = #tpu.pipeline_mode<synchronous>, transform_indices = @transform_0, window_bounds = array<i64: 1, 8>}, {transform_indices = @transform_1, window_bounds = array<i64: 1, 8, 128>}, {transform_indices = @transform_2, window_bounds = array<i64: 1, 1, 128>}, {transform_indices = @transform_3, window_bounds = array<i64: 1, 1, 128>}, {transform_indices = @transform_4, window_bounds = array<i64: 1, 128, 128>}, {transform_indices = @transform_5, window_bounds = array<i64: 1, 1, 128>}, {transform_indices = @transform_6, window_bounds = array<i64: 1, 128, 128>}, {transform_indices = @transform_7, window_bounds = array<i64: 1, 1, 128>}, {transform_indices = @transform_8, window_bounds = array<i64: 1, 128, 128>}, {transform_indices = @transform_9, window_bounds = array<i64: 1, 1, 128>}, {transform_indices = @transform_10, window_bounds = array<i64: 1, 128, 128>}, {transform_indices = @transform_11, window_bounds = array<i64: 1, 1, 128>}, {transform_indices = @transform_12, window_bounds = array<i64: 1, 1, 128>}, {transform_indices = @transform_13, window_bounds = array<i64: 1, 1, 128>}, {transform_indices = @transform_14, window_bounds = array<i64: 1, 1, 128>}, {transform_indices = @transform_15, window_bounds = array<i64: 1, 128, 512>}, {transform_indices = @transform_16, window_bounds = array<i64: 1, 1, 512>}, {transform_indices = @transform_17, window_bounds = array<i64: 1, 512, 128>}, {transform_indices = @transform_18, window_bounds = array<i64: 1, 1, 128>}, {transform_indices = @transform_19, window_bounds = array<i64: 1, 1, 128>}, {transform_indices = @transform_20, window_bounds = array<i64: 1, 1, 8, 128>}]} {
    %c0_i32 = arith.constant 0 : i32
    %0 = arith.cmpi eq, %arg1, %c0_i32 : i32
    %1 = arith.extui %0 : i1 to i32
    %c0_i32_0 = arith.constant 0 : i32
    %2 = arith.cmpi ne, %1, %c0_i32_0 : i32
    scf.if %2 {
      %c0_97 = arith.constant 0 : index
      %c0_98 = arith.constant 0 : index
      %c0_99 = arith.constant 0 : index
      %180 = vector.load %arg3[%c0_97, %c0_98, %c0_99] : memref<1x8x128xf32, #tpu.memory_space<vmem>>, vector<1x8x128xf32>
      %181 = vector.shape_cast %180 : vector<1x8x128xf32> to vector<8x128xf32>
      %c0_100 = arith.constant 0 : index
      %c0_101 = arith.constant 0 : index
      %182 = vector.load %arg23[%c0_100, %c0_101] : memref<8x128xf32, #tpu.memory_space<vmem>>, vector<8x128xf32>
      tpu.vector_store %arg23[%c0_100, %c0_101], %181 {strides = array<i32>} : memref<8x128xf32, #tpu.memory_space<vmem>>, vector<8x128xf32>,
    } else {
    }
    %c0 = arith.constant 0 : index
    %c0_1 = arith.constant 0 : index
    %3 = vector.load %arg23[%c0, %c0_1] : memref<8x128xf32, #tpu.memory_space<vmem>>, vector<8x128xf32>
    %c0_2 = arith.constant 0 : index
    %c0_3 = arith.constant 0 : index
    %c0_4 = arith.constant 0 : index
    %4 = vector.load %arg4[%c0_2, %c0_3, %c0_4] : memref<1x1x128xf32, #tpu.memory_space<vmem>>, vector<1x1x128xf32>
    %5 = vector.shape_cast %4 : vector<1x1x128xf32> to vector<1x128xf32>
    %c0_5 = arith.constant 0 : index
    %c0_6 = arith.constant 0 : index
    %c0_7 = arith.constant 0 : index
    %6 = vector.load %arg5[%c0_5, %c0_6, %c0_7] : memref<1x1x128xf32, #tpu.memory_space<vmem>>, vector<1x1x128xf32>
    %7 = vector.shape_cast %6 : vector<1x1x128xf32> to vector<1x128xf32>
    %cst = arith.constant dense<0.000000e+00> : vector<8xf32>
    %8 = vector.multi_reduction <add>, %3, %cst [1] : vector<8x128xf32> to vector<8xf32>
    %9 = vector.shape_cast %8 : vector<8xf32> to vector<8x1xf32>
    %cst_8 = arith.constant 7.812500e-03 : f32
    %10 = vector.broadcast %cst_8 : f32 to vector<8x1xf32>
    %11 = arith.mulf %9, %10 : vector<8x1xf32>
    %12 = arith.mulf %3, %3 : vector<8x128xf32>
    %cst_9 = arith.constant dense<0.000000e+00> : vector<8xf32>
    %13 = vector.multi_reduction <add>, %12, %cst_9 [1] : vector<8x128xf32> to vector<8xf32>
    %14 = vector.shape_cast %13 : vector<8xf32> to vector<8x1xf32>
    %cst_10 = arith.constant 7.812500e-03 : f32
    %15 = vector.broadcast %cst_10 : f32 to vector<8x1xf32>
    %16 = arith.mulf %14, %15 : vector<8x1xf32>
    %17 = arith.mulf %11, %11 : vector<8x1xf32>
    %18 = arith.subf %16, %17 : vector<8x1xf32>
    %cst_11 = arith.constant 0.000000e+00 : f32
    %19 = vector.broadcast %cst_11 : f32 to vector<8x1xf32>
    %20 = arith.maximumf %18, %19 : vector<8x1xf32>
    %21 = vector.broadcast %11 : vector<8x1xf32> to vector<8x128xf32>
    %22 = arith.subf %3, %21 : vector<8x128xf32>
    %cst_12 = arith.constant 9.99999997E-7 : f32
    %23 = vector.broadcast %cst_12 : f32 to vector<8x1xf32>
    %24 = arith.addf %20, %23 : vector<8x1xf32>
    %25 = math.rsqrt %24 : vector<8x1xf32>
    %26 = vector.broadcast %25 : vector<8x1xf32> to vector<8x128xf32>
    %27 = arith.mulf %22, %26 : vector<8x128xf32>
    %28 = vector.broadcast %5 : vector<1x128xf32> to vector<8x128xf32>
    %29 = arith.mulf %27, %28 : vector<8x128xf32>
    %30 = vector.broadcast %7 : vector<1x128xf32> to vector<8x128xf32>
    %31 = arith.addf %29, %30 : vector<8x128xf32>
    %32 = arith.truncf %31 : vector<8x128xf32> to vector<8x128xbf16>
    %c0_13 = arith.constant 0 : index
    %c0_14 = arith.constant 0 : index
    %c0_15 = arith.constant 0 : index
    %33 = vector.load %arg6[%c0_13, %c0_14, %c0_15] : memref<1x128x128xbf16, #tpu.memory_space<vmem>>, vector<1x128x128xbf16>
    %34 = vector.shape_cast %33 : vector<1x128x128xbf16> to vector<128x128xbf16>
    %cst_16 = arith.constant dense<0.000000e+00> : vector<8x128xf32>
    %35 = tpu.matmul %32, %34, %cst_16 {dimension_numbers = #tpu.dot_dimension_numbers<[1], [0], [0], [1], [0, 0, 1, 1], [], []>} : vector<8x128xbf16>, vector<128x128xbf16>, vector<8x128xf32> -> vector<8x128xf32>
    %c0_17 = arith.constant 0 : index
    %c0_18 = arith.constant 0 : index
    %c0_19 = arith.constant 0 : index
    %36 = vector.load %arg7[%c0_17, %c0_18, %c0_19] : memref<1x1x128xf32, #tpu.memory_space<vmem>>, vector<1x1x128xf32>
    %37 = vector.shape_cast %36 : vector<1x1x128xf32> to vector<1x128xf32>
    %38 = vector.broadcast %37 : vector<1x128xf32> to vector<8x128xf32>
    %39 = arith.addf %35, %38 : vector<8x128xf32>
    %c0_20 = arith.constant 0 : index
    %c0_21 = arith.constant 0 : index
    %c0_22 = arith.constant 0 : index
    %40 = vector.load %arg8[%c0_20, %c0_21, %c0_22] : memref<1x128x128xbf16, #tpu.memory_space<vmem>>, vector<1x128x128xbf16>
    %41 = vector.shape_cast %40 : vector<1x128x128xbf16> to vector<128x128xbf16>
    %cst_23 = arith.constant dense<0.000000e+00> : vector<8x128xf32>
    %42 = tpu.matmul %32, %41, %cst_23 {dimension_numbers = #tpu.dot_dimension_numbers<[1], [0], [0], [1], [0, 0, 1, 1], [], []>} : vector<8x128xbf16>, vector<128x128xbf16>, vector<8x128xf32> -> vector<8x128xf32>
    %c0_24 = arith.constant 0 : index
    %c0_25 = arith.constant 0 : index
    %c0_26 = arith.constant 0 : index
    %43 = vector.load %arg9[%c0_24, %c0_25, %c0_26] : memref<1x1x128xf32, #tpu.memory_space<vmem>>, vector<1x1x128xf32>
    %44 = vector.shape_cast %43 : vector<1x1x128xf32> to vector<1x128xf32>
    %45 = vector.broadcast %44 : vector<1x128xf32> to vector<8x128xf32>
    %46 = arith.addf %42, %45 : vector<8x128xf32>
    %c0_27 = arith.constant 0 : index
    %c0_28 = arith.constant 0 : index
    %c0_29 = arith.constant 0 : index
    %47 = vector.load %arg10[%c0_27, %c0_28, %c0_29] : memref<1x128x128xbf16, #tpu.memory_space<vmem>>, vector<1x128x128xbf16>
    %48 = vector.shape_cast %47 : vector<1x128x128xbf16> to vector<128x128xbf16>
    %cst_30 = arith.constant dense<0.000000e+00> : vector<8x128xf32>
    %49 = tpu.matmul %32, %48, %cst_30 {dimension_numbers = #tpu.dot_dimension_numbers<[1], [0], [0], [1], [0, 0, 1, 1], [], []>} : vector<8x128xbf16>, vector<128x128xbf16>, vector<8x128xf32> -> vector<8x128xf32>
    %c0_31 = arith.constant 0 : index
    %c0_32 = arith.constant 0 : index
    %c0_33 = arith.constant 0 : index
    %50 = vector.load %arg11[%c0_31, %c0_32, %c0_33] : memref<1x1x128xf32, #tpu.memory_space<vmem>>, vector<1x1x128xf32>
    %51 = vector.shape_cast %50 : vector<1x1x128xf32> to vector<1x128xf32>
    %52 = vector.broadcast %51 : vector<1x128xf32> to vector<8x128xf32>
    %53 = arith.addf %49, %52 : vector<8x128xf32>
    %cst_34 = arith.constant 1.250000e-01 : f32
    %54 = vector.broadcast %cst_34 : f32 to vector<8x128xf32>
    %55 = arith.mulf %39, %54 : vector<8x128xf32>
    %56 = arith.truncf %55 : vector<8x128xf32> to vector<8x128xbf16>
    %57 = arith.truncf %46 : vector<8x128xf32> to vector<8x128xbf16>
    %58 = arith.truncf %53 : vector<8x128xf32> to vector<8x128xbf16>
    %c0_35 = arith.constant 0 : index
    %c0_36 = arith.constant 0 : index
    %59 = vector.load %arg2[%c0_35, %c0_36] : memref<1x8xf32, #tpu.memory_space<vmem>>, vector<1x8xf32>
    %60 = vector.extract_strided_slice %56 {offsets = [0, 0], sizes = [8, 64], strides = [1, 1]} : vector<8x128xbf16> to vector<8x64xbf16>
    %61 = vector.extract_strided_slice %57 {offsets = [0, 0], sizes = [8, 64], strides = [1, 1]} : vector<8x128xbf16> to vector<8x64xbf16>
    %cst_37 = arith.constant dense<0.000000e+00> : vector<8x8xf32>
    %62 = tpu.matmul %60, %61, %cst_37 {dimension_numbers = #tpu.dot_dimension_numbers<[1], [1], [0], [0], [0, 0, 1, 0], [], []>} : vector<8x64xbf16>, vector<8x64xbf16>, vector<8x8xf32> -> vector<8x8xf32>
    %63 = vector.broadcast %59 : vector<1x8xf32> to vector<8x8xf32>
    %64 = arith.addf %62, %63 : vector<8x8xf32>
    %cst_38 = arith.constant dense<0xFF800000> : vector<8xf32>
    %65 = vector.multi_reduction <maximumf>, %64, %cst_38 [1] : vector<8x8xf32> to vector<8xf32>
    %66 = vector.shape_cast %65 : vector<8xf32> to vector<8x1xf32>
    %67 = vector.broadcast %66 : vector<8x1xf32> to vector<8x8xf32>
    %68 = arith.subf %64, %67 : vector<8x8xf32>
    %69 = math.exp %68 : vector<8x8xf32>
    %cst_39 = arith.constant dense<0.000000e+00> : vector<8xf32>
    %70 = vector.multi_reduction <add>, %69, %cst_39 [1] : vector<8x8xf32> to vector<8xf32>
    %71 = vector.shape_cast %70 : vector<8xf32> to vector<8x1xf32>
    %72 = tpu.reciprocal %71 {approx = true} : vector<8x1xf32> -> vector<8x1xf32>
    %73 = vector.broadcast %72 : vector<8x1xf32> to vector<8x8xf32>
    %74 = arith.mulf %69, %73 : vector<8x8xf32>
    %75 = arith.truncf %74 : vector<8x8xf32> to vector<8x8xbf16>
    %76 = vector.extract_strided_slice %58 {offsets = [0, 0], sizes = [8, 64], strides = [1, 1]} : vector<8x128xbf16> to vector<8x64xbf16>
    %cst_40 = arith.constant dense<0.000000e+00> : vector<8x64xf32>
    %77 = tpu.matmul %75, %76, %cst_40 {dimension_numbers = #tpu.dot_dimension_numbers<[1], [0], [0], [1], [0, 0, 1, 1], [], []>} : vector<8x8xbf16>, vector<8x64xbf16>, vector<8x64xf32> -> vector<8x64xf32>
    %78 = arith.truncf %77 : vector<8x64xf32> to vector<8x64xbf16>
    %c0_41 = arith.constant 0 : index
    %c0_42 = arith.constant 0 : index
    %c0_43 = arith.constant 0 : index
    %79 = vector.load %arg12[%c0_41, %c0_42, %c0_43] : memref<1x128x128xbf16, #tpu.memory_space<vmem>>, vector<1x64x128xbf16>
    %80 = vector.shape_cast %79 : vector<1x64x128xbf16> to vector<64x128xbf16>
    %cst_44 = arith.constant dense<0.000000e+00> : vector<8x128xf32>
    %81 = tpu.matmul %78, %80, %cst_44 {dimension_numbers = #tpu.dot_dimension_numbers<[1], [0], [0], [1], [0, 0, 1, 1], [], []>} : vector<8x64xbf16>, vector<64x128xbf16>, vector<8x128xf32> -> vector<8x128xf32>
    %82 = vector.extract_strided_slice %56 {offsets = [0, 64], sizes = [8, 64], strides = [1, 1]} : vector<8x128xbf16> to vector<8x64xbf16>
    %83 = vector.extract_strided_slice %57 {offsets = [0, 64], sizes = [8, 64], strides = [1, 1]} : vector<8x128xbf16> to vector<8x64xbf16>
    %cst_45 = arith.constant dense<0.000000e+00> : vector<8x8xf32>
    %84 = tpu.matmul %82, %83, %cst_45 {dimension_numbers = #tpu.dot_dimension_numbers<[1], [1], [0], [0], [0, 0, 1, 0], [], []>} : vector<8x64xbf16>, vector<8x64xbf16>, vector<8x8xf32> -> vector<8x8xf32>
    %85 = vector.broadcast %59 : vector<1x8xf32> to vector<8x8xf32>
    %86 = arith.addf %84, %85 : vector<8x8xf32>
    %cst_46 = arith.constant dense<0xFF800000> : vector<8xf32>
    %87 = vector.multi_reduction <maximumf>, %86, %cst_46 [1] : vector<8x8xf32> to vector<8xf32>
    %88 = vector.shape_cast %87 : vector<8xf32> to vector<8x1xf32>
    %89 = vector.broadcast %88 : vector<8x1xf32> to vector<8x8xf32>
    %90 = arith.subf %86, %89 : vector<8x8xf32>
    %91 = math.exp %90 : vector<8x8xf32>
    %cst_47 = arith.constant dense<0.000000e+00> : vector<8xf32>
    %92 = vector.multi_reduction <add>, %91, %cst_47 [1] : vector<8x8xf32> to vector<8xf32>
    %93 = vector.shape_cast %92 : vector<8xf32> to vector<8x1xf32>
    %94 = tpu.reciprocal %93 {approx = true} : vector<8x1xf32> -> vector<8x1xf32>
    %95 = vector.broadcast %94 : vector<8x1xf32> to vector<8x8xf32>
    %96 = arith.mulf %91, %95 : vector<8x8xf32>
    %97 = arith.truncf %96 : vector<8x8xf32> to vector<8x8xbf16>
    %98 = vector.extract_strided_slice %58 {offsets = [0, 64], sizes = [8, 64], strides = [1, 1]} : vector<8x128xbf16> to vector<8x64xbf16>
    %cst_48 = arith.constant dense<0.000000e+00> : vector<8x64xf32>
    %99 = tpu.matmul %97, %98, %cst_48 {dimension_numbers = #tpu.dot_dimension_numbers<[1], [0], [0], [1], [0, 0, 1, 1], [], []>} : vector<8x8xbf16>, vector<8x64xbf16>, vector<8x64xf32> -> vector<8x64xf32>
    %100 = arith.truncf %99 : vector<8x64xf32> to vector<8x64xbf16>
    %c0_49 = arith.constant 0 : index
    %c64 = arith.constant 64 : index
    %c0_50 = arith.constant 0 : index
    %101 = vector.load %arg12[%c0_49, %c64, %c0_50] : memref<1x128x128xbf16, #tpu.memory_space<vmem>>, vector<1x64x128xbf16>
    %102 = vector.shape_cast %101 : vector<1x64x128xbf16> to vector<64x128xbf16>
    %cst_51 = arith.constant dense<0.000000e+00> : vector<8x128xf32>
    %103 = tpu.matmul %100, %102, %cst_51 {dimension_numbers = #tpu.dot_dimension_numbers<[1], [0], [0], [1], [0, 0, 1, 1], [], []>} : vector<8x64xbf16>, vector<64x128xbf16>, vector<8x128xf32> -> vector<8x128xf32>
    %104 = arith.addf %81, %103 : vector<8x128xf32>
    %c0_52 = arith.constant 0 : index
    %c0_53 = arith.constant 0 : index
    %c0_54 = arith.constant 0 : index
    %105 = vector.load %arg13[%c0_52, %c0_53, %c0_54] : memref<1x1x128xf32, #tpu.memory_space<vmem>>, vector<1x1x128xf32>
    %106 = vector.shape_cast %105 : vector<1x1x128xf32> to vector<1x128xf32>
    %107 = vector.broadcast %106 : vector<1x128xf32> to vector<8x128xf32>
    %108 = arith.addf %104, %107 : vector<8x128xf32>
    %c0_55 = arith.constant 0 : index
    %c0_56 = arith.constant 0 : index
    %c0_57 = arith.constant 0 : index
    %109 = vector.load %arg14[%c0_55, %c0_56, %c0_57] : memref<1x1x128xf32, #tpu.memory_space<vmem>>, vector<1x1x128xf32>
    %110 = vector.shape_cast %109 : vector<1x1x128xf32> to vector<1x128xf32>
    %111 = vector.broadcast %110 : vector<1x128xf32> to vector<8x128xf32>
    %112 = arith.mulf %108, %111 : vector<8x128xf32>
    %113 = arith.addf %3, %112 : vector<8x128xf32>
    %c0_58 = arith.constant 0 : index
    %c0_59 = arith.constant 0 : index
    %c0_60 = arith.constant 0 : index
    %114 = vector.load %arg15[%c0_58, %c0_59, %c0_60] : memref<1x1x128xf32, #tpu.memory_space<vmem>>, vector<1x1x128xf32>
    %115 = vector.shape_cast %114 : vector<1x1x128xf32> to vector<1x128xf32>
    %c0_61 = arith.constant 0 : index
    %c0_62 = arith.constant 0 : index
    %c0_63 = arith.constant 0 : index
    %116 = vector.load %arg16[%c0_61, %c0_62, %c0_63] : memref<1x1x128xf32, #tpu.memory_space<vmem>>, vector<1x1x128xf32>
    %117 = vector.shape_cast %116 : vector<1x1x128xf32> to vector<1x128xf32>
    %cst_64 = arith.constant dense<0.000000e+00> : vector<8xf32>
    %118 = vector.multi_reduction <add>, %113, %cst_64 [1] : vector<8x128xf32> to vector<8xf32>
    %119 = vector.shape_cast %118 : vector<8xf32> to vector<8x1xf32>
    %cst_65 = arith.constant 7.812500e-03 : f32
    %120 = vector.broadcast %cst_65 : f32 to vector<8x1xf32>
    %121 = arith.mulf %119, %120 : vector<8x1xf32>
    %122 = arith.mulf %113, %113 : vector<8x128xf32>
    %cst_66 = arith.constant dense<0.000000e+00> : vector<8xf32>
    %123 = vector.multi_reduction <add>, %122, %cst_66 [1] : vector<8x128xf32> to vector<8xf32>
    %124 = vector.shape_cast %123 : vector<8xf32> to vector<8x1xf32>
    %cst_67 = arith.constant 7.812500e-03 : f32
    %125 = vector.broadcast %cst_67 : f32 to vector<8x1xf32>
    %126 = arith.mulf %124, %125 : vector<8x1xf32>
    %127 = arith.mulf %121, %121 : vector<8x1xf32>
    %128 = arith.subf %126, %127 : vector<8x1xf32>
    %cst_68 = arith.constant 0.000000e+00 : f32
    %129 = vector.broadcast %cst_68 : f32 to vector<8x1xf32>
    %130 = arith.maximumf %128, %129 : vector<8x1xf32>
    %131 = vector.broadcast %121 : vector<8x1xf32> to vector<8x128xf32>
    %132 = arith.subf %113, %131 : vector<8x128xf32>
    %cst_69 = arith.constant 9.99999997E-7 : f32
    %133 = vector.broadcast %cst_69 : f32 to vector<8x1xf32>
    %134 = arith.addf %130, %133 : vector<8x1xf32>
    %135 = math.rsqrt %134 : vector<8x1xf32>
    %136 = vector.broadcast %135 : vector<8x1xf32> to vector<8x128xf32>
    %137 = arith.mulf %132, %136 : vector<8x128xf32>
    %138 = vector.broadcast %115 : vector<1x128xf32> to vector<8x128xf32>
    %139 = arith.mulf %137, %138 : vector<8x128xf32>
    %140 = vector.broadcast %117 : vector<1x128xf32> to vector<8x128xf32>
    %141 = arith.addf %139, %140 : vector<8x128xf32>
    %142 = arith.truncf %141 : vector<8x128xf32> to vector<8x128xbf16>
    %c0_70 = arith.constant 0 : index
    %c0_71 = arith.constant 0 : index
    %c0_72 = arith.constant 0 : index
    %143 = vector.load %arg17[%c0_70, %c0_71, %c0_72] : memref<1x128x512xbf16, #tpu.memory_space<vmem>>, vector<1x128x512xbf16>
    %144 = vector.shape_cast %143 : vector<1x128x512xbf16> to vector<128x512xbf16>
    %cst_73 = arith.constant dense<0.000000e+00> : vector<8x512xf32>
    %145 = tpu.matmul %142, %144, %cst_73 {dimension_numbers = #tpu.dot_dimension_numbers<[1], [0], [0], [1], [0, 0, 1, 1], [], []>} : vector<8x128xbf16>, vector<128x512xbf16>, vector<8x512xf32> -> vector<8x512xf32>
    %c0_74 = arith.constant 0 : index
    %c0_75 = arith.constant 0 : index
    %c0_76 = arith.constant 0 : index
    %146 = vector.load %arg18[%c0_74, %c0_75, %c0_76] : memref<1x1x512xf32, #tpu.memory_space<vmem>>, vector<1x1x512xf32>
    %147 = vector.shape_cast %146 : vector<1x1x512xf32> to vector<1x512xf32>
    %148 = vector.broadcast %147 : vector<1x512xf32> to vector<8x512xf32>
    %149 = arith.addf %145, %148 : vector<8x512xf32>
    %150 = arith.mulf %149, %149 : vector<8x512xf32>
    %151 = arith.mulf %149, %150 : vector<8x512xf32>
    %cst_77 = arith.constant 4.471500e-02 : f32
    %152 = vector.broadcast %cst_77 : f32 to vector<8x512xf32>
    %153 = arith.mulf %152, %151 : vector<8x512xf32>
    %154 = arith.addf %149, %153 : vector<8x512xf32>
    %cst_78 = arith.constant 0.797884583 : f32
    %155 = vector.broadcast %cst_78 : f32 to vector<8x512xf32>
    %156 = arith.mulf %155, %154 : vector<8x512xf32>
    %157 = math.tanh %156 : vector<8x512xf32>
    %cst_79 = arith.constant 1.000000e+00 : f32
    %158 = vector.broadcast %cst_79 : f32 to vector<8x512xf32>
    %159 = arith.addf %158, %157 : vector<8x512xf32>
    %cst_80 = arith.constant 5.000000e-01 : f32
    %160 = vector.broadcast %cst_80 : f32 to vector<8x512xf32>
    %161 = arith.mulf %160, %159 : vector<8x512xf32>
    %162 = arith.mulf %149, %161 : vector<8x512xf32>
    %163 = arith.truncf %162 : vector<8x512xf32> to vector<8x512xbf16>
    %c0_81 = arith.constant 0 : index
    %c0_82 = arith.constant 0 : index
    %c0_83 = arith.constant 0 : index
    %164 = vector.load %arg19[%c0_81, %c0_82, %c0_83] : memref<1x512x128xbf16, #tpu.memory_space<vmem>>, vector<1x512x128xbf16>
    %165 = vector.shape_cast %164 : vector<1x512x128xbf16> to vector<512x128xbf16>
    %cst_84 = arith.constant dense<0.000000e+00> : vector<8x128xf32>
    %166 = tpu.matmul %163, %165, %cst_84 {dimension_numbers = #tpu.dot_dimension_numbers<[1], [0], [0], [1], [0, 0, 1, 1], [], []>} : vector<8x512xbf16>, vector<512x128xbf16>, vector<8x128xf32> -> vector<8x128xf32>
    %c0_85 = arith.constant 0 : index
    %c0_86 = arith.constant 0 : index
    %c0_87 = arith.constant 0 : index
    %167 = vector.load %arg20[%c0_85, %c0_86, %c0_87] : memref<1x1x128xf32, #tpu.memory_space<vmem>>, vector<1x1x128xf32>
    %168 = vector.shape_cast %167 : vector<1x1x128xf32> to vector<1x128xf32>
    %169 = vector.broadcast %168 : vector<1x128xf32> to vector<8x128xf32>
    %170 = arith.addf %166, %169 : vector<8x128xf32>
    %c0_88 = arith.constant 0 : index
    %c0_89 = arith.constant 0 : index
    %c0_90 = arith.constant 0 : index
    %171 = vector.load %arg21[%c0_88, %c0_89, %c0_90] : memref<1x1x128xf32, #tpu.memory_space<vmem>>, vector<1x1x128xf32>
    %172 = vector.shape_cast %171 : vector<1x1x128xf32> to vector<1x128xf32>
    %173 = vector.broadcast %172 : vector<1x128xf32> to vector<8x128xf32>
    %174 = arith.mulf %170, %173 : vector<8x128xf32>
    %175 = arith.addf %113, %174 : vector<8x128xf32>
    %c0_91 = arith.constant 0 : index
    %c0_92 = arith.constant 0 : index
    %176 = vector.load %arg23[%c0_91, %c0_92] : memref<8x128xf32, #tpu.memory_space<vmem>>, vector<8x128xf32>
    tpu.vector_store %arg23[%c0_91, %c0_92], %175 {strides = array<i32>} : memref<8x128xf32, #tpu.memory_space<vmem>>, vector<8x128xf32>,
    %c0_93 = arith.constant 0 : index
    %c0_94 = arith.constant 0 : index
    %c0_95 = arith.constant 0 : index
    %c0_96 = arith.constant 0 : index
    %177 = vector.load %arg22[%c0_93, %c0_94, %c0_95, %c0_96] : memref<1x1x8x128xf32, #tpu.memory_space<vmem>>, vector<1x1x8x128xf32>
    %178 = vector.shape_cast %177 : vector<1x1x8x128xf32> to vector<8x128xf32>
    %179 = vector.shape_cast %175 : vector<8x128xf32> to vector<1x1x8x128xf32>
    tpu.vector_store %arg22[%c0_93, %c0_94, %c0_95, %c0_96], %179 {strides = array<i32>} : memref<1x1x8x128xf32, #tpu.memory_space<vmem>>, vector<1x1x8x128xf32>,
    return
  }
  func.func @transform_0(%arg0: i32, %arg1: i32) -> (i32, i32) {
    %c0_i32 = arith.constant 0 : i32
    %c0_i32_0 = arith.constant 0 : i32
    %c0_i32_1 = arith.constant 0 : i32
    return %c0_i32, %c0_i32_0 : i32, i32
  }
  func.func @transform_1(%arg0: i32, %arg1: i32) -> (i32, i32, i32) {
    %c0_i32 = arith.constant 0 : i32
    %c0_i32_0 = arith.constant 0 : i32
    %c0_i32_1 = arith.constant 0 : i32
    return %arg0, %c0_i32, %c0_i32_0 : i32, i32, i32
  }
  func.func @transform_2(%arg0: i32, %arg1: i32) -> (i32, i32, i32) {
    %c0_i32 = arith.constant 0 : i32
    %c0_i32_0 = arith.constant 0 : i32
    %c0_i32_1 = arith.constant 0 : i32
    return %arg1, %c0_i32, %c0_i32_0 : i32, i32, i32
  }
  func.func @transform_3(%arg0: i32, %arg1: i32) -> (i32, i32, i32) {
    %c0_i32 = arith.constant 0 : i32
    %c0_i32_0 = arith.constant 0 : i32
    %c0_i32_1 = arith.constant 0 : i32
    return %arg1, %c0_i32, %c0_i32_0 : i32, i32, i32
  }
  func.func @transform_4(%arg0: i32, %arg1: i32) -> (i32, i32, i32) {
    %c0_i32 = arith.constant 0 : i32
    %c0_i32_0 = arith.constant 0 : i32
    %c0_i32_1 = arith.constant 0 : i32
    return %arg1, %c0_i32, %c0_i32_0 : i32, i32, i32
  }
  func.func @transform_5(%arg0: i32, %arg1: i32) -> (i32, i32, i32) {
    %c0_i32 = arith.constant 0 : i32
    %c0_i32_0 = arith.constant 0 : i32
    %c0_i32_1 = arith.constant 0 : i32
    return %arg1, %c0_i32, %c0_i32_0 : i32, i32, i32
  }
  func.func @transform_6(%arg0: i32, %arg1: i32) -> (i32, i32, i32) {
    %c0_i32 = arith.constant 0 : i32
    %c0_i32_0 = arith.constant 0 : i32
    %c0_i32_1 = arith.constant 0 : i32
    return %arg1, %c0_i32, %c0_i32_0 : i32, i32, i32
  }
  func.func @transform_7(%arg0: i32, %arg1: i32) -> (i32, i32, i32) {
    %c0_i32 = arith.constant 0 : i32
    %c0_i32_0 = arith.constant 0 : i32
    %c0_i32_1 = arith.constant 0 : i32
    return %arg1, %c0_i32, %c0_i32_0 : i32, i32, i32
  }
  func.func @transform_8(%arg0: i32, %arg1: i32) -> (i32, i32, i32) {
    %c0_i32 = arith.constant 0 : i32
    %c0_i32_0 = arith.constant 0 : i32
    %c0_i32_1 = arith.constant 0 : i32
    return %arg1, %c0_i32, %c0_i32_0 : i32, i32, i32
  }
  func.func @transform_9(%arg0: i32, %arg1: i32) -> (i32, i32, i32) {
    %c0_i32 = arith.constant 0 : i32
    %c0_i32_0 = arith.constant 0 : i32
    %c0_i32_1 = arith.constant 0 : i32
    return %arg1, %c0_i32, %c0_i32_0 : i32, i32, i32
  }
  func.func @transform_10(%arg0: i32, %arg1: i32) -> (i32, i32, i32) {
    %c0_i32 = arith.constant 0 : i32
    %c0_i32_0 = arith.constant 0 : i32
    %c0_i32_1 = arith.constant 0 : i32
    return %arg1, %c0_i32, %c0_i32_0 : i32, i32, i32
  }
  func.func @transform_11(%arg0: i32, %arg1: i32) -> (i32, i32, i32) {
    %c0_i32 = arith.constant 0 : i32
    %c0_i32_0 = arith.constant 0 : i32
    %c0_i32_1 = arith.constant 0 : i32
    return %arg1, %c0_i32, %c0_i32_0 : i32, i32, i32
  }
  func.func @transform_12(%arg0: i32, %arg1: i32) -> (i32, i32, i32) {
    %c0_i32 = arith.constant 0 : i32
    %c0_i32_0 = arith.constant 0 : i32
    %c0_i32_1 = arith.constant 0 : i32
    return %arg1, %c0_i32, %c0_i32_0 : i32, i32, i32
  }
  func.func @transform_13(%arg0: i32, %arg1: i32) -> (i32, i32, i32) {
    %c0_i32 = arith.constant 0 : i32
    %c0_i32_0 = arith.constant 0 : i32
    %c0_i32_1 = arith.constant 0 : i32
    return %arg1, %c0_i32, %c0_i32_0 : i32, i32, i32
  }
  func.func @transform_14(%arg0: i32, %arg1: i32) -> (i32, i32, i32) {
    %c0_i32 = arith.constant 0 : i32
    %c0_i32_0 = arith.constant 0 : i32
    %c0_i32_1 = arith.constant 0 : i32
    return %arg1, %c0_i32, %c0_i32_0 : i32, i32, i32
  }
  func.func @transform_15(%arg0: i32, %arg1: i32) -> (i32, i32, i32) {
    %c0_i32 = arith.constant 0 : i32
    %c0_i32_0 = arith.constant 0 : i32
    %c0_i32_1 = arith.constant 0 : i32
    return %arg1, %c0_i32, %c0_i32_0 : i32, i32, i32
  }
  func.func @transform_16(%arg0: i32, %arg1: i32) -> (i32, i32, i32) {
    %c0_i32 = arith.constant 0 : i32
    %c0_i32_0 = arith.constant 0 : i32
    %c0_i32_1 = arith.constant 0 : i32
    return %arg1, %c0_i32, %c0_i32_0 : i32, i32, i32
  }
  func.func @transform_17(%arg0: i32, %arg1: i32) -> (i32, i32, i32) {
    %c0_i32 = arith.constant 0 : i32
    %c0_i32_0 = arith.constant 0 : i32
    %c0_i32_1 = arith.constant 0 : i32
    return %arg1, %c0_i32, %c0_i32_0 : i32, i32, i32
  }
  func.func @transform_18(%arg0: i32, %arg1: i32) -> (i32, i32, i32) {
    %c0_i32 = arith.constant 0 : i32
    %c0_i32_0 = arith.constant 0 : i32
    %c0_i32_1 = arith.constant 0 : i32
    return %arg1, %c0_i32, %c0_i32_0 : i32, i32, i32
  }
  func.func @transform_19(%arg0: i32, %arg1: i32) -> (i32, i32, i32) {
    %c0_i32 = arith.constant 0 : i32
    %c0_i32_0 = arith.constant 0 : i32
    %c0_i32_1 = arith.constant 0 : i32
    return %arg1, %c0_i32, %c0_i32_0 : i32, i32, i32
  }
  func.func @transform_20(%arg0: i32, %arg1: i32) -> (i32, i32, i32, i32) {
    %c0_i32 = arith.constant 0 : i32
    %c0_i32_0 = arith.constant 0 : i32
    %c0_i32_1 = arith.constant 0 : i32
    return %arg0, %arg1, %c0_i32, %c0_i32_0 : i32, i32, i32, i32
  }
}

</mosaic_0001>

<llo_original>
// kernel: _lambda_.2
$region0: #{_lambda_.2}
  #allocation0 [shape = 'u32[]', space=smem, size = 0x4, offset = 0x4, fixed_abs, tag = 'smem constant byte address 0x4 - core index']
  #allocation1 [shape = 'u32[144,128]{1,0:T(1,128)}', space=vmem, size = 0x12000, scoped, tag = 'internal scratch']
  %s0 = inlined_call_operand.vmem [shape: bf16[8,588], index: 0, kind: input, shape index: {}]
  %s1 = inlined_call_operand.hbm [shape: bf16[588,128], index: 1, kind: input, shape index: {}]
  %s2 = inlined_call_operand.vmem [shape: f32[1,128], index: 2, kind: input, shape index: {}]
  %s3 = inlined_call_operand.vmem [shape: f32[8,128], index: 3, kind: output, shape index: {}]
  %s4 = sld [smem:[#allocation0]]
  $region26: #{_lambda_.2} parent=0
    _
  %s6 = ssub.s32 1, %s4
  %s7 = scalar_select 0, %s6, %s4
  $region1: #{_lambda_.2} parent=0
    #allocation2 [shape = 'u8[151552]{0}', space=vmem, size = 0x25000, scoped, tag = 'input window, operand 1, single buffered']
    #allocation3 [shape = 's32[1]{0}', space=sflag, size = 0x4, scoped, tag = 'scoped memory for _lambda_.2']
    %8 = vsyncpa [#allocation3], 0
    // Predicated region
    $region2: #{_lambda_.2} parent=1 // pred_check
      _
    $region3: #{_lambda_.2} parent=1 // pred_check_branch
      %10 = sbr.rel (0) target = $region5
    $region4: #{_lambda_.2} parent=1 // pred_region
      _
    $region5: #{_lambda_.2} parent=1 // pred_fallthru
      _
    // Predicated region
    $region6: #{_lambda_.2} parent=1 // pred_check
      _
    $region7: #{_lambda_.2} parent=1 // pred_check_branch
      %12 = sbr.rel (0) target = $region9
    $region8: #{_lambda_.2} parent=1 // pred_region
      %s14 = ssub.s32 4736, 4736
      %15 = vsyncadd [#allocation3], %s14
      %s16 = sshll.u32 [#allocation2], 4
      %s17 = int_to_ptr.vmem [resolvable:$true] %s16
      %22 = dma.hbm_to_vmem [thread:$0]  %s1, 4736, %s17, [#allocation3], 64, 64, 4
    $region9: #{_lambda_.2} parent=1 // pred_fallthru
      _
    // Predicated region
    $region10: #{_lambda_.2} parent=1 // pred_check
      _
    $region11: #{_lambda_.2} parent=1 // pred_check_branch
      %24 = sbr.rel (0) target = $region13
    $region12: #{_lambda_.2} parent=1 // pred_region
      _
    $region13: #{_lambda_.2} parent=1 // pred_fallthru
      _
    // Predicated region
    $region14: #{_lambda_.2} parent=1 // pred_check
      _
    $region15: #{_lambda_.2} parent=1 // pred_check_branch
      %26 = sbr.rel (0) target = $region17
    $region16: #{_lambda_.2} parent=1 // pred_region
      %27 = dma.done [#allocation3], 4736
    $region17: #{_lambda_.2} parent=1 // pred_fallthru
      _
    %v29 = vld [vmem:[%s0] sm:$0xff]
    %v30 = vld [vmem:[%s0 + $0x8] sm:$0xff]
    %v31 = vld [vmem:[%s0 + $0x10] sm:$0xf]
    %v32 = vld [vmem:[#allocation2] sm:$0xf]
    %v33 = vld [vmem:[#allocation2 + $0x4] sm:$0xf]
    %v34 = vld [vmem:[#allocation2 + $0x8] sm:$0xf]
    %v35 = vld [vmem:[#allocation2 + $0xc] sm:$0xf]
    %v36 = vld [vmem:[#allocation2 + $0x10] sm:$0xf]
    %v37 = vld [vmem:[#allocation2 + $0x14] sm:$0xf]
    %v38 = vld [vmem:[#allocation2 + $0x18] sm:$0xf]
    %v39 = vld [vmem:[#allocation2 + $0x1c] sm:$0xf]
    %v40 = vld [vmem:[#allocation2 + $0x20] sm:$0xf]
    %v41 = vld [vmem:[#allocation2 + $0x24] sm:$0xf]
    %v42 = vld [vmem:[#allocation2 + $0x28] sm:$0xf]
    %v43 = vld [vmem:[#allocation2 + $0x2c] sm:$0xf]
    %v44 = vld [vmem:[#allocation2 + $0x30] sm:$0xf]
    %v45 = vld [vmem:[#allocation2 + $0x34] sm:$0xf]
    %v46 = vld [vmem:[#allocation2 + $0x38] sm:$0xf]
    %v47 = vld [vmem:[#allocation2 + $0x3c] sm:$0xf]
    %v48 = vld [vmem:[#allocation2 + $0x40] sm:$0xf]
    %v49 = vld [vmem:[#allocation2 + $0x44] sm:$0xf]
    %v50 = vld [vmem:[#allocation2 + $0x48] sm:$0xf]
    %v51 = vld [vmem:[#allocation2 + $0x4c] sm:$0xf]
    %v52 = vld [vmem:[#allocation2 + $0x50] sm:$0xf]
    %v53 = vld [vmem:[#allocation2 + $0x54] sm:$0xf]
    %v54 = vld [vmem:[#allocation2 + $0x58] sm:$0xf]
    %v55 = vld [vmem:[#allocation2 + $0x5c] sm:$0xf]
    %v56 = vld [vmem:[#allocation2 + $0x60] sm:$0xf]
    %v57 = vld [vmem:[#allocation2 + $0x64] sm:$0xf]
    %v58 = vld [vmem:[#allocation2 + $0x68] sm:$0xf]
    %v59 = vld [vmem:[#allocation2 + $0x6c] sm:$0xf]
    %v60 = vld [vmem:[#allocation2 + $0x70] sm:$0xf]
    %v61 = vld [vmem:[#allocation2 + $0x74] sm:$0xf]
    %v62 = vld [vmem:[#allocation2 + $0x78] sm:$0xf]
    %v63 = vld [vmem:[#allocation2 + $0x7c] sm:$0xf]
    %v64 = vld [vmem:[#allocation2 + $0x80] sm:$0xf]
    %v65 = vld [vmem:[#allocation2 + $0x84] sm:$0xf]
    %v66 = vld [vmem:[#allocation2 + $0x88] sm:$0xf]
    %v67 = vld [vmem:[#allocation2 + $0x8c] sm:$0xf]
    %v68 = vld [vmem:[#allocation2 + $0x90] sm:$0xf]
    %v69 = vld [vmem:[#allocation2 + $0x94] sm:$0xf]
    %v70 = vld [vmem:[#allocation2 + $0x98] sm:$0xf]
    %v71 = vld [vmem:[#allocation2 + $0x9c] sm:$0xf]
    %v72 = vld [vmem:[#allocation2 + $0xa0] sm:$0xf]
    %v73 = vld [vmem:[#allocation2 + $0xa4] sm:$0xf]
    %v74 = vld [vmem:[#allocation2 + $0xa8] sm:$0xf]
    %v75 = vld [vmem:[#allocation2 + $0xac] sm:$0xf]
    %v76 = vld [vmem:[#allocation2 + $0xb0] sm:$0xf]
    %v77 = vld [vmem:[#allocation2 + $0xb4] sm:$0xf]
    %v78 = vld [vmem:[#allocation2 + $0xb8] sm:$0xf]
    %v79 = vld [vmem:[#allocation2 + $0xbc] sm:$0xf]
    %v80 = vld [vmem:[#allocation2 + $0xc0] sm:$0xf]
    %v81 = vld [vmem:[#allocation2 + $0xc4] sm:$0xf]
    %v82 = vld [vmem:[#allocation2 + $0xc8] sm:$0xf]
    %v83 = vld [vmem:[#allocation2 + $0xcc] sm:$0xf]
    %v84 = vld [vmem:[#allocation2 + $0xd0] sm:$0xf]
    %v85 = vld [vmem:[#allocation2 + $0xd4] sm:$0xf]
    %v86 = vld [vmem:[#allocation2 + $0xd8] sm:$0xf]
    %v87 = vld [vmem:[#allocation2 + $0xdc] sm:$0xf]
    %v88 = vld [vmem:[#allocation2 + $0xe0] sm:$0xf]
    %v89 = vld [vmem:[#allocation2 + $0xe4] sm:$0xf]
    %v90 = vld [vmem:[#allocation2 + $0xe8] sm:$0xf]
    %v91 = vld [vmem:[#allocation2 + $0xec] sm:$0xf]
    %v92 = vld [vmem:[#allocation2 + $0xf0] sm:$0xf]
    %v93 = vld [vmem:[#allocation2 + $0xf4] sm:$0xf]
    %v94 = vld [vmem:[#allocation2 + $0xf8] sm:$0xf]
    %v95 = vld [vmem:[#allocation2 + $0xfc] sm:$0xf]
    %v96 = vld [vmem:[#allocation2 + $0x100] sm:$0xf]
    %v97 = vld [vmem:[#allocation2 + $0x104] sm:$0xf]
    %v98 = vld [vmem:[#allocation2 + $0x108] sm:$0xf]
    %v99 = vld [vmem:[#allocation2 + $0x10c] sm:$0xf]
    %v100 = vld [vmem:[#allocation2 + $0x110] sm:$0xf]
    %v101 = vld [vmem:[#allocation2 + $0x114] sm:$0xf]
    %v102 = vld [vmem:[#allocation2 + $0x118] sm:$0xf]
    %v103 = vld [vmem:[#allocation2 + $0x11c] sm:$0xf]
    %v104 = vld [vmem:[#allocation2 + $0x120] sm:$0xf]
    %v105 = vld [vmem:[#allocation2 + $0x124] sm:$0x3]
    %v106 = vld [vmem:[%s2] sm:$0x1]
    %v108 = vlaneseq
    %v109 = vshrl.u32 %v108, 7
    %v110 = vsub.s32 0, %v109
    %v111 = vrot.slane %v106, %v110
    %v116 = vunpack.c.l.b16 %v29
    %v117 = vunpack.c.h.b16 %v29
    %v118 = vunpack.c.l.b16 %v30
    %v119 = vunpack.c.h.b16 %v30
    %v120 = vunpack.c.l.b16 %v31
    %v121 = vpack.c.b16 %v116, %v116
    %v122 = vpack.c.b16 %v117, %v117
    %v123 = vpack.c.b16 %v118, %v118
    %v124 = vpack.c.b16 %v119, %v119
    %v125 = vpack.c.b16 %v120, %v120
    %v204 = vunpack.c.l.b16 %v32
    %v205 = vunpack.c.l.b16 %v33
    %v206 = vunpack.c.l.b16 %v34
    %v207 = vunpack.c.l.b16 %v35
    %v208 = vunpack.c.l.b16 %v36
    %v209 = vunpack.c.l.b16 %v37
    %v210 = vunpack.c.l.b16 %v38
    %v211 = vunpack.c.l.b16 %v39
    %v212 = vunpack.c.l.b16 %v40
    %v213 = vunpack.c.l.b16 %v41
    %v214 = vunpack.c.l.b16 %v42
    %v215 = vunpack.c.l.b16 %v43
    %v216 = vunpack.c.l.b16 %v44
    %v217 = vunpack.c.l.b16 %v45
    %v218 = vunpack.c.l.b16 %v46
    %v219 = vunpack.c.l.b16 %v47
    %v220 = vunpack.c.l.b16 %v48
    %v221 = vunpack.c.l.b16 %v49
    %v222 = vunpack.c.l.b16 %v50
    %v223 = vunpack.c.l.b16 %v51
    %v224 = vunpack.c.l.b16 %v52
    %v225 = vunpack.c.l.b16 %v53
    %v226 = vunpack.c.l.b16 %v54
    %v227 = vunpack.c.l.b16 %v55
    %v228 = vunpack.c.l.b16 %v56
    %v229 = vunpack.c.l.b16 %v57
    %v230 = vunpack.c.l.b16 %v58
    %v231 = vunpack.c.l.b16 %v59
    %v232 = vunpack.c.l.b16 %v60
    %v233 = vunpack.c.l.b16 %v61
    %v234 = vunpack.c.l.b16 %v62
    %v235 = vunpack.c.l.b16 %v63
    %v236 = vunpack.c.l.b16 %v64
    %v237 = vunpack.c.l.b16 %v65
    %v238 = vunpack.c.l.b16 %v66
    %v239 = vunpack.c.l.b16 %v67
    %v240 = vunpack.c.l.b16 %v68
    %v241 = vunpack.c.l.b16 %v69
    %v242 = vunpack.c.l.b16 %v70
    %v243 = vunpack.c.l.b16 %v71
    %v244 = vunpack.c.l.b16 %v72
    %v245 = vunpack.c.l.b16 %v73
    %v246 = vunpack.c.l.b16 %v74
    %v247 = vunpack.c.l.b16 %v75
    %v248 = vunpack.c.l.b16 %v76
    %v249 = vunpack.c.l.b16 %v77
    %v250 = vunpack.c.l.b16 %v78
    %v251 = vunpack.c.l.b16 %v79
    %v252 = vunpack.c.l.b16 %v80
    %v253 = vunpack.c.l.b16 %v81
    %v254 = vunpack.c.l.b16 %v82
    %v255 = vunpack.c.l.b16 %v83
    %v256 = vunpack.c.l.b16 %v84
    %v257 = vunpack.c.l.b16 %v85
    %v258 = vunpack.c.l.b16 %v86
    %v259 = vunpack.c.l.b16 %v87
    %v260 = vunpack.c.l.b16 %v88
    %v261 = vunpack.c.l.b16 %v89
    %v262 = vunpack.c.l.b16 %v90
    %v263 = vunpack.c.l.b16 %v91
    %v264 = vunpack.c.l.b16 %v92
    %v265 = vunpack.c.l.b16 %v93
    %v266 = vunpack.c.l.b16 %v94
    %v267 = vunpack.c.l.b16 %v95
    %v268 = vunpack.c.l.b16 %v96
    %v269 = vunpack.c.l.b16 %v97
    %v270 = vunpack.c.l.b16 %v98
    %v271 = vunpack.c.l.b16 %v99
    %v272 = vunpack.c.l.b16 %v100
    %v273 = vunpack.c.l.b16 %v101
    %v274 = vunpack.c.l.b16 %v102
    %v275 = vunpack.c.l.b16 %v103
    %v276 = vunpack.c.l.b16 %v104
    %v277 = vunpack.c.l.b16 %v105
    %v278 = vpack.c.b16 %v205, %v204
    %v279 = vpack.c.b16 %v207, %v206
    %v280 = vpack.c.b16 %v209, %v208
    %v281 = vpack.c.b16 %v211, %v210
    %v282 = vpack.c.b16 %v213, %v212
    %v283 = vpack.c.b16 %v215, %v214
    %v284 = vpack.c.b16 %v217, %v216
    %v285 = vpack.c.b16 %v219, %v218
    %v286 = vpack.c.b16 %v221, %v220
    %v287 = vpack.c.b16 %v223, %v222
    %v288 = vpack.c.b16 %v225, %v224
    %v289 = vpack.c.b16 %v227, %v226
    %v290 = vpack.c.b16 %v229, %v228
    %v291 = vpack.c.b16 %v231, %v230
    %v292 = vpack.c.b16 %v233, %v232
    %v293 = vpack.c.b16 %v235, %v234
    %v294 = vpack.c.b16 %v237, %v236
    %v295 = vpack.c.b16 %v239, %v238
    %v296 = vpack.c.b16 %v241, %v240
    %v297 = vpack.c.b16 %v243, %v242
    %v298 = vpack.c.b16 %v245, %v244
    %v299 = vpack.c.b16 %v247, %v246
    %v300 = vpack.c.b16 %v249, %v248
    %v301 = vpack.c.b16 %v251, %v250
    %v302 = vpack.c.b16 %v253, %v252
    %v303 = vpack.c.b16 %v255, %v254
    %v304 = vpack.c.b16 %v257, %v256
    %v305 = vpack.c.b16 %v259, %v258
    %v306 = vpack.c.b16 %v261, %v260
    %v307 = vpack.c.b16 %v263, %v262
    %v308 = vpack.c.b16 %v265, %v264
    %v309 = vpack.c.b16 %v267, %v266
    %v310 = vpack.c.b16 %v269, %v268
    %v311 = vpack.c.b16 %v271, %v270
    %v312 = vpack.c.b16 %v273, %v272
    %v313 = vpack.c.b16 %v275, %v274
    %v314 = vpack.c.b16 %v277, %v276
    %vm351 = vcmask 621568
    %v353 = vsel %vm351, %v125, 0
    %vm355 = vcmask 1045504
    %v357 = vsel %vm355, %v314, 0
    %359 = vmatprep.subr.bf16.mxu0 0
    %360 = vmatpush1.bf16.msra.mxu0 %v278
    %361 = vmatprep.subr.bf16.mxu0 0
    %362 = vmatpush1.bf16.msra.mxu0 %v279
    %363 = vmatprep.subr.bf16.mxu0 0
    %364 = vmatpush1.bf16.msra.mxu0 %v280
    %365 = vmatprep.subr.bf16.mxu0 0
    %366 = vmatpush1.bf16.msra.mxu0 %v281
    %367 = vmatprep.subr.bf16.mxu0 0
    %368 = vmatpush1.bf16.msra.mxu0 %v282
    %369 = vmatprep.subr.bf16.mxu0 0
    %370 = vmatpush1.bf16.msra.mxu0 %v283
    %371 = vmatprep.subr.bf16.mxu0 0
    %372 = vmatpush1.bf16.msra.mxu0 %v284
    %373 = vmatprep.subr.bf16.mxu0 0
    %374 = vmatpush1.bf16.msra.mxu0 %v285
    %375 = vmatprep.subr.bf16.mxu0 0
    %376 = vmatpush1.bf16.msra.mxu0 %v286
    %377 = vmatprep.subr.bf16.mxu0 0
    %378 = vmatpush1.bf16.msra.mxu0 %v287
    %379 = vmatprep.subr.bf16.mxu0 0
    %380 = vmatpush1.bf16.msra.mxu0 %v288
    %381 = vmatprep.subr.bf16.mxu0 0
    %382 = vmatpush1.bf16.msra.mxu0 %v289
    %383 = vmatprep.subr.bf16.mxu0 0
    %384 = vmatpush1.bf16.msra.mxu0 %v290
    %385 = vmatprep.subr.bf16.mxu0 0
    %386 = vmatpush1.bf16.msra.mxu0 %v291
    %387 = vmatprep.subr.bf16.mxu0 0
    %388 = vmatpush1.bf16.msra.mxu0 %v292
    %389 = vmatprep.subr.bf16.mxu0 0
    %390 = vmatpush1.bf16.msra.mxu0 %v293
    %391 = vmatprep.mubr.bf16.mxu0 %v122
    %392 = vmatmul.mubr.bf16.gmra.mrb[0].mxu0 %v121
    %v393 = vpop.f32.mrb[0].mxu0
    %v394 = vadd.f32 %v111, %v393
    %v395 = vpop.f32.mrb[0].mxu0
    %v396 = vpop.f32.mrb[0].mxu0
    %v397 = vpop.f32.mrb[0].mxu0
    %398 = vdwg.mxu0
    %399 = vmatprep.subr.bf16.mxu0 0
    %400 = vmatpush1.bf16.msra.mxu0 %v294
    %401 = vmatprep.subr.bf16.mxu0 0
    %402 = vmatpush1.bf16.msra.mxu0 %v295
    %403 = vmatprep.subr.bf16.mxu0 0
    %404 = vmatpush1.bf16.msra.mxu0 %v296
    %405 = vmatprep.subr.bf16.mxu0 0
    %406 = vmatpush1.bf16.msra.mxu0 %v297
    %407 = vmatprep.subr.bf16.mxu0 0
    %408 = vmatpush1.bf16.msra.mxu0 %v298
    %409 = vmatprep.subr.bf16.mxu0 0
    %410 = vmatpush1.bf16.msra.mxu0 %v299
    %411 = vmatprep.subr.bf16.mxu0 0
    %412 = vmatpush1.bf16.msra.mxu0 %v300
    %413 = vmatprep.subr.bf16.mxu0 0
    %414 = vmatpush1.bf16.msra.mxu0 %v301
    %415 = vmatprep.subr.bf16.mxu0 0
    %416 = vmatpush1.bf16.msra.mxu0 %v302
    %417 = vmatprep.subr.bf16.mxu0 0
    %418 = vmatpush1.bf16.msra.mxu0 %v303
    %419 = vmatprep.subr.bf16.mxu0 0
    %420 = vmatpush1.bf16.msra.mxu0 %v304
    %421 = vmatprep.subr.bf16.mxu0 0
    %422 = vmatpush1.bf16.msra.mxu0 %v305
    %423 = vmatprep.subr.bf16.mxu0 0
    %424 = vmatpush1.bf16.msra.mxu0 %v306
    %425 = vmatprep.subr.bf16.mxu0 0
    %426 = vmatpush1.bf16.msra.mxu0 %v307
    %427 = vmatprep.subr.bf16.mxu0 0
    %428 = vmatpush1.bf16.msra.mxu0 %v308
    %429 = vmatprep.subr.bf16.mxu0 0
    %430 = vmatpush1.bf16.msra.mxu0 %v309
    %431 = vmatprep.mubr.bf16.mxu0 %v124
    %432 = vmatmul.mubr.bf16.gmra.mrb[0].mxu0 %v123
    %v433 = vpop.f32.mrb[0].mxu0
    %v434 = vadd.f32 %v394, %v433
    %v435 = vpop.f32.mrb[0].mxu0
    %v436 = vpop.f32.mrb[0].mxu0
    %v437 = vpop.f32.mrb[0].mxu0
    %438 = vdwg.mxu0
    %439 = vmatprep.subr.bf16.mxu0 0
    %440 = vmatpush1.bf16.msra.mxu0 %v310
    %441 = vmatprep.subr.bf16.mxu0 0
    %442 = vmatpush1.bf16.msra.mxu0 %v311
    %443 = vmatprep.subr.bf16.mxu0 0
    %444 = vmatpush1.bf16.msra.mxu0 %v312
    %445 = vmatprep.subr.bf16.mxu0 0
    %446 = vmatpush1.bf16.msra.mxu0 %v313
    %447 = vmatprep.subr.bf16.mxu0 0
    %448 = vmatpush1.bf16.msra.mxu0 %v357
    %449 = vmatprep.subr.bf16.mxu0 0
    %450 = vmatpush1.bf16.msra.mxu0 0
    %451 = vmatprep.subr.bf16.mxu0 0
    %452 = vmatpush1.bf16.msra.mxu0 0
    %453 = vmatprep.subr.bf16.mxu0 0
    %454 = vmatpush1.bf16.msra.mxu0 0
    %455 = vmatprep.subr.bf16.mxu0 0
    %456 = vmatpush1.bf16.msra.mxu0 0
    %457 = vmatprep.subr.bf16.mxu0 0
    %458 = vmatpush1.bf16.msra.mxu0 0
    %459 = vmatprep.subr.bf16.mxu0 0
    %460 = vmatpush1.bf16.msra.mxu0 0
    %461 = vmatprep.subr.bf16.mxu0 0
    %462 = vmatpush1.bf16.msra.mxu0 0
    %463 = vmatprep.subr.bf16.mxu0 0
    %464 = vmatpush1.bf16.msra.mxu0 0
    %465 = vmatprep.subr.bf16.mxu0 0
    %466 = vmatpush1.bf16.msra.mxu0 0
    %467 = vmatprep.subr.bf16.mxu0 0
    %468 = vmatpush1.bf16.msra.mxu0 0
    %469 = vmatprep.subr.bf16.mxu0 0
    %470 = vmatpush1.bf16.msra.mxu0 0
    %471 = vmatprep.mubr.bf16.mxu0 0
    %472 = vmatmul.mubr.bf16.gmra.mrb[0].mxu0 %v353
    %v473 = vpop.f32.mrb[0].mxu0
    %v474 = vadd.f32 %v434, %v473
    %v475 = vpop.f32.mrb[0].mxu0
    %v476 = vpop.f32.mrb[0].mxu0
    %v477 = vpop.f32.mrb[0].mxu0
    %478 = vdwg.mxu0
    %479 = vst [vmem:[%s3] sm:$0xff] %v474
    // Predicated region
    $region18: #{_lambda_.2} parent=1 // pred_check
      _
    $region19: #{_lambda_.2} parent=1 // pred_check_branch
      %481 = sbr.rel (0) target = $region21
    $region20: #{_lambda_.2} parent=1 // pred_region
      _
    $region21: #{_lambda_.2} parent=1 // pred_fallthru
      _
    // Predicated region
    $region22: #{_lambda_.2} parent=1 // pred_check
      _
    $region23: #{_lambda_.2} parent=1 // pred_check_branch
      %483 = sbr.rel (0) target = $region25
    $region24: #{_lambda_.2} parent=1 // pred_region
      _
    $region25: #{_lambda_.2} parent=1 // pred_fallthru
      _
    %484 = vsyncpa [#allocation3], 1

// kernel: _lambda_.3
$region0: #{_lambda_.3}
  #allocation0 [shape = 'u32[]', space=smem, size = 0x4, offset = 0x4, fixed_abs, tag = 'smem constant byte address 0x4 - core index']
  #allocation1 [shape = 'u32[144,128]{1,0:T(1,128)}', space=vmem, size = 0x12000, scoped, tag = 'internal scratch']
  #allocation2 [shape = 'f32[8,128]{1,0:T(8,128)}', space=vmem, size = 0x1000, scoped, tag = 'scratch operand']
  %s0 = inlined_call_operand.vmem [shape: f32[1,8], index: 0, kind: input, shape index: {}]
  %s1 = inlined_call_operand.vmem [shape: f32[2,8,128], index: 1, kind: input, shape index: {}]
  %s2 = inlined_call_operand.vmem [shape: f32[12,1,128], index: 2, kind: input, shape index: {}, may-alias: {2,13}]
  %s3 = inlined_call_operand.vmem [shape: f32[12,1,128], index: 3, kind: input, shape index: {}, may-alias: {3,5,7,9,11,14,18}]
  %s4 = inlined_call_operand.vmem [shape: bf16[12,128,128], index: 4, kind: input, shape index: {}]
  %s5 = inlined_call_operand.vmem [shape: f32[12,1,128], index: 5, kind: input, shape index: {}, may-alias: {3,5,7,9,11,14,18}]
  %s6 = inlined_call_operand.vmem [shape: bf16[12,128,128], index: 6, kind: input, shape index: {}]
  %s7 = inlined_call_operand.vmem [shape: f32[12,1,128], index: 7, kind: input, shape index: {}, may-alias: {3,5,7,9,11,14,18}]
  %s8 = inlined_call_operand.vmem [shape: bf16[12,128,128], index: 8, kind: input, shape index: {}]
  %s9 = inlined_call_operand.vmem [shape: f32[12,1,128], index: 9, kind: input, shape index: {}, may-alias: {3,5,7,9,11,14,18}]
  %s10 = inlined_call_operand.vmem [shape: bf16[12,128,128], index: 10, kind: input, shape index: {}]
  %s11 = inlined_call_operand.vmem [shape: f32[12,1,128], index: 11, kind: input, shape index: {}, may-alias: {3,5,7,9,11,14,18}]
  %s12 = inlined_call_operand.vmem [shape: f32[12,1,128], index: 12, kind: input, shape index: {}, may-alias: {12,19}]
  %s13 = inlined_call_operand.vmem [shape: f32[12,1,128], index: 13, kind: input, shape index: {}, may-alias: {2,13}]
  %s14 = inlined_call_operand.vmem [shape: f32[12,1,128], index: 14, kind: input, shape index: {}, may-alias: {3,5,7,9,11,14,18}]
  %s15 = inlined_call_operand.vmem [shape: bf16[12,128,512], index: 15, kind: input, shape index: {}]
  %s16 = inlined_call_operand.vmem [shape: f32[12,1,512], index: 16, kind: input, shape index: {}]
  %s17 = inlined_call_operand.vmem [shape: bf16[12,512,128], index: 17, kind: input, shape index: {}]
  %s18 = inlined_call_operand.vmem [shape: f32[12,1,128], index: 18, kind: input, shape index: {}, may-alias: {3,5,7,9,11,14,18}]
  %s19 = inlined_call_operand.vmem [shape: f32[12,1,128], index: 19, kind: input, shape index: {}, may-alias: {12,19}]
  %s20 = inlined_call_operand.vmem [shape: f32[2,12,8,128], index: 20, kind: output, shape index: {}]
  %s21 = sld [smem:[#allocation0]]
  $region117: #{_lambda_.3} parent=0
    _
  %s23 = ssub.s32 1, %s21
  %s24 = scalar_select 0, %s23, %s21
  loop: start=0, step=1, limit=26
  $region2: #{_lambda_.3} parent=0 // loop_pre_header
    _
  $region3: #{_lambda_.3} parent=0 // loop_header
    %s26 = sphi 0, %s30
    %p27 = scmp.ge.s32.totalorder %s26, 26
    %s33 = sphi 0, %s45
    %s34 = sphi 0, %s41
    %s35 = sphi 0, %s33
    %s36 = sphi 0, %s34
    %s37 = sphi 0, %s35
    %s38 = sphi 0, %s36
    %s46 = sphi 0, %s46
    %s48 = sphi 0, %s46
    %s49 = sphi 0, %s48
    %s63 = sphi 0, %s49
    %s69 = sphi 0, %s71
    %s72 = sphi 0, %s69
    %s73 = sphi 0, %s72
    %s89 = sphi 0, %s73
    %s95 = sphi 0, %s97
    %s98 = sphi 0, %s95
    %s99 = sphi 0, %s98
    %s115 = sphi 0, %s99
    %s121 = sphi 0, %s123
    %s124 = sphi 0, %s121
    %s125 = sphi 0, %s124
    %s141 = sphi 0, %s125
    %s147 = sphi 0, %s149
    %s150 = sphi 0, %s147
    %s151 = sphi 0, %s150
    %s167 = sphi 0, %s151
    %s173 = sphi 0, %s175
    %s176 = sphi 0, %s173
    %s177 = sphi 0, %s176
    %s193 = sphi 0, %s177
    %s199 = sphi 0, %s201
    %s202 = sphi 0, %s199
    %s203 = sphi 0, %s202
    %s219 = sphi 0, %s203
    %s225 = sphi 0, %s227
    %s228 = sphi 0, %s225
    %s229 = sphi 0, %s228
    %s245 = sphi 0, %s229
    %s251 = sphi 0, %s253
    %s254 = sphi 0, %s251
    %s255 = sphi 0, %s254
    %s271 = sphi 0, %s255
    %s277 = sphi 0, %s279
    %s280 = sphi 0, %s277
    %s281 = sphi 0, %s280
    %s297 = sphi 0, %s281
    %s303 = sphi 0, %s305
    %s306 = sphi 0, %s303
    %s307 = sphi 0, %s306
    %s323 = sphi 0, %s307
    %s329 = sphi 0, %s331
    %s332 = sphi 0, %s329
    %s333 = sphi 0, %s332
    %s349 = sphi 0, %s333
    %s355 = sphi 0, %s357
    %s358 = sphi 0, %s355
    %s359 = sphi 0, %s358
    %s375 = sphi 0, %s359
    %s381 = sphi 0, %s383
    %s384 = sphi 0, %s381
    %s385 = sphi 0, %s384
    %s401 = sphi 0, %s385
    %s407 = sphi 0, %s409
    %s410 = sphi 0, %s407
    %s411 = sphi 0, %s410
    %s427 = sphi 0, %s411
    %s433 = sphi 0, %s435
    %s436 = sphi 0, %s433
    %s437 = sphi 0, %s436
    %s453 = sphi 0, %s437
    %s459 = sphi 0, %s461
    %s462 = sphi 0, %s459
    %s463 = sphi 0, %s462
    %s479 = sphi 0, %s463
    %s485 = sphi 0, %s487
    %s488 = sphi 0, %s485
    %s489 = sphi 0, %s488
    %s505 = sphi 0, %s489
    %s511 = sphi 0, %s513
    %s514 = sphi 0, %s511
    %s515 = sphi 0, %s514
    %s531 = sphi 0, %s515
    %s537 = sphi 0, %s539
    %s540 = sphi 0, %s537
    %s541 = sphi 0, %s540
    %s557 = sphi 0, %s541
    %s565 = sphi 0, %s567
    %s568 = sphi 0, %s565
    %s569 = sphi 0, %s568
    %s585 = sphi 0, %s569
  $region4: #{_lambda_.3} parent=0 // loop_header_branch
    %29 = sbr.rel (%p27) target = $region8
  $region5: #{_lambda_.3} parent=0 // loop_body
    %s31 = ssub.s32 %s26, 1
    %s32 = ssub.s32 %s26, 2
    %s39 = sadd.s32 1, %s34
    %p40 = scmp.ge.s32.totalorder %s39, 12
    %s41 = scalar_select %p40, 0, %s39
    %s42 = sadd.s32 1, %s33
    %s43 = scalar_select %p40, %s42, %s33
    %p44 = scmp.ge.s32.totalorder %s43, 2
    %s45 = scalar_select %p44, 0, %s43
    %s47 = sadd.s32 %s46, 1
    %p50 = scmp.eq.s32.totalorder %s26, 23
    %p51 = scmp.ne.s32.totalorder %s46, %s48
    %p52 = scmp.eq.s32.totalorder %s26, 0
    %p53 = por %p51, %p52
    %p54 = scmp.ne.s32.totalorder %s46, %s48
    %p55 = scmp.eq.s32.totalorder %s31, 23
    %p56 = por %p54, %p55
    %p57 = scmp.ne.s32.totalorder %s48, %s49
    %p58 = scmp.eq.s32.totalorder %s31, 0
    %p59 = por %p57, %p58
    %p60 = scmp.ne.s32.totalorder %s48, %s49
    %p61 = scmp.eq.s32.totalorder %s32, 23
    %p62 = por %p60, %p61
    %p64 = scmp.ne.s32.totalorder %s49, %s63
    %p65 = scmp.eq.s32.totalorder %s32, 0
    %p66 = por %p64, %p65
    %s67 = ssub.s32 %s33, %s45
    %p68 = scmp.eq.s32.totalorder %s67, 0
    %s70 = sadd.s32 %s69, 1
    %s71 = scalar_select %p68, %s69, %s70
    %p74 = pneg %p68
    %p75 = scmp.eq.s32.totalorder %s26, 23
    %p76 = por %p74, %p75
    %p77 = scmp.ne.s32.totalorder %s69, %s72
    %p78 = scmp.eq.s32.totalorder %s26, 0
    %p79 = por %p77, %p78
    %p80 = scmp.ne.s32.totalorder %s69, %s72
    %p81 = scmp.eq.s32.totalorder %s31, 23
    %p82 = por %p80, %p81
    %p83 = scmp.ne.s32.totalorder %s72, %s73
    %p84 = scmp.eq.s32.totalorder %s31, 0
    %p85 = por %p83, %p84
    %p86 = scmp.ne.s32.totalorder %s72, %s73
    %p87 = scmp.eq.s32.totalorder %s32, 23
    %p88 = por %p86, %p87
    %p90 = scmp.ne.s32.totalorder %s73, %s89
    %p91 = scmp.eq.s32.totalorder %s32, 0
    %p92 = por %p90, %p91
    %s93 = ssub.s32 %s34, %s41
    %p94 = scmp.eq.s32.totalorder %s93, 0
    %s96 = sadd.s32 %s95, 1
    %s97 = scalar_select %p94, %s95, %s96
    %p100 = pneg %p94
    %p101 = scmp.eq.s32.totalorder %s26, 23
    %p102 = por %p100, %p101
    %p103 = scmp.ne.s32.totalorder %s95, %s98
    %p104 = scmp.eq.s32.totalorder %s26, 0
    %p105 = por %p103, %p104
    %p106 = scmp.ne.s32.totalorder %s95, %s98
    %p107 = scmp.eq.s32.totalorder %s31, 23
    %p108 = por %p106, %p107
    %p109 = scmp.ne.s32.totalorder %s98, %s99
    %p110 = scmp.eq.s32.totalorder %s31, 0
    %p111 = por %p109, %p110
    %p112 = scmp.ne.s32.totalorder %s98, %s99
    %p113 = scmp.eq.s32.totalorder %s32, 23
    %p114 = por %p112, %p113
    %p116 = scmp.ne.s32.totalorder %s99, %s115
    %p117 = scmp.eq.s32.totalorder %s32, 0
    %p118 = por %p116, %p117
    %s119 = ssub.s32 %s34, %s41
    %p120 = scmp.eq.s32.totalorder %s119, 0
    %s122 = sadd.s32 %s121, 1
    %s123 = scalar_select %p120, %s121, %s122
    %p126 = pneg %p120
    %p127 = scmp.eq.s32.totalorder %s26, 23
    %p128 = por %p126, %p127
    %p129 = scmp.ne.s32.totalorder %s121, %s124
    %p130 = scmp.eq.s32.totalorder %s26, 0
    %p131 = por %p129, %p130
    %p132 = scmp.ne.s32.totalorder %s121, %s124
    %p133 = scmp.eq.s32.totalorder %s31, 23
    %p134 = por %p132, %p133
    %p135 = scmp.ne.s32.totalorder %s124, %s125
    %p136 = scmp.eq.s32.totalorder %s31, 0
    %p137 = por %p135, %p136
    %p138 = scmp.ne.s32.totalorder %s124, %s125
    %p139 = scmp.eq.s32.totalorder %s32, 23
    %p140 = por %p138, %p139
    %p142 = scmp.ne.s32.totalorder %s125, %s141
    %p143 = scmp.eq.s32.totalorder %s32, 0
    %p144 = por %p142, %p143
    %s145 = ssub.s32 %s34, %s41
    %p146 = scmp.eq.s32.totalorder %s145, 0
    %s148 = sadd.s32 %s147, 1
    %s149 = scalar_select %p146, %s147, %s148
    %p152 = pneg %p146
    %p153 = scmp.eq.s32.totalorder %s26, 23
    %p154 = por %p152, %p153
    %p155 = scmp.ne.s32.totalorder %s147, %s150
    %p156 = scmp.eq.s32.totalorder %s26, 0
    %p157 = por %p155, %p156
    %p158 = scmp.ne.s32.totalorder %s147, %s150
    %p159 = scmp.eq.s32.totalorder %s31, 23
    %p160 = por %p158, %p159
    %p161 = scmp.ne.s32.totalorder %s150, %s151
    %p162 = scmp.eq.s32.totalorder %s31, 0
    %p163 = por %p161, %p162
    %p164 = scmp.ne.s32.totalorder %s150, %s151
    %p165 = scmp.eq.s32.totalorder %s32, 23
    %p166 = por %p164, %p165
    %p168 = scmp.ne.s32.totalorder %s151, %s167
    %p169 = scmp.eq.s32.totalorder %s32, 0
    %p170 = por %p168, %p169
    %s171 = ssub.s32 %s34, %s41
    %p172 = scmp.eq.s32.totalorder %s171, 0
    %s174 = sadd.s32 %s173, 1
    %s175 = scalar_select %p172, %s173, %s174
    %p178 = pneg %p172
    %p179 = scmp.eq.s32.totalorder %s26, 23
    %p180 = por %p178, %p179
    %p181 = scmp.ne.s32.totalorder %s173, %s176
    %p182 = scmp.eq.s32.totalorder %s26, 0
    %p183 = por %p181, %p182
    %p184 = scmp.ne.s32.totalorder %s173, %s176
    %p185 = scmp.eq.s32.totalorder %s31, 23
    %p186 = por %p184, %p185
    %p187 = scmp.ne.s32.totalorder %s176, %s177
    %p188 = scmp.eq.s32.totalorder %s31, 0
    %p189 = por %p187, %p188
    %p190 = scmp.ne.s32.totalorder %s176, %s177
    %p191 = scmp.eq.s32.totalorder %s32, 23
    %p192 = por %p190, %p191
    %p194 = scmp.ne.s32.totalorder %s177, %s193
    %p195 = scmp.eq.s32.totalorder %s32, 0
    %p196 = por %p194, %p195
    %s197 = ssub.s32 %s34, %s41
    %p198 = scmp.eq.s32.totalorder %s197, 0
    %s200 = sadd.s32 %s199, 1
    %s201 = scalar_select %p198, %s199, %s200
    %p204 = pneg %p198
    %p205 = scmp.eq.s32.totalorder %s26, 23
    %p206 = por %p204, %p205
    %p207 = scmp.ne.s32.totalorder %s199, %s202
    %p208 = scmp.eq.s32.totalorder %s26, 0
    %p209 = por %p207, %p208
    %p210 = scmp.ne.s32.totalorder %s199, %s202
    %p211 = scmp.eq.s32.totalorder %s31, 23
    %p212 = por %p210, %p211
    %p213 = scmp.ne.s32.totalorder %s202, %s203
    %p214 = scmp.eq.s32.totalorder %s31, 0
    %p215 = por %p213, %p214
    %p216 = scmp.ne.s32.totalorder %s202, %s203
    %p217 = scmp.eq.s32.totalorder %s32, 23
    %p218 = por %p216, %p217
    %p220 = scmp.ne.s32.totalorder %s203, %s219
    %p221 = scmp.eq.s32.totalorder %s32, 0
    %p222 = por %p220, %p221
    %s223 = ssub.s32 %s34, %s41
    %p224 = scmp.eq.s32.totalorder %s223, 0
    %s226 = sadd.s32 %s225, 1
    %s227 = scalar_select %p224, %s225, %s226
    %p230 = pneg %p224
    %p231 = scmp.eq.s32.totalorder %s26, 23
    %p232 = por %p230, %p231
    %p233 = scmp.ne.s32.totalorder %s225, %s228
    %p234 = scmp.eq.s32.totalorder %s26, 0
    %p235 = por %p233, %p234
    %p236 = scmp.ne.s32.totalorder %s225, %s228
    %p237 = scmp.eq.s32.totalorder %s31, 23
    %p238 = por %p236, %p237
    %p239 = scmp.ne.s32.totalorder %s228, %s229
    %p240 = scmp.eq.s32.totalorder %s31, 0
    %p241 = por %p239, %p240
    %p242 = scmp.ne.s32.totalorder %s228, %s229
    %p243 = scmp.eq.s32.totalorder %s32, 23
    %p244 = por %p242, %p243
    %p246 = scmp.ne.s32.totalorder %s229, %s245
    %p247 = scmp.eq.s32.totalorder %s32, 0
    %p248 = por %p246, %p247
    %s249 = ssub.s32 %s34, %s41
    %p250 = scmp.eq.s32.totalorder %s249, 0
    %s252 = sadd.s32 %s251, 1
    %s253 = scalar_select %p250, %s251, %s252
    %p256 = pneg %p250
    %p257 = scmp.eq.s32.totalorder %s26, 23
    %p258 = por %p256, %p257
    %p259 = scmp.ne.s32.totalorder %s251, %s254
    %p260 = scmp.eq.s32.totalorder %s26, 0
    %p261 = por %p259, %p260
    %p262 = scmp.ne.s32.totalorder %s251, %s254
    %p263 = scmp.eq.s32.totalorder %s31, 23
    %p264 = por %p262, %p263
    %p265 = scmp.ne.s32.totalorder %s254, %s255
    %p266 = scmp.eq.s32.totalorder %s31, 0
    %p267 = por %p265, %p266
    %p268 = scmp.ne.s32.totalorder %s254, %s255
    %p269 = scmp.eq.s32.totalorder %s32, 23
    %p270 = por %p268, %p269
    %p272 = scmp.ne.s32.totalorder %s255, %s271
    %p273 = scmp.eq.s32.totalorder %s32, 0
    %p274 = por %p272, %p273
    %s275 = ssub.s32 %s34, %s41
    %p276 = scmp.eq.s32.totalorder %s275, 0
    %s278 = sadd.s32 %s277, 1
    %s279 = scalar_select %p276, %s277, %s278
    %p282 = pneg %p276
    %p283 = scmp.eq.s32.totalorder %s26, 23
    %p284 = por %p282, %p283
    %p285 = scmp.ne.s32.totalorder %s277, %s280
    %p286 = scmp.eq.s32.totalorder %s26, 0
    %p287 = por %p285, %p286
    %p288 = scmp.ne.s32.totalorder %s277, %s280
    %p289 = scmp.eq.s32.totalorder %s31, 23
    %p290 = por %p288, %p289
    %p291 = scmp.ne.s32.totalorder %s280, %s281
    %p292 = scmp.eq.s32.totalorder %s31, 0
    %p293 = por %p291, %p292
    %p294 = scmp.ne.s32.totalorder %s280, %s281
    %p295 = scmp.eq.s32.totalorder %s32, 23
    %p296 = por %p294, %p295
    %p298 = scmp.ne.s32.totalorder %s281, %s297
    %p299 = scmp.eq.s32.totalorder %s32, 0
    %p300 = por %p298, %p299
    %s301 = ssub.s32 %s34, %s41
    %p302 = scmp.eq.s32.totalorder %s301, 0
    %s304 = sadd.s32 %s303, 1
    %s305 = scalar_select %p302, %s303, %s304
    %p308 = pneg %p302
    %p309 = scmp.eq.s32.totalorder %s26, 23
    %p310 = por %p308, %p309
    %p311 = scmp.ne.s32.totalorder %s303, %s306
    %p312 = scmp.eq.s32.totalorder %s26, 0
    %p313 = por %p311, %p312
    %p314 = scmp.ne.s32.totalorder %s303, %s306
    %p315 = scmp.eq.s32.totalorder %s31, 23
    %p316 = por %p314, %p315
    %p317 = scmp.ne.s32.totalorder %s306, %s307
    %p318 = scmp.eq.s32.totalorder %s31, 0
    %p319 = por %p317, %p318
    %p320 = scmp.ne.s32.totalorder %s306, %s307
    %p321 = scmp.eq.s32.totalorder %s32, 23
    %p322 = por %p320, %p321
    %p324 = scmp.ne.s32.totalorder %s307, %s323
    %p325 = scmp.eq.s32.totalorder %s32, 0
    %p326 = por %p324, %p325
    %s327 = ssub.s32 %s34, %s41
    %p328 = scmp.eq.s32.totalorder %s327, 0
    %s330 = sadd.s32 %s329, 1
    %s331 = scalar_select %p328, %s329, %s330
    %p334 = pneg %p328
    %p335 = scmp.eq.s32.totalorder %s26, 23
    %p336 = por %p334, %p335
    %p337 = scmp.ne.s32.totalorder %s329, %s332
    %p338 = scmp.eq.s32.totalorder %s26, 0
    %p339 = por %p337, %p338
    %p340 = scmp.ne.s32.totalorder %s329, %s332
    %p341 = scmp.eq.s32.totalorder %s31, 23
    %p342 = por %p340, %p341
    %p343 = scmp.ne.s32.totalorder %s332, %s333
    %p344 = scmp.eq.s32.totalorder %s31, 0
    %p345 = por %p343, %p344
    %p346 = scmp.ne.s32.totalorder %s332, %s333
    %p347 = scmp.eq.s32.totalorder %s32, 23
    %p348 = por %p346, %p347
    %p350 = scmp.ne.s32.totalorder %s333, %s349
    %p351 = scmp.eq.s32.totalorder %s32, 0
    %p352 = por %p350, %p351
    %s353 = ssub.s32 %s34, %s41
    %p354 = scmp.eq.s32.totalorder %s353, 0
    %s356 = sadd.s32 %s355, 1
    %s357 = scalar_select %p354, %s355, %s356
    %p360 = pneg %p354
    %p361 = scmp.eq.s32.totalorder %s26, 23
    %p362 = por %p360, %p361
    %p363 = scmp.ne.s32.totalorder %s355, %s358
    %p364 = scmp.eq.s32.totalorder %s26, 0
    %p365 = por %p363, %p364
    %p366 = scmp.ne.s32.totalorder %s355, %s358
    %p367 = scmp.eq.s32.totalorder %s31, 23
    %p368 = por %p366, %p367
    %p369 = scmp.ne.s32.totalorder %s358, %s359
    %p370 = scmp.eq.s32.totalorder %s31, 0
    %p371 = por %p369, %p370
    %p372 = scmp.ne.s32.totalorder %s358, %s359
    %p373 = scmp.eq.s32.totalorder %s32, 23
    %p374 = por %p372, %p373
    %p376 = scmp.ne.s32.totalorder %s359, %s375
    %p377 = scmp.eq.s32.totalorder %s32, 0
    %p378 = por %p376, %p377
    %s379 = ssub.s32 %s34, %s41
    %p380 = scmp.eq.s32.totalorder %s379, 0
    %s382 = sadd.s32 %s381, 1
    %s383 = scalar_select %p380, %s381, %s382
    %p386 = pneg %p380
    %p387 = scmp.eq.s32.totalorder %s26, 23
    %p388 = por %p386, %p387
    %p389 = scmp.ne.s32.totalorder %s381, %s384
    %p390 = scmp.eq.s32.totalorder %s26, 0
    %p391 = por %p389, %p390
    %p392 = scmp.ne.s32.totalorder %s381, %s384
    %p393 = scmp.eq.s32.totalorder %s31, 23
    %p394 = por %p392, %p393
    %p395 = scmp.ne.s32.totalorder %s384, %s385
    %p396 = scmp.eq.s32.totalorder %s31, 0
    %p397 = por %p395, %p396
    %p398 = scmp.ne.s32.totalorder %s384, %s385
    %p399 = scmp.eq.s32.totalorder %s32, 23
    %p400 = por %p398, %p399
    %p402 = scmp.ne.s32.totalorder %s385, %s401
    %p403 = scmp.eq.s32.totalorder %s32, 0
    %p404 = por %p402, %p403
    %s405 = ssub.s32 %s34, %s41
    %p406 = scmp.eq.s32.totalorder %s405, 0
    %s408 = sadd.s32 %s407, 1
    %s409 = scalar_select %p406, %s407, %s408
    %p412 = pneg %p406
    %p413 = scmp.eq.s32.totalorder %s26, 23
    %p414 = por %p412, %p413
    %p415 = scmp.ne.s32.totalorder %s407, %s410
    %p416 = scmp.eq.s32.totalorder %s26, 0
    %p417 = por %p415, %p416
    %p418 = scmp.ne.s32.totalorder %s407, %s410
    %p419 = scmp.eq.s32.totalorder %s31, 23
    %p420 = por %p418, %p419
    %p421 = scmp.ne.s32.totalorder %s410, %s411
    %p422 = scmp.eq.s32.totalorder %s31, 0
    %p423 = por %p421, %p422
    %p424 = scmp.ne.s32.totalorder %s410, %s411
    %p425 = scmp.eq.s32.totalorder %s32, 23
    %p426 = por %p424, %p425
    %p428 = scmp.ne.s32.totalorder %s411, %s427
    %p429 = scmp.eq.s32.totalorder %s32, 0
    %p430 = por %p428, %p429
    %s431 = ssub.s32 %s34, %s41
    %p432 = scmp.eq.s32.totalorder %s431, 0
    %s434 = sadd.s32 %s433, 1
    %s435 = scalar_select %p432, %s433, %s434
    %p438 = pneg %p432
    %p439 = scmp.eq.s32.totalorder %s26, 23
    %p440 = por %p438, %p439
    %p441 = scmp.ne.s32.totalorder %s433, %s436
    %p442 = scmp.eq.s32.totalorder %s26, 0
    %p443 = por %p441, %p442
    %p444 = scmp.ne.s32.totalorder %s433, %s436
    %p445 = scmp.eq.s32.totalorder %s31, 23
    %p446 = por %p444, %p445
    %p447 = scmp.ne.s32.totalorder %s436, %s437
    %p448 = scmp.eq.s32.totalorder %s31, 0
    %p449 = por %p447, %p448
    %p450 = scmp.ne.s32.totalorder %s436, %s437
    %p451 = scmp.eq.s32.totalorder %s32, 23
    %p452 = por %p450, %p451
    %p454 = scmp.ne.s32.totalorder %s437, %s453
    %p455 = scmp.eq.s32.totalorder %s32, 0
    %p456 = por %p454, %p455
    %s457 = ssub.s32 %s34, %s41
    %p458 = scmp.eq.s32.totalorder %s457, 0
    %s460 = sadd.s32 %s459, 1
    %s461 = scalar_select %p458, %s459, %s460
    %p464 = pneg %p458
    %p465 = scmp.eq.s32.totalorder %s26, 23
    %p466 = por %p464, %p465
    %p467 = scmp.ne.s32.totalorder %s459, %s462
    %p468 = scmp.eq.s32.totalorder %s26, 0
    %p469 = por %p467, %p468
    %p470 = scmp.ne.s32.totalorder %s459, %s462
    %p471 = scmp.eq.s32.totalorder %s31, 23
    %p472 = por %p470, %p471
    %p473 = scmp.ne.s32.totalorder %s462, %s463
    %p474 = scmp.eq.s32.totalorder %s31, 0
    %p475 = por %p473, %p474
    %p476 = scmp.ne.s32.totalorder %s462, %s463
    %p477 = scmp.eq.s32.totalorder %s32, 23
    %p478 = por %p476, %p477
    %p480 = scmp.ne.s32.totalorder %s463, %s479
    %p481 = scmp.eq.s32.totalorder %s32, 0
    %p482 = por %p480, %p481
    %s483 = ssub.s32 %s34, %s41
    %p484 = scmp.eq.s32.totalorder %s483, 0
    %s486 = sadd.s32 %s485, 1
    %s487 = scalar_select %p484, %s485, %s486
    %p490 = pneg %p484
    %p491 = scmp.eq.s32.totalorder %s26, 23
    %p492 = por %p490, %p491
    %p493 = scmp.ne.s32.totalorder %s485, %s488
    %p494 = scmp.eq.s32.totalorder %s26, 0
    %p495 = por %p493, %p494
    %p496 = scmp.ne.s32.totalorder %s485, %s488
    %p497 = scmp.eq.s32.totalorder %s31, 23
    %p498 = por %p496, %p497
    %p499 = scmp.ne.s32.totalorder %s488, %s489
    %p500 = scmp.eq.s32.totalorder %s31, 0
    %p501 = por %p499, %p500
    %p502 = scmp.ne.s32.totalorder %s488, %s489
    %p503 = scmp.eq.s32.totalorder %s32, 23
    %p504 = por %p502, %p503
    %p506 = scmp.ne.s32.totalorder %s489, %s505
    %p507 = scmp.eq.s32.totalorder %s32, 0
    %p508 = por %p506, %p507
    %s509 = ssub.s32 %s34, %s41
    %p510 = scmp.eq.s32.totalorder %s509, 0
    %s512 = sadd.s32 %s511, 1
    %s513 = scalar_select %p510, %s511, %s512
    %p516 = pneg %p510
    %p517 = scmp.eq.s32.totalorder %s26, 23
    %p518 = por %p516, %p517
    %p519 = scmp.ne.s32.totalorder %s511, %s514
    %p520 = scmp.eq.s32.totalorder %s26, 0
    %p521 = por %p519, %p520
    %p522 = scmp.ne.s32.totalorder %s511, %s514
    %p523 = scmp.eq.s32.totalorder %s31, 23
    %p524 = por %p522, %p523
    %p525 = scmp.ne.s32.totalorder %s514, %s515
    %p526 = scmp.eq.s32.totalorder %s31, 0
    %p527 = por %p525, %p526
    %p528 = scmp.ne.s32.totalorder %s514, %s515
    %p529 = scmp.eq.s32.totalorder %s32, 23
    %p530 = por %p528, %p529
    %p532 = scmp.ne.s32.totalorder %s515, %s531
    %p533 = scmp.eq.s32.totalorder %s32, 0
    %p534 = por %p532, %p533
    %s535 = ssub.s32 %s34, %s41
    %p536 = scmp.eq.s32.totalorder %s535, 0
    %s538 = sadd.s32 %s537, 1
    %s539 = scalar_select %p536, %s537, %s538
    %p542 = pneg %p536
    %p543 = scmp.eq.s32.totalorder %s26, 23
    %p544 = por %p542, %p543
    %p545 = scmp.ne.s32.totalorder %s537, %s540
    %p546 = scmp.eq.s32.totalorder %s26, 0
    %p547 = por %p545, %p546
    %p548 = scmp.ne.s32.totalorder %s537, %s540
    %p549 = scmp.eq.s32.totalorder %s31, 23
    %p550 = por %p548, %p549
    %p551 = scmp.ne.s32.totalorder %s540, %s541
    %p552 = scmp.eq.s32.totalorder %s31, 0
    %p553 = por %p551, %p552
    %p554 = scmp.ne.s32.totalorder %s540, %s541
    %p555 = scmp.eq.s32.totalorder %s32, 23
    %p556 = por %p554, %p555
    %p558 = scmp.ne.s32.totalorder %s541, %s557
    %p559 = scmp.eq.s32.totalorder %s32, 0
    %p560 = por %p558, %p559
    %s561 = ssub.s32 %s33, %s45
    %s562 = ssub.s32 %s34, %s41
    %s563 = sor.u32 %s561, %s562
    %p564 = scmp.eq.s32.totalorder %s563, 0
    %s566 = sadd.s32 %s565, 1
    %s567 = scalar_select %p564, %s565, %s566
    %p570 = pneg %p564
    %p571 = scmp.eq.s32.totalorder %s26, 23
    %p572 = por %p570, %p571
    %p573 = scmp.ne.s32.totalorder %s565, %s568
    %p574 = scmp.eq.s32.totalorder %s26, 0
    %p575 = por %p573, %p574
    %p576 = scmp.ne.s32.totalorder %s565, %s568
    %p577 = scmp.eq.s32.totalorder %s31, 23
    %p578 = por %p576, %p577
    %p579 = scmp.ne.s32.totalorder %s568, %s569
    %p580 = scmp.eq.s32.totalorder %s31, 0
    %p581 = por %p579, %p580
    %p582 = scmp.ne.s32.totalorder %s568, %s569
    %p583 = scmp.eq.s32.totalorder %s32, 23
    %p584 = por %p582, %p583
    %p586 = scmp.ne.s32.totalorder %s569, %s585
    %p587 = scmp.eq.s32.totalorder %s32, 0
    %p588 = por %p586, %p587
    %p589 = scmp.le.s32.totalorder 1, %s26
    %p590 = scmp.lt.s32.totalorder %s26, 25
    %p591 = pnand %p589, %p590
    %p592 = pneg %p591
    // Predicated region
    $region9: #{_lambda_.3} parent=5 // pred_check
      _
    $region10: #{_lambda_.3} parent=5 // pred_check_branch
      %594 = sbr.rel (%p591) target = $region12
    $region11: #{_lambda_.3} parent=5 // pred_region
      %s595 = ssub.s32 %s26, 1
      // Predicated region
      $region13: #{_lambda_.3} parent=11 // pred_check
        %p596 = pneg %p59
      $region14: #{_lambda_.3} parent=11 // pred_check_branch
        %598 = sbr.rel (%p596) target = $region16
      $region15: #{_lambda_.3} parent=11 // pred_region
        _
      $region16: #{_lambda_.3} parent=11 // pred_fallthru
        _
    $region12: #{_lambda_.3} parent=5 // pred_fallthru
      _
    %p599 = scmp.lt.s32.totalorder %s26, 24
    // Predicated region
    $region17: #{_lambda_.3} parent=5 // pred_check
      %p600 = pneg %p599
    $region18: #{_lambda_.3} parent=5 // pred_check_branch
      %602 = sbr.rel (%p600) target = $region20
    $region19: #{_lambda_.3} parent=5 // pred_region
      // Predicated region
      $region21: #{_lambda_.3} parent=19 // pred_check
        %p603 = pneg %p79
      $region22: #{_lambda_.3} parent=19 // pred_check_branch
        %605 = sbr.rel (%p603) target = $region24
      $region23: #{_lambda_.3} parent=19 // pred_region
        %p606 = scmp.lt.s32.totalorder %s33, 1
        %s607 = scalar_select %p606, %s33, 1
        %s608 = smul.addr %s607, 8
        %s609 = scalar_lea.vmem %s1, %s608
      $region24: #{_lambda_.3} parent=19 // pred_fallthru
        _
      // Predicated region
      $region25: #{_lambda_.3} parent=19 // pred_check
        %p610 = pneg %p105
      $region26: #{_lambda_.3} parent=19 // pred_check_branch
        %612 = sbr.rel (%p610) target = $region28
      $region27: #{_lambda_.3} parent=19 // pred_region
        %p613 = scmp.lt.s32.totalorder %s34, 11
        %s614 = scalar_select %p613, %s34, 11
        %s615 = scalar_lea.vmem %s2, %s614
      $region28: #{_lambda_.3} parent=19 // pred_fallthru
        _
      // Predicated region
      $region29: #{_lambda_.3} parent=19 // pred_check
        %p616 = pneg %p131
      $region30: #{_lambda_.3} parent=19 // pred_check_branch
        %618 = sbr.rel (%p616) target = $region32
      $region31: #{_lambda_.3} parent=19 // pred_region
        %p619 = scmp.lt.s32.totalorder %s34, 11
        %s620 = scalar_select %p619, %s34, 11
        %s621 = scalar_lea.vmem %s3, %s620
      $region32: #{_lambda_.3} parent=19 // pred_fallthru
        _
      // Predicated region
      $region33: #{_lambda_.3} parent=19 // pred_check
        %p622 = pneg %p157
      $region34: #{_lambda_.3} parent=19 // pred_check_branch
        %624 = sbr.rel (%p622) target = $region36
      $region35: #{_lambda_.3} parent=19 // pred_region
        %p625 = scmp.lt.s32.totalorder %s34, 11
        %s626 = scalar_select %p625, %s34, 11
        %s627 = smul.addr %s626, 16
        %s628 = smul.addr %s627, 4
        %s629 = scalar_lea.vmem %s4, %s628
      $region36: #{_lambda_.3} parent=19 // pred_fallthru
        _
      // Predicated region
      $region37: #{_lambda_.3} parent=19 // pred_check
        %p630 = pneg %p183
      $region38: #{_lambda_.3} parent=19 // pred_check_branch
        %632 = sbr.rel (%p630) target = $region40
      $region39: #{_lambda_.3} parent=19 // pred_region
        %p633 = scmp.lt.s32.totalorder %s34, 11
        %s634 = scalar_select %p633, %s34, 11
        %s635 = scalar_lea.vmem %s5, %s634
      $region40: #{_lambda_.3} parent=19 // pred_fallthru
        _
      // Predicated region
      $region41: #{_lambda_.3} parent=19 // pred_check
        %p636 = pneg %p209
      $region42: #{_lambda_.3} parent=19 // pred_check_branch
        %638 = sbr.rel (%p636) target = $region44
      $region43: #{_lambda_.3} parent=19 // pred_region
        %p639 = scmp.lt.s32.totalorder %s34, 11
        %s640 = scalar_select %p639, %s34, 11
        %s641 = smul.addr %s640, 16
        %s642 = smul.addr %s641, 4
        %s643 = scalar_lea.vmem %s6, %s642
      $region44: #{_lambda_.3} parent=19 // pred_fallthru
        _
      // Predicated region
      $region45: #{_lambda_.3} parent=19 // pred_check
        %p644 = pneg %p235
      $region46: #{_lambda_.3} parent=19 // pred_check_branch
        %646 = sbr.rel (%p644) target = $region48
      $region47: #{_lambda_.3} parent=19 // pred_region
        %p647 = scmp.lt.s32.totalorder %s34, 11
        %s648 = scalar_select %p647, %s34, 11
        %s649 = scalar_lea.vmem %s7, %s648
      $region48: #{_lambda_.3} parent=19 // pred_fallthru
        _
      // Predicated region
      $region49: #{_lambda_.3} parent=19 // pred_check
        %p650 = pneg %p261
      $region50: #{_lambda_.3} parent=19 // pred_check_branch
        %652 = sbr.rel (%p650) target = $region52
      $region51: #{_lambda_.3} parent=19 // pred_region
        %p653 = scmp.lt.s32.totalorder %s34, 11
        %s654 = scalar_select %p653, %s34, 11
        %s655 = smul.addr %s654, 16
        %s656 = smul.addr %s655, 4
        %s657 = scalar_lea.vmem %s8, %s656
      $region52: #{_lambda_.3} parent=19 // pred_fallthru
        _
      // Predicated region
      $region53: #{_lambda_.3} parent=19 // pred_check
        %p658 = pneg %p287
      $region54: #{_lambda_.3} parent=19 // pred_check_branch
        %660 = sbr.rel (%p658) target = $region56
      $region55: #{_lambda_.3} parent=19 // pred_region
        %p661 = scmp.lt.s32.totalorder %s34, 11
        %s662 = scalar_select %p661, %s34, 11
        %s663 = scalar_lea.vmem %s9, %s662
      $region56: #{_lambda_.3} parent=19 // pred_fallthru
        _
      // Predicated region
      $region57: #{_lambda_.3} parent=19 // pred_check
        %p664 = pneg %p313
      $region58: #{_lambda_.3} parent=19 // pred_check_branch
        %666 = sbr.rel (%p664) target = $region60
      $region59: #{_lambda_.3} parent=19 // pred_region
        %p667 = scmp.lt.s32.totalorder %s34, 11
        %s668 = scalar_select %p667, %s34, 11
        %s669 = smul.addr %s668, 16
        %s670 = smul.addr %s669, 4
        %s671 = scalar_lea.vmem %s10, %s670
      $region60: #{_lambda_.3} parent=19 // pred_fallthru
        _
      // Predicated region
      $region61: #{_lambda_.3} parent=19 // pred_check
        %p672 = pneg %p339
      $region62: #{_lambda_.3} parent=19 // pred_check_branch
        %674 = sbr.rel (%p672) target = $region64
      $region63: #{_lambda_.3} parent=19 // pred_region
        %p675 = scmp.lt.s32.totalorder %s34, 11
        %s676 = scalar_select %p675, %s34, 11
        %s677 = scalar_lea.vmem %s11, %s676
      $region64: #{_lambda_.3} parent=19 // pred_fallthru
        _
      // Predicated region
      $region65: #{_lambda_.3} parent=19 // pred_check
        %p678 = pneg %p365
      $region66: #{_lambda_.3} parent=19 // pred_check_branch
        %680 = sbr.rel (%p678) target = $region68
      $region67: #{_lambda_.3} parent=19 // pred_region
        %p681 = scmp.lt.s32.totalorder %s34, 11
        %s682 = scalar_select %p681, %s34, 11
        %s683 = scalar_lea.vmem %s12, %s682
      $region68: #{_lambda_.3} parent=19 // pred_fallthru
        _
      // Predicated region
      $region69: #{_lambda_.3} parent=19 // pred_check
        %p684 = pneg %p391
      $region70: #{_lambda_.3} parent=19 // pred_check_branch
        %686 = sbr.rel (%p684) target = $region72
      $region71: #{_lambda_.3} parent=19 // pred_region
        %p687 = scmp.lt.s32.totalorder %s34, 11
        %s688 = scalar_select %p687, %s34, 11
        %s689 = scalar_lea.vmem %s13, %s688
      $region72: #{_lambda_.3} parent=19 // pred_fallthru
        _
      // Predicated region
      $region73: #{_lambda_.3} parent=19 // pred_check
        %p690 = pneg %p417
      $region74: #{_lambda_.3} parent=19 // pred_check_branch
        %692 = sbr.rel (%p690) target = $region76
      $region75: #{_lambda_.3} parent=19 // pred_region
        %p693 = scmp.lt.s32.totalorder %s34, 11
        %s694 = scalar_select %p693, %s34, 11
        %s695 = scalar_lea.vmem %s14, %s694
      $region76: #{_lambda_.3} parent=19 // pred_fallthru
        _
      // Predicated region
      $region77: #{_lambda_.3} parent=19 // pred_check
        %p696 = pneg %p443
      $region78: #{_lambda_.3} parent=19 // pred_check_branch
        %698 = sbr.rel (%p696) target = $region80
      $region79: #{_lambda_.3} parent=19 // pred_region
        %p699 = scmp.lt.s32.totalorder %s34, 11
        %s700 = scalar_select %p699, %s34, 11
        %s701 = smul.addr %s700, 64
        %s702 = smul.addr %s701, 4
        %s703 = scalar_lea.vmem %s15, %s702
      $region80: #{_lambda_.3} parent=19 // pred_fallthru
        _
      // Predicated region
      $region81: #{_lambda_.3} parent=19 // pred_check
        %p704 = pneg %p469
      $region82: #{_lambda_.3} parent=19 // pred_check_branch
        %706 = sbr.rel (%p704) target = $region84
      $region83: #{_lambda_.3} parent=19 // pred_region
        %p707 = scmp.lt.s32.totalorder %s34, 11
        %s708 = scalar_select %p707, %s34, 11
        %s709 = smul.addr %s708, 4
        %s710 = scalar_lea.vmem %s16, %s709
      $region84: #{_lambda_.3} parent=19 // pred_fallthru
        _
      // Predicated region
      $region85: #{_lambda_.3} parent=19 // pred_check
        %p711 = pneg %p495
      $region86: #{_lambda_.3} parent=19 // pred_check_branch
        %713 = sbr.rel (%p711) target = $region88
      $region87: #{_lambda_.3} parent=19 // pred_region
        %p714 = scmp.lt.s32.totalorder %s34, 11
        %s715 = scalar_select %p714, %s34, 11
        %s716 = smul.addr %s715, 64
        %s717 = smul.addr %s716, 4
        %s718 = scalar_lea.vmem %s17, %s717
      $region88: #{_lambda_.3} parent=19 // pred_fallthru
        _
      // Predicated region
      $region89: #{_lambda_.3} parent=19 // pred_check
        %p719 = pneg %p521
      $region90: #{_lambda_.3} parent=19 // pred_check_branch
        %721 = sbr.rel (%p719) target = $region92
      $region91: #{_lambda_.3} parent=19 // pred_region
        %p722 = scmp.lt.s32.totalorder %s34, 11
        %s723 = scalar_select %p722, %s34, 11
        %s724 = scalar_lea.vmem %s18, %s723
      $region92: #{_lambda_.3} parent=19 // pred_fallthru
        _
      // Predicated region
      $region93: #{_lambda_.3} parent=19 // pred_check
        %p725 = pneg %p547
      $region94: #{_lambda_.3} parent=19 // pred_check_branch
        %727 = sbr.rel (%p725) target = $region96
      $region95: #{_lambda_.3} parent=19 // pred_region
        %p728 = scmp.lt.s32.totalorder %s34, 11
        %s729 = scalar_select %p728, %s34, 11
        %s730 = scalar_lea.vmem %s19, %s729
      $region96: #{_lambda_.3} parent=19 // pred_fallthru
        _
    $region20: #{_lambda_.3} parent=5 // pred_fallthru
      _
    %p731 = scmp.le.s32.totalorder 1, %s26
    %p732 = scmp.lt.s32.totalorder %s26, 25
    %p733 = pnand %p731, %p732
    %p734 = pneg %p733
    // Predicated region
    $region97: #{_lambda_.3} parent=5 // pred_check
      _
    $region98: #{_lambda_.3} parent=5 // pred_check_branch
      %736 = sbr.rel (%p733) target = $region100
    $region99: #{_lambda_.3} parent=5 // pred_region
      %s737 = ssub.s32 %s26, 1
      %p738 = pneg %p59
      %p739 = pneg %p56
      %p740 = scmp.lt.s32.totalorder %s35, 1
      %s741 = scalar_select %p740, %s35, 1
      %s742 = smul.addr %s741, 8
      %s743 = scalar_lea.vmem %s1, %s742
      %p744 = pneg %p85
      %p745 = pneg %p82
      %p746 = scmp.lt.s32.totalorder %s36, 11
      %s747 = scalar_select %p746, %s36, 11
      %s748 = scalar_lea.vmem %s2, %s747
      %p749 = pneg %p111
      %p750 = pneg %p108
      %p751 = scmp.lt.s32.totalorder %s36, 11
      %s752 = scalar_select %p751, %s36, 11
      %s753 = scalar_lea.vmem %s3, %s752
      %p754 = pneg %p137
      %p755 = pneg %p134
      %p756 = scmp.lt.s32.totalorder %s36, 11
      %s757 = scalar_select %p756, %s36, 11
      %s758 = smul.addr %s757, 16
      %s759 = smul.addr %s758, 4
      %s760 = scalar_lea.vmem %s4, %s759
      %p761 = pneg %p163
      %p762 = pneg %p160
      %p763 = scmp.lt.s32.totalorder %s36, 11
      %s764 = scalar_select %p763, %s36, 11
      %s765 = scalar_lea.vmem %s5, %s764
      %p766 = pneg %p189
      %p767 = pneg %p186
      %p768 = scmp.lt.s32.totalorder %s36, 11
      %s769 = scalar_select %p768, %s36, 11
      %s770 = smul.addr %s769, 16
      %s771 = smul.addr %s770, 4
      %s772 = scalar_lea.vmem %s6, %s771
      %p773 = pneg %p215
      %p774 = pneg %p212
      %p775 = scmp.lt.s32.totalorder %s36, 11
      %s776 = scalar_select %p775, %s36, 11
      %s777 = scalar_lea.vmem %s7, %s776
      %p778 = pneg %p241
      %p779 = pneg %p238
      %p780 = scmp.lt.s32.totalorder %s36, 11
      %s781 = scalar_select %p780, %s36, 11
      %s782 = smul.addr %s781, 16
      %s783 = smul.addr %s782, 4
      %s784 = scalar_lea.vmem %s8, %s783
      %p785 = pneg %p267
      %p786 = pneg %p264
      %p787 = scmp.lt.s32.totalorder %s36, 11
      %s788 = scalar_select %p787, %s36, 11
      %s789 = scalar_lea.vmem %s9, %s788
      %p790 = pneg %p293
      %p791 = pneg %p290
      %p792 = scmp.lt.s32.totalorder %s36, 11
      %s793 = scalar_select %p792, %s36, 11
      %s794 = smul.addr %s793, 16
      %s795 = smul.addr %s794, 4
      %s796 = scalar_lea.vmem %s10, %s795
      %p797 = pneg %p319
      %p798 = pneg %p316
      %p799 = scmp.lt.s32.totalorder %s36, 11
      %s800 = scalar_select %p799, %s36, 11
      %s801 = scalar_lea.vmem %s11, %s800
      %p802 = pneg %p345
      %p803 = pneg %p342
      %p804 = scmp.lt.s32.totalorder %s36, 11
      %s805 = scalar_select %p804, %s36, 11
      %s806 = scalar_lea.vmem %s12, %s805
      %p807 = pneg %p371
      %p808 = pneg %p368
      %p809 = scmp.lt.s32.totalorder %s36, 11
      %s810 = scalar_select %p809, %s36, 11
      %s811 = scalar_lea.vmem %s13, %s810
      %p812 = pneg %p397
      %p813 = pneg %p394
      %p814 = scmp.lt.s32.totalorder %s36, 11
      %s815 = scalar_select %p814, %s36, 11
      %s816 = scalar_lea.vmem %s14, %s815
      %p817 = pneg %p423
      %p818 = pneg %p420
      %p819 = scmp.lt.s32.totalorder %s36, 11
      %s820 = scalar_select %p819, %s36, 11
      %s821 = smul.addr %s820, 64
      %s822 = smul.addr %s821, 4
      %s823 = scalar_lea.vmem %s15, %s822
      %p824 = pneg %p449
      %p825 = pneg %p446
      %p826 = scmp.lt.s32.totalorder %s36, 11
      %s827 = scalar_select %p826, %s36, 11
      %s828 = smul.addr %s827, 4
      %s829 = scalar_lea.vmem %s16, %s828
      %p830 = pneg %p475
      %p831 = pneg %p472
      %p832 = scmp.lt.s32.totalorder %s36, 11
      %s833 = scalar_select %p832, %s36, 11
      %s834 = smul.addr %s833, 64
      %s835 = smul.addr %s834, 4
      %s836 = scalar_lea.vmem %s17, %s835
      %p837 = pneg %p501
      %p838 = pneg %p498
      %p839 = scmp.lt.s32.totalorder %s36, 11
      %s840 = scalar_select %p839, %s36, 11
      %s841 = scalar_lea.vmem %s18, %s840
      %p842 = pneg %p527
      %p843 = pneg %p524
      %p844 = scmp.lt.s32.totalorder %s36, 11
      %s845 = scalar_select %p844, %s36, 11
      %s846 = scalar_lea.vmem %s19, %s845
      %p847 = pneg %p553
      %p848 = pneg %p550
      %p849 = pneg %p581
      %p850 = pneg %p578
      %p851 = scmp.lt.s32.totalorder %s35, 1
      %s852 = scalar_select %p851, %s35, 1
      %p853 = scmp.lt.s32.totalorder %s36, 11
      %s854 = scalar_select %p853, %s36, 11
      %s855 = smul.addr %s852, 12
      %s856 = sadd.s32 %s854, %s855
      %s857 = smul.addr %s856, 8
      %s858 = scalar_lea.vmem %s20, %s857
      %p859 = scmp.lt.s32.totalorder %s35, 1
      %s860 = scalar_select %p859, %s35, 1
      %s861 = smul.addr %s860, 8
      %s862 = scalar_lea.vmem %s1, %s861
      %p863 = scmp.lt.s32.totalorder %s36, 11
      %s864 = scalar_select %p863, %s36, 11
      %s865 = scalar_lea.vmem %s2, %s864
      %p866 = scmp.lt.s32.totalorder %s36, 11
      %s867 = scalar_select %p866, %s36, 11
      %s868 = scalar_lea.vmem %s3, %s867
      %p869 = scmp.lt.s32.totalorder %s36, 11
      %s870 = scalar_select %p869, %s36, 11
      %s871 = smul.addr %s870, 16
      %s872 = smul.addr %s871, 4
      %s873 = scalar_lea.vmem %s4, %s872
      %p874 = scmp.lt.s32.totalorder %s36, 11
      %s875 = scalar_select %p874, %s36, 11
      %s876 = scalar_lea.vmem %s5, %s875
      %p877 = scmp.lt.s32.totalorder %s36, 11
      %s878 = scalar_select %p877, %s36, 11
      %s879 = smul.addr %s878, 16
      %s880 = smul.addr %s879, 4
      %s881 = scalar_lea.vmem %s6, %s880
      %p882 = scmp.lt.s32.totalorder %s36, 11
      %s883 = scalar_select %p882, %s36, 11
      %s884 = scalar_lea.vmem %s7, %s883
      %p885 = scmp.lt.s32.totalorder %s36, 11
      %s886 = scalar_select %p885, %s36, 11
      %s887 = smul.addr %s886, 16
      %s888 = smul.addr %s887, 4
      %s889 = scalar_lea.vmem %s8, %s888
      %p890 = scmp.lt.s32.totalorder %s36, 11
      %s891 = scalar_select %p890, %s36, 11
      %s892 = scalar_lea.vmem %s9, %s891
      %p893 = scmp.lt.s32.totalorder %s36, 11
      %s894 = scalar_select %p893, %s36, 11
      %s895 = smul.addr %s894, 16
      %s896 = smul.addr %s895, 4
      %s897 = scalar_lea.vmem %s10, %s896
      %p898 = scmp.lt.s32.totalorder %s36, 11
      %s899 = scalar_select %p898, %s36, 11
      %s900 = scalar_lea.vmem %s11, %s899
      %p901 = scmp.lt.s32.totalorder %s36, 11
      %s902 = scalar_select %p901, %s36, 11
      %s903 = scalar_lea.vmem %s12, %s902
      %p904 = scmp.lt.s32.totalorder %s36, 11
      %s905 = scalar_select %p904, %s36, 11
      %s906 = scalar_lea.vmem %s13, %s905
      %p907 = scmp.lt.s32.totalorder %s36, 11
      %s908 = scalar_select %p907, %s36, 11
      %s909 = scalar_lea.vmem %s14, %s908
      %p910 = scmp.lt.s32.totalorder %s36, 11
      %s911 = scalar_select %p910, %s36, 11
      %s912 = smul.addr %s911, 64
      %s913 = smul.addr %s912, 4
      %s914 = scalar_lea.vmem %s15, %s913
      %p915 = scmp.lt.s32.totalorder %s36, 11
      %s916 = scalar_select %p915, %s36, 11
      %s917 = smul.addr %s916, 4
      %s918 = scalar_lea.vmem %s16, %s917
      %p919 = scmp.lt.s32.totalorder %s36, 11
      %s920 = scalar_select %p919, %s36, 11
      %s921 = smul.addr %s920, 64
      %s922 = smul.addr %s921, 4
      %s923 = scalar_lea.vmem %s17, %s922
      %p924 = scmp.lt.s32.totalorder %s36, 11
      %s925 = scalar_select %p924, %s36, 11
      %s926 = scalar_lea.vmem %s18, %s925
      %p927 = scmp.lt.s32.totalorder %s36, 11
      %s928 = scalar_select %p927, %s36, 11
      %s929 = scalar_lea.vmem %s19, %s928
      %p930 = scmp.lt.s32.totalorder %s35, 1
      %s931 = scalar_select %p930, %s35, 1
      %p932 = scmp.lt.s32.totalorder %s36, 11
      %s933 = scalar_select %p932, %s36, 11
      %s934 = smul.addr %s931, 12
      %s935 = sadd.s32 %s933, %s934
      %s936 = smul.addr %s935, 8
      %s937 = scalar_lea.vmem %s20, %s936
      %p939 = scmp.eq.s32.totalorder %s36, 0
      // Predicated region
      $region101: #{_lambda_.3} parent=99 // pred_check
        %p940 = pneg %p939
      $region102: #{_lambda_.3} parent=99 // pred_check_branch
        %942 = sbr.rel (%p940) target = $region104
      $region103: #{_lambda_.3} parent=99 // pred_region
        %v943 = vld [vmem:[%s862] sm:$0xff]
        %944 = vst [vmem:[#allocation2] sm:$0xff] %v943
      $region104: #{_lambda_.3} parent=99 // pred_fallthru
        _
      %v945 = vld [vmem:[#allocation2] sm:$0xff]
      %v946 = vld [vmem:[%s865] sm:$0x1]
      %v947 = vld [vmem:[%s868] sm:$0x1]
      %948 = vadd.xlane.f32.xlu0 %v945
      %v949 = vpop.xlane.xlu0 %948
      %v950 = vmul.f32 %v949, 0.0078125
      %v951 = vmul.f32 %v945, %v945
      %952 = vadd.xlane.f32.xlu0 %v951
      %v953 = vpop.xlane.xlu0 %952
      %v954 = vmul.f32 %v953, 0.0078125
      %v955 = vmul.f32 %v950, %v950
      %v956 = vsub.f32 %v954, %v955
      %v957 = vmax.f32 %v956, 0.0
      %v958 = vsub.f32 %v945, %v950
      %v959 = vadd.f32 %v957, 1e-06
      %v960 = vrsqrt.pop %v959
      %v961 = vmul.f32 %v958, %v960
      %v963 = vlaneseq
      %v964 = vshrl.u32 %v963, 7
      %v965 = vsub.s32 0, %v964
      %v966 = vrot.slane %v946, %v965
      %v968 = vmul.f32 %v961, %v966
      %v970 = vlaneseq
      %v971 = vshrl.u32 %v970, 7
      %v972 = vsub.s32 0, %v971
      %v973 = vrot.slane %v947, %v972
      %v975 = vadd.f32 %v968, %v973
      %v976 = vpack.c.bf16 %v975, %v975
      %v977 = vld [vmem:[%s873] sm:$0xf]
      %v978 = vld [vmem:[%s873 + $0x4] sm:$0xf]
      %v979 = vld [vmem:[%s873 + $0x8] sm:$0xf]
      %v980 = vld [vmem:[%s873 + $0xc] sm:$0xf]
      %v981 = vld [vmem:[%s873 + $0x10] sm:$0xf]
      %v982 = vld [vmem:[%s873 + $0x14] sm:$0xf]
      %v983 = vld [vmem:[%s873 + $0x18] sm:$0xf]
      %v984 = vld [vmem:[%s873 + $0x1c] sm:$0xf]
      %v985 = vld [vmem:[%s873 + $0x20] sm:$0xf]
      %v986 = vld [vmem:[%s873 + $0x24] sm:$0xf]
      %v987 = vld [vmem:[%s873 + $0x28] sm:$0xf]
      %v988 = vld [vmem:[%s873 + $0x2c] sm:$0xf]
      %v989 = vld [vmem:[%s873 + $0x30] sm:$0xf]
      %v990 = vld [vmem:[%s873 + $0x34] sm:$0xf]
      %v991 = vld [vmem:[%s873 + $0x38] sm:$0xf]
      %v992 = vld [vmem:[%s873 + $0x3c] sm:$0xf]
      %v993 = vld [vmem:[%s876] sm:$0x1]
      %v995 = vlaneseq
      %v996 = vshrl.u32 %v995, 7
      %v997 = vsub.s32 0, %v996
      %v998 = vrot.slane %v993, %v997
      %v1016 = vunpack.c.l.b16 %v977
      %v1017 = vunpack.c.l.b16 %v978
      %v1018 = vunpack.c.l.b16 %v979
      %v1019 = vunpack.c.l.b16 %v980
      %v1020 = vunpack.c.l.b16 %v981
      %v1021 = vunpack.c.l.b16 %v982
      %v1022 = vunpack.c.l.b16 %v983
      %v1023 = vunpack.c.l.b16 %v984
      %v1024 = vunpack.c.l.b16 %v985
      %v1025 = vunpack.c.l.b16 %v986
      %v1026 = vunpack.c.l.b16 %v987
      %v1027 = vunpack.c.l.b16 %v988
      %v1028 = vunpack.c.l.b16 %v989
      %v1029 = vunpack.c.l.b16 %v990
      %v1030 = vunpack.c.l.b16 %v991
      %v1031 = vunpack.c.l.b16 %v992
      %v1032 = vpack.c.b16 %v1017, %v1016
      %v1033 = vpack.c.b16 %v1019, %v1018
      %v1034 = vpack.c.b16 %v1021, %v1020
      %v1035 = vpack.c.b16 %v1023, %v1022
      %v1036 = vpack.c.b16 %v1025, %v1024
      %v1037 = vpack.c.b16 %v1027, %v1026
      %v1038 = vpack.c.b16 %v1029, %v1028
      %v1039 = vpack.c.b16 %v1031, %v1030
      %1048 = vmatprep.subr.bf16.mxu0 0
      %1049 = vmatpush1.bf16.msra.mxu0 %v1032
      %1050 = vmatprep.subr.bf16.mxu0 0
      %1051 = vmatpush1.bf16.msra.mxu0 %v1033
      %1052 = vmatprep.subr.bf16.mxu0 0
      %1053 = vmatpush1.bf16.msra.mxu0 %v1034
      %1054 = vmatprep.subr.bf16.mxu0 0
      %1055 = vmatpush1.bf16.msra.mxu0 %v1035
      %1056 = vmatprep.subr.bf16.mxu0 0
      %1057 = vmatpush1.bf16.msra.mxu0 %v1036
      %1058 = vmatprep.subr.bf16.mxu0 0
      %1059 = vmatpush1.bf16.msra.mxu0 %v1037
      %1060 = vmatprep.subr.bf16.mxu0 0
      %1061 = vmatpush1.bf16.msra.mxu0 %v1038
      %1062 = vmatprep.subr.bf16.mxu0 0
      %1063 = vmatpush1.bf16.msra.mxu0 %v1039
      %1064 = vmatprep.subr.bf16.mxu0 0
      %1065 = vmatpush1.bf16.msra.mxu0 0
      %1066 = vmatprep.subr.bf16.mxu0 0
      %1067 = vmatpush1.bf16.msra.mxu0 0
      %1068 = vmatprep.subr.bf16.mxu0 0
      %1069 = vmatpush1.bf16.msra.mxu0 0
      %1070 = vmatprep.subr.bf16.mxu0 0
      %1071 = vmatpush1.bf16.msra.mxu0 0
      %1072 = vmatprep.subr.bf16.mxu0 0
      %1073 = vmatpush1.bf16.msra.mxu0 0
      %1074 = vmatprep.subr.bf16.mxu0 0
      %1075 = vmatpush1.bf16.msra.mxu0 0
      %1076 = vmatprep.subr.bf16.mxu0 0
      %1077 = vmatpush1.bf16.msra.mxu0 0
      %1078 = vmatprep.subr.bf16.mxu0 0
      %1079 = vmatpush1.bf16.msra.mxu0 0
      %1080 = vmatprep.mubr.bf16.mxu0 0
      %1081 = vmatmul.mubr.bf16.gmra.mrb[0].mxu0 %v976
      %v1082 = vpop.f32.mrb[0].mxu0
      %v1083 = vadd.f32 %v998, %v1082
      %v1084 = vpop.f32.mrb[0].mxu0
      %v1085 = vpop.f32.mrb[0].mxu0
      %v1086 = vpop.f32.mrb[0].mxu0
      %1087 = vdwg.mxu0
      %v1088 = vld [vmem:[%s881] sm:$0xf]
      %v1089 = vld [vmem:[%s881 + $0x4] sm:$0xf]
      %v1090 = vld [vmem:[%s881 + $0x8] sm:$0xf]
      %v1091 = vld [vmem:[%s881 + $0xc] sm:$0xf]
      %v1092 = vld [vmem:[%s881 + $0x10] sm:$0xf]
      %v1093 = vld [vmem:[%s881 + $0x14] sm:$0xf]
      %v1094 = vld [vmem:[%s881 + $0x18] sm:$0xf]
      %v1095 = vld [vmem:[%s881 + $0x1c] sm:$0xf]
      %v1096 = vld [vmem:[%s881 + $0x20] sm:$0xf]
      %v1097 = vld [vmem:[%s881 + $0x24] sm:$0xf]
      %v1098 = vld [vmem:[%s881 + $0x28] sm:$0xf]
      %v1099 = vld [vmem:[%s881 + $0x2c] sm:$0xf]
      %v1100 = vld [vmem:[%s881 + $0x30] sm:$0xf]
      %v1101 = vld [vmem:[%s881 + $0x34] sm:$0xf]
      %v1102 = vld [vmem:[%s881 + $0x38] sm:$0xf]
      %v1103 = vld [vmem:[%s881 + $0x3c] sm:$0xf]
      %v1104 = vld [vmem:[%s884] sm:$0x1]
      %v1106 = vlaneseq
      %v1107 = vshrl.u32 %v1106, 7
      %v1108 = vsub.s32 0, %v1107
      %v1109 = vrot.slane %v1104, %v1108
      %v1127 = vunpack.c.l.b16 %v1088
      %v1128 = vunpack.c.l.b16 %v1089
      %v1129 = vunpack.c.l.b16 %v1090
      %v1130 = vunpack.c.l.b16 %v1091
      %v1131 = vunpack.c.l.b16 %v1092
      %v1132 = vunpack.c.l.b16 %v1093
      %v1133 = vunpack.c.l.b16 %v1094
      %v1134 = vunpack.c.l.b16 %v1095
      %v1135 = vunpack.c.l.b16 %v1096
      %v1136 = vunpack.c.l.b16 %v1097
      %v1137 = vunpack.c.l.b16 %v1098
      %v1138 = vunpack.c.l.b16 %v1099
      %v1139 = vunpack.c.l.b16 %v1100
      %v1140 = vunpack.c.l.b16 %v1101
      %v1141 = vunpack.c.l.b16 %v1102
      %v1142 = vunpack.c.l.b16 %v1103
      %v1143 = vpack.c.b16 %v1128, %v1127
      %v1144 = vpack.c.b16 %v1130, %v1129
      %v1145 = vpack.c.b16 %v1132, %v1131
      %v1146 = vpack.c.b16 %v1134, %v1133
      %v1147 = vpack.c.b16 %v1136, %v1135
      %v1148 = vpack.c.b16 %v1138, %v1137
      %v1149 = vpack.c.b16 %v1140, %v1139
      %v1150 = vpack.c.b16 %v1142, %v1141
      %1159 = vmatprep.subr.bf16.mxu0 0
      %1160 = vmatpush1.bf16.msra.mxu0 %v1143
      %1161 = vmatprep.subr.bf16.mxu0 0
      %1162 = vmatpush1.bf16.msra.mxu0 %v1144
      %1163 = vmatprep.subr.bf16.mxu0 0
      %1164 = vmatpush1.bf16.msra.mxu0 %v1145
      %1165 = vmatprep.subr.bf16.mxu0 0
      %1166 = vmatpush1.bf16.msra.mxu0 %v1146
      %1167 = vmatprep.subr.bf16.mxu0 0
      %1168 = vmatpush1.bf16.msra.mxu0 %v1147
      %1169 = vmatprep.subr.bf16.mxu0 0
      %1170 = vmatpush1.bf16.msra.mxu0 %v1148
      %1171 = vmatprep.subr.bf16.mxu0 0
      %1172 = vmatpush1.bf16.msra.mxu0 %v1149
      %1173 = vmatprep.subr.bf16.mxu0 0
      %1174 = vmatpush1.bf16.msra.mxu0 %v1150
      %1175 = vmatprep.subr.bf16.mxu0 0
      %1176 = vmatpush1.bf16.msra.mxu0 0
      %1177 = vmatprep.subr.bf16.mxu0 0
      %1178 = vmatpush1.bf16.msra.mxu0 0
      %1179 = vmatprep.subr.bf16.mxu0 0
      %1180 = vmatpush1.bf16.msra.mxu0 0
      %1181 = vmatprep.subr.bf16.mxu0 0
      %1182 = vmatpush1.bf16.msra.mxu0 0
      %1183 = vmatprep.subr.bf16.mxu0 0
      %1184 = vmatpush1.bf16.msra.mxu0 0
      %1185 = vmatprep.subr.bf16.mxu0 0
      %1186 = vmatpush1.bf16.msra.mxu0 0
      %1187 = vmatprep.subr.bf16.mxu0 0
      %1188 = vmatpush1.bf16.msra.mxu0 0
      %1189 = vmatprep.subr.bf16.mxu0 0
      %1190 = vmatpush1.bf16.msra.mxu0 0
      %1191 = vmatprep.mubr.bf16.mxu0 0
      %1192 = vmatmul.mubr.bf16.gmra.mrb[0].mxu0 %v976
      %v1193 = vpop.f32.mrb[0].mxu0
      %v1194 = vadd.f32 %v1109, %v1193
      %v1195 = vpop.f32.mrb[0].mxu0
      %v1196 = vpop.f32.mrb[0].mxu0
      %v1197 = vpop.f32.mrb[0].mxu0
      %1198 = vdwg.mxu0
      %v1199 = vld [vmem:[%s889] sm:$0xf]
      %v1200 = vld [vmem:[%s889 + $0x4] sm:$0xf]
      %v1201 = vld [vmem:[%s889 + $0x8] sm:$0xf]
      %v1202 = vld [vmem:[%s889 + $0xc] sm:$0xf]
      %v1203 = vld [vmem:[%s889 + $0x10] sm:$0xf]
      %v1204 = vld [vmem:[%s889 + $0x14] sm:$0xf]
      %v1205 = vld [vmem:[%s889 + $0x18] sm:$0xf]
      %v1206 = vld [vmem:[%s889 + $0x1c] sm:$0xf]
      %v1207 = vld [vmem:[%s889 + $0x20] sm:$0xf]
      %v1208 = vld [vmem:[%s889 + $0x24] sm:$0xf]
      %v1209 = vld [vmem:[%s889 + $0x28] sm:$0xf]
      %v1210 = vld [vmem:[%s889 + $0x2c] sm:$0xf]
      %v1211 = vld [vmem:[%s889 + $0x30] sm:$0xf]
      %v1212 = vld [vmem:[%s889 + $0x34] sm:$0xf]
      %v1213 = vld [vmem:[%s889 + $0x38] sm:$0xf]
      %v1214 = vld [vmem:[%s889 + $0x3c] sm:$0xf]
      %v1215 = vld [vmem:[%s892] sm:$0x1]
      %v1217 = vlaneseq
      %v1218 = vshrl.u32 %v1217, 7
      %v1219 = vsub.s32 0, %v1218
      %v1220 = vrot.slane %v1215, %v1219
      %v1238 = vunpack.c.l.b16 %v1199
      %v1239 = vunpack.c.l.b16 %v1200
      %v1240 = vunpack.c.l.b16 %v1201
      %v1241 = vunpack.c.l.b16 %v1202
      %v1242 = vunpack.c.l.b16 %v1203
      %v1243 = vunpack.c.l.b16 %v1204
      %v1244 = vunpack.c.l.b16 %v1205
      %v1245 = vunpack.c.l.b16 %v1206
      %v1246 = vunpack.c.l.b16 %v1207
      %v1247 = vunpack.c.l.b16 %v1208
      %v1248 = vunpack.c.l.b16 %v1209
      %v1249 = vunpack.c.l.b16 %v1210
      %v1250 = vunpack.c.l.b16 %v1211
      %v1251 = vunpack.c.l.b16 %v1212
      %v1252 = vunpack.c.l.b16 %v1213
      %v1253 = vunpack.c.l.b16 %v1214
      %v1254 = vpack.c.b16 %v1239, %v1238
      %v1255 = vpack.c.b16 %v1241, %v1240
      %v1256 = vpack.c.b16 %v1243, %v1242
      %v1257 = vpack.c.b16 %v1245, %v1244
      %v1258 = vpack.c.b16 %v1247, %v1246
      %v1259 = vpack.c.b16 %v1249, %v1248
      %v1260 = vpack.c.b16 %v1251, %v1250
      %v1261 = vpack.c.b16 %v1253, %v1252
      %1270 = vmatprep.subr.bf16.mxu0 0
      %1271 = vmatpush1.bf16.msra.mxu0 %v1254
      %1272 = vmatprep.subr.bf16.mxu0 0
      %1273 = vmatpush1.bf16.msra.mxu0 %v1255
      %1274 = vmatprep.subr.bf16.mxu0 0
      %1275 = vmatpush1.bf16.msra.mxu0 %v1256
      %1276 = vmatprep.subr.bf16.mxu0 0
      %1277 = vmatpush1.bf16.msra.mxu0 %v1257
      %1278 = vmatprep.subr.bf16.mxu0 0
      %1279 = vmatpush1.bf16.msra.mxu0 %v1258
      %1280 = vmatprep.subr.bf16.mxu0 0
      %1281 = vmatpush1.bf16.msra.mxu0 %v1259
      %1282 = vmatprep.subr.bf16.mxu0 0
      %1283 = vmatpush1.bf16.msra.mxu0 %v1260
      %1284 = vmatprep.subr.bf16.mxu0 0
      %1285 = vmatpush1.bf16.msra.mxu0 %v1261
      %1286 = vmatprep.subr.bf16.mxu0 0
      %1287 = vmatpush1.bf16.msra.mxu0 0
      %1288 = vmatprep.subr.bf16.mxu0 0
      %1289 = vmatpush1.bf16.msra.mxu0 0
      %1290 = vmatprep.subr.bf16.mxu0 0
      %1291 = vmatpush1.bf16.msra.mxu0 0
      %1292 = vmatprep.subr.bf16.mxu0 0
      %1293 = vmatpush1.bf16.msra.mxu0 0
      %1294 = vmatprep.subr.bf16.mxu0 0
      %1295 = vmatpush1.bf16.msra.mxu0 0
      %1296 = vmatprep.subr.bf16.mxu0 0
      %1297 = vmatpush1.bf16.msra.mxu0 0
      %1298 = vmatprep.subr.bf16.mxu0 0
      %1299 = vmatpush1.bf16.msra.mxu0 0
      %1300 = vmatprep.subr.bf16.mxu0 0
      %1301 = vmatpush1.bf16.msra.mxu0 0
      %1302 = vmatprep.mubr.bf16.mxu0 0
      %1303 = vmatmul.mubr.bf16.gmra.mrb[0].mxu0 %v976
      %v1304 = vpop.f32.mrb[0].mxu0
      %v1305 = vadd.f32 %v1220, %v1304
      %v1306 = vpop.f32.mrb[0].mxu0
      %v1307 = vpop.f32.mrb[0].mxu0
      %v1308 = vpop.f32.mrb[0].mxu0
      %1309 = vdwg.mxu0
      %v1310 = vmul.f32 %v1083, 0.125
      %v1311 = vpack.c.bf16 %v1310, %v1310
      %v1312 = vpack.c.bf16 %v1194, %v1194
      %v1313 = vpack.c.bf16 %v1305, %v1305
      %v1314 = vld [vmem:[%s0] sm:$0x1]
      %v1316 = vlaneseq
      %v1317 = vshrl.u32 %v1316, 7
      %v1318 = vsub.s32 0, %v1317
      %v1319 = vrot.slane %v1314, %v1318
      %vm1321 = vcmask 523264
      %v1323 = vsel %vm1321, %v1311, 0
      %v1326 = vsel %vm1321, %v1312, 0
      %1328 = vmatprep.subr.bf16.mxu0 0
      %1329 = vmatpush1.bf16.xpose.msra.mxu0 %v1326
      %1330 = vmatprep.subr.bf16.mxu0 0
      %1331 = vmatpush1.bf16.xpose.msra.mxu0 0
      %1332 = vmatprep.subr.bf16.mxu0 0
      %1333 = vmatpush1.bf16.xpose.msra.mxu0 0
      %1334 = vmatprep.subr.bf16.mxu0 0
      %1335 = vmatpush1.bf16.xpose.msra.mxu0 0
      %1336 = vmatprep.subr.bf16.mxu0 0
      %1337 = vmatpush1.bf16.xpose.msra.mxu0 0
      %1338 = vmatprep.subr.bf16.mxu0 0
      %1339 = vmatpush1.bf16.xpose.msra.mxu0 0
      %1340 = vmatprep.subr.bf16.mxu0 0
      %1341 = vmatpush1.bf16.xpose.msra.mxu0 0
      %1342 = vmatprep.subr.bf16.mxu0 0
      %1343 = vmatpush1.bf16.xpose.msra.mxu0 0
      %1344 = vmatprep.subr.bf16.mxu0 0
      %1345 = vmatpush1.bf16.xpose.msra.mxu0 0
      %1346 = vmatprep.subr.bf16.mxu0 0
      %1347 = vmatpush1.bf16.xpose.msra.mxu0 0
      %1348 = vmatprep.subr.bf16.mxu0 0
      %1349 = vmatpush1.bf16.xpose.msra.mxu0 0
      %1350 = vmatprep.subr.bf16.mxu0 0
      %1351 = vmatpush1.bf16.xpose.msra.mxu0 0
      %1352 = vmatprep.subr.bf16.mxu0 0
      %1353 = vmatpush1.bf16.xpose.msra.mxu0 0
      %1354 = vmatprep.subr.bf16.mxu0 0
      %1355 = vmatpush1.bf16.xpose.msra.mxu0 0
      %1356 = vmatprep.subr.bf16.mxu0 0
      %1357 = vmatpush1.bf16.xpose.msra.mxu0 0
      %1358 = vmatprep.subr.bf16.mxu0 0
      %1359 = vmatpush1.bf16.xpose.msra.mxu0 0
      %1360 = vmatprep.mubr.bf16.mxu0 0
      %1361 = vmatmul.mubr.bf16.gmra.mrb[0].mxu0 %v1323
      %v1362 = vpop.f32.mrb[0].mxu0
      %v1363 = vadd.f32 %v1319, %v1362
      %v1364 = vpop.f32.mrb[0].mxu0
      %v1365 = vpop.f32.mrb[0].mxu0
      %v1366 = vpop.f32.mrb[0].mxu0
      %1367 = vdwg.mxu0
      %vm1368 = vcmask 64512
      %v1369 = vsel %vm1368, %v1363, -inf
      %1370 = vmax.xlane.f32.xlu0 %v1369
      %v1371 = vpop.xlane.xlu0 %1370
      %v1372 = vsub.f32 %v1363, %v1371
      %v1373 = vmul.f32 %v1372, 1.442695
      %v1374 = vpow.pop %v1373
      %v1375 = vsel %vm1368, %v1374, 0.0
      %1376 = vadd.xlane.f32.xlu0 %v1375
      %v1377 = vpop.xlane.xlu0 %1376
      %v1378 = vrcp.pop %v1377
      %v1379 = vmul.f32 %v1374, %v1378
      %v1380 = vpack.c.bf16 %v1379, %v1379
      %v1382 = vsel %vm1368, %v1380, 0
      %vm1384 = vcmask 1043456
      %v1386 = vsel %vm1384, %v1313, 0
      %1388 = vmatprep.subr.bf16.mxu0 0
      %1389 = vmatpush1.bf16.msra.mxu0 %v1386
      %1390 = vmatprep.subr.bf16.mxu0 0
      %1391 = vmatpush1.bf16.msra.mxu0 0
      %1392 = vmatprep.subr.bf16.mxu0 0
      %1393 = vmatpush1.bf16.msra.mxu0 0
      %1394 = vmatprep.subr.bf16.mxu0 0
      %1395 = vmatpush1.bf16.msra.mxu0 0
      %1396 = vmatprep.subr.bf16.mxu0 0
      %1397 = vmatpush1.bf16.msra.mxu0 0
      %1398 = vmatprep.subr.bf16.mxu0 0
      %1399 = vmatpush1.bf16.msra.mxu0 0
      %1400 = vmatprep.subr.bf16.mxu0 0
      %1401 = vmatpush1.bf16.msra.mxu0 0
      %1402 = vmatprep.subr.bf16.mxu0 0
      %1403 = vmatpush1.bf16.msra.mxu0 0
      %1404 = vmatprep.subr.bf16.mxu0 0
      %1405 = vmatpush1.bf16.msra.mxu0 0
      %1406 = vmatprep.subr.bf16.mxu0 0
      %1407 = vmatpush1.bf16.msra.mxu0 0
      %1408 = vmatprep.subr.bf16.mxu0 0
      %1409 = vmatpush1.bf16.msra.mxu0 0
      %1410 = vmatprep.subr.bf16.mxu0 0
      %1411 = vmatpush1.bf16.msra.mxu0 0
      %1412 = vmatprep.subr.bf16.mxu0 0
      %1413 = vmatpush1.bf16.msra.mxu0 0
      %1414 = vmatprep.subr.bf16.mxu0 0
      %1415 = vmatpush1.bf16.msra.mxu0 0
      %1416 = vmatprep.subr.bf16.mxu0 0
      %1417 = vmatpush1.bf16.msra.mxu0 0
      %1418 = vmatprep.subr.bf16.mxu0 0
      %1419 = vmatpush1.bf16.msra.mxu0 0
      %1420 = vmatprep.mubr.bf16.mxu0 0
      %1421 = vmatmul.mubr.bf16.gmra.mrb[0].mxu0 %v1382
      %v1422 = vpop.f32.mrb[0].mxu0
      %v1423 = vadd.f32 0.0, %v1422
      %v1424 = vpop.f32.mrb[0].mxu0
      %v1425 = vpop.f32.mrb[0].mxu0
      %v1426 = vpop.f32.mrb[0].mxu0
      %1427 = vdwg.mxu0
      %v1428 = vpack.c.bf16 %v1423, %v1423
      %v1429 = vld [vmem:[%s897] sm:$0xf]
      %v1430 = vld [vmem:[%s897 + $0x4] sm:$0xf]
      %v1431 = vld [vmem:[%s897 + $0x8] sm:$0xf]
      %v1432 = vld [vmem:[%s897 + $0xc] sm:$0xf]
      %v1433 = vld [vmem:[%s897 + $0x10] sm:$0xf]
      %v1434 = vld [vmem:[%s897 + $0x14] sm:$0xf]
      %v1435 = vld [vmem:[%s897 + $0x18] sm:$0xf]
      %v1436 = vld [vmem:[%s897 + $0x1c] sm:$0xf]
      %1438 = vrot.lane.b32.xlu0 %v1311, 64
      %v1439 = vpop.permute.xlu0 %1438
      %1441 = vrot.lane.b32.xlu0 %v1312, 64
      %v1442 = vpop.permute.xlu0 %1441
      %v1444 = vsel %vm1321, %v1439, 0
      %v1447 = vsel %vm1321, %v1442, 0
      %1449 = vmatprep.subr.bf16.mxu0 0
      %1450 = vmatpush1.bf16.xpose.msra.mxu0 %v1447
      %1451 = vmatprep.subr.bf16.mxu0 0
      %1452 = vmatpush1.bf16.xpose.msra.mxu0 0
      %1453 = vmatprep.subr.bf16.mxu0 0
      %1454 = vmatpush1.bf16.xpose.msra.mxu0 0
      %1455 = vmatprep.subr.bf16.mxu0 0
      %1456 = vmatpush1.bf16.xpose.msra.mxu0 0
      %1457 = vmatprep.subr.bf16.mxu0 0
      %1458 = vmatpush1.bf16.xpose.msra.mxu0 0
      %1459 = vmatprep.subr.bf16.mxu0 0
      %1460 = vmatpush1.bf16.xpose.msra.mxu0 0
      %1461 = vmatprep.subr.bf16.mxu0 0
      %1462 = vmatpush1.bf16.xpose.msra.mxu0 0
      %1463 = vmatprep.subr.bf16.mxu0 0
      %1464 = vmatpush1.bf16.xpose.msra.mxu0 0
      %1465 = vmatprep.subr.bf16.mxu0 0
      %1466 = vmatpush1.bf16.xpose.msra.mxu0 0
      %1467 = vmatprep.subr.bf16.mxu0 0
      %1468 = vmatpush1.bf16.xpose.msra.mxu0 0
      %1469 = vmatprep.subr.bf16.mxu0 0
      %1470 = vmatpush1.bf16.xpose.msra.mxu0 0
      %1471 = vmatprep.subr.bf16.mxu0 0
      %1472 = vmatpush1.bf16.xpose.msra.mxu0 0
      %1473 = vmatprep.subr.bf16.mxu0 0
      %1474 = vmatpush1.bf16.xpose.msra.mxu0 0
      %1475 = vmatprep.subr.bf16.mxu0 0
      %1476 = vmatpush1.bf16.xpose.msra.mxu0 0
      %1477 = vmatprep.subr.bf16.mxu0 0
      %1478 = vmatpush1.bf16.xpose.msra.mxu0 0
      %1479 = vmatprep.subr.bf16.mxu0 0
      %1480 = vmatpush1.bf16.xpose.msra.mxu0 0
      %1481 = vmatprep.mubr.bf16.mxu0 0
      %1482 = vmatmul.mubr.bf16.gmra.mrb[0].mxu0 %v1444
      %v1483 = vpop.f32.mrb[0].mxu0
      %v1484 = vadd.f32 %v1319, %v1483
      %v1485 = vpop.f32.mrb[0].mxu0
      %v1486 = vpop.f32.mrb[0].mxu0
      %v1487 = vpop.f32.mrb[0].mxu0
      %1488 = vdwg.mxu0
      %v1489 = vsel %vm1368, %v1484, -inf
      %1490 = vmax.xlane.f32.xlu0 %v1489
      %v1491 = vpop.xlane.xlu0 %1490
      %v1492 = vsub.f32 %v1484, %v1491
      %v1493 = vmul.f32 %v1492, 1.442695
      %v1494 = vpow.pop %v1493
      %v1495 = vsel %vm1368, %v1494, 0.0
      %1496 = vadd.xlane.f32.xlu0 %v1495
      %v1497 = vpop.xlane.xlu0 %1496
      %v1498 = vrcp.pop %v1497
      %v1499 = vmul.f32 %v1494, %v1498
      %v1500 = vpack.c.bf16 %v1499, %v1499
      %1502 = vrot.lane.b32.xlu0 %v1313, 64
      %v1503 = vpop.permute.xlu0 %1502
      %v1505 = vsel %vm1368, %v1500, 0
      %v1508 = vsel %vm1384, %v1503, 0
      %1510 = vmatprep.subr.bf16.mxu0 0
      %1511 = vmatpush1.bf16.msra.mxu0 %v1508
      %1512 = vmatprep.subr.bf16.mxu0 0
      %1513 = vmatpush1.bf16.msra.mxu0 0
      %1514 = vmatprep.subr.bf16.mxu0 0
      %1515 = vmatpush1.bf16.msra.mxu0 0
      %1516 = vmatprep.subr.bf16.mxu0 0
      %1517 = vmatpush1.bf16.msra.mxu0 0
      %1518 = vmatprep.subr.bf16.mxu0 0
      %1519 = vmatpush1.bf16.msra.mxu0 0
      %1520 = vmatprep.subr.bf16.mxu0 0
      %1521 = vmatpush1.bf16.msra.mxu0 0
      %1522 = vmatprep.subr.bf16.mxu0 0
      %1523 = vmatpush1.bf16.msra.mxu0 0
      %1524 = vmatprep.subr.bf16.mxu0 0
      %1525 = vmatpush1.bf16.msra.mxu0 0
      %1526 = vmatprep.subr.bf16.mxu0 0
      %1527 = vmatpush1.bf16.msra.mxu0 0
      %1528 = vmatprep.subr.bf16.mxu0 0
      %1529 = vmatpush1.bf16.msra.mxu0 0
      %1530 = vmatprep.subr.bf16.mxu0 0
      %1531 = vmatpush1.bf16.msra.mxu0 0
      %1532 = vmatprep.subr.bf16.mxu0 0
      %1533 = vmatpush1.bf16.msra.mxu0 0
      %1534 = vmatprep.subr.bf16.mxu0 0
      %1535 = vmatpush1.bf16.msra.mxu0 0
      %1536 = vmatprep.subr.bf16.mxu0 0
      %1537 = vmatpush1.bf16.msra.mxu0 0
      %1538 = vmatprep.subr.bf16.mxu0 0
      %1539 = vmatpush1.bf16.msra.mxu0 0
      %1540 = vmatprep.subr.bf16.mxu0 0
      %1541 = vmatpush1.bf16.msra.mxu0 0
      %1542 = vmatprep.mubr.bf16.mxu0 0
      %1543 = vmatmul.mubr.bf16.gmra.mrb[0].mxu0 %v1505
      %v1544 = vpop.f32.mrb[0].mxu0
      %v1545 = vadd.f32 0.0, %v1544
      %v1546 = vpop.f32.mrb[0].mxu0
      %v1547 = vpop.f32.mrb[0].mxu0
      %v1548 = vpop.f32.mrb[0].mxu0
      %1549 = vdwg.mxu0
      %v1550 = vpack.c.bf16 %v1545, %v1545
      %v1551 = vld [vmem:[%s897 + $0x20] sm:$0xf]
      %v1552 = vld [vmem:[%s897 + $0x24] sm:$0xf]
      %v1553 = vld [vmem:[%s897 + $0x28] sm:$0xf]
      %v1554 = vld [vmem:[%s897 + $0x2c] sm:$0xf]
      %v1555 = vld [vmem:[%s897 + $0x30] sm:$0xf]
      %v1556 = vld [vmem:[%s897 + $0x34] sm:$0xf]
      %v1557 = vld [vmem:[%s897 + $0x38] sm:$0xf]
      %v1558 = vld [vmem:[%s897 + $0x3c] sm:$0xf]
      %v1567 = vunpack.c.l.b16 %v1551
      %v1568 = vunpack.c.l.b16 %v1552
      %v1569 = vunpack.c.l.b16 %v1553
      %v1570 = vunpack.c.l.b16 %v1554
      %v1571 = vunpack.c.l.b16 %v1555
      %v1572 = vunpack.c.l.b16 %v1556
      %v1573 = vunpack.c.l.b16 %v1557
      %v1574 = vunpack.c.l.b16 %v1558
      %v1575 = vpack.c.b16 %v1568, %v1567
      %v1576 = vpack.c.b16 %v1570, %v1569
      %v1577 = vpack.c.b16 %v1572, %v1571
      %v1578 = vpack.c.b16 %v1574, %v1573
      %v1584 = vsel %vm1321, %v1550, 0
      %1586 = vmatprep.subr.bf16.mxu0 0
      %1587 = vmatpush1.bf16.msra.mxu0 %v1575
      %1588 = vmatprep.subr.bf16.mxu0 0
      %1589 = vmatpush1.bf16.msra.mxu0 %v1576
      %1590 = vmatprep.subr.bf16.mxu0 0
      %1591 = vmatpush1.bf16.msra.mxu0 %v1577
      %1592 = vmatprep.subr.bf16.mxu0 0
      %1593 = vmatpush1.bf16.msra.mxu0 %v1578
      %1594 = vmatprep.subr.bf16.mxu0 0
      %1595 = vmatpush1.bf16.msra.mxu0 0
      %1596 = vmatprep.subr.bf16.mxu0 0
      %1597 = vmatpush1.bf16.msra.mxu0 0
      %1598 = vmatprep.subr.bf16.mxu0 0
      %1599 = vmatpush1.bf16.msra.mxu0 0
      %1600 = vmatprep.subr.bf16.mxu0 0
      %1601 = vmatpush1.bf16.msra.mxu0 0
      %1602 = vmatprep.subr.bf16.mxu0 0
      %1603 = vmatpush1.bf16.msra.mxu0 0
      %1604 = vmatprep.subr.bf16.mxu0 0
      %1605 = vmatpush1.bf16.msra.mxu0 0
      %1606 = vmatprep.subr.bf16.mxu0 0
      %1607 = vmatpush1.bf16.msra.mxu0 0
      %1608 = vmatprep.subr.bf16.mxu0 0
      %1609 = vmatpush1.bf16.msra.mxu0 0
      %1610 = vmatprep.subr.bf16.mxu0 0
      %1611 = vmatpush1.bf16.msra.mxu0 0
      %1612 = vmatprep.subr.bf16.mxu0 0
      %1613 = vmatpush1.bf16.msra.mxu0 0
      %1614 = vmatprep.subr.bf16.mxu0 0
      %1615 = vmatpush1.bf16.msra.mxu0 0
      %1616 = vmatprep.subr.bf16.mxu0 0
      %1617 = vmatpush1.bf16.msra.mxu0 0
      %1618 = vmatprep.mubr.bf16.mxu0 0
      %1619 = vmatmul.mubr.bf16.gmra.mrb[0].mxu0 %v1584
      %v1620 = vpop.f32.mrb[0].mxu0
      %v1621 = vadd.f32 0.0, %v1620
      %v1622 = vpop.f32.mrb[0].mxu0
      %v1623 = vpop.f32.mrb[0].mxu0
      %v1624 = vpop.f32.mrb[0].mxu0
      %1625 = vdwg.mxu0
      %v1634 = vunpack.c.l.b16 %v1429
      %v1635 = vunpack.c.l.b16 %v1430
      %v1636 = vunpack.c.l.b16 %v1431
      %v1637 = vunpack.c.l.b16 %v1432
      %v1638 = vunpack.c.l.b16 %v1433
      %v1639 = vunpack.c.l.b16 %v1434
      %v1640 = vunpack.c.l.b16 %v1435
      %v1641 = vunpack.c.l.b16 %v1436
      %v1642 = vpack.c.b16 %v1635, %v1634
      %v1643 = vpack.c.b16 %v1637, %v1636
      %v1644 = vpack.c.b16 %v1639, %v1638
      %v1645 = vpack.c.b16 %v1641, %v1640
      %v1651 = vsel %vm1321, %v1428, 0
      %1653 = vmatprep.subr.bf16.mxu0 0
      %1654 = vmatpush1.bf16.msra.mxu0 %v1642
      %1655 = vmatprep.subr.bf16.mxu0 0
      %1656 = vmatpush1.bf16.msra.mxu0 %v1643
      %1657 = vmatprep.subr.bf16.mxu0 0
      %1658 = vmatpush1.bf16.msra.mxu0 %v1644
      %1659 = vmatprep.subr.bf16.mxu0 0
      %1660 = vmatpush1.bf16.msra.mxu0 %v1645
      %1661 = vmatprep.subr.bf16.mxu0 0
      %1662 = vmatpush1.bf16.msra.mxu0 0
      %1663 = vmatprep.subr.bf16.mxu0 0
      %1664 = vmatpush1.bf16.msra.mxu0 0
      %1665 = vmatprep.subr.bf16.mxu0 0
      %1666 = vmatpush1.bf16.msra.mxu0 0
      %1667 = vmatprep.subr.bf16.mxu0 0
      %1668 = vmatpush1.bf16.msra.mxu0 0
      %1669 = vmatprep.subr.bf16.mxu0 0
      %1670 = vmatpush1.bf16.msra.mxu0 0
      %1671 = vmatprep.subr.bf16.mxu0 0
      %1672 = vmatpush1.bf16.msra.mxu0 0
      %1673 = vmatprep.subr.bf16.mxu0 0
      %1674 = vmatpush1.bf16.msra.mxu0 0
      %1675 = vmatprep.subr.bf16.mxu0 0
      %1676 = vmatpush1.bf16.msra.mxu0 0
      %1677 = vmatprep.subr.bf16.mxu0 0
      %1678 = vmatpush1.bf16.msra.mxu0 0
      %1679 = vmatprep.subr.bf16.mxu0 0
      %1680 = vmatpush1.bf16.msra.mxu0 0
      %1681 = vmatprep.subr.bf16.mxu0 0
      %1682 = vmatpush1.bf16.msra.mxu0 0
      %1683 = vmatprep.subr.bf16.mxu0 0
      %1684 = vmatpush1.bf16.msra.mxu0 0
      %1685 = vmatprep.mubr.bf16.mxu0 0
      %1686 = vmatmul.mubr.bf16.gmra.mrb[0].mxu0 %v1651
      %v1687 = vpop.f32.mrb[0].mxu0
      %v1688 = vadd.f32 %v1621, %v1687
      %v1689 = vpop.f32.mrb[0].mxu0
      %v1690 = vpop.f32.mrb[0].mxu0
      %v1691 = vpop.f32.mrb[0].mxu0
      %1692 = vdwg.mxu0
      %v1693 = vld [vmem:[%s900] sm:$0x1]
      %v1695 = vlaneseq
      %v1696 = vshrl.u32 %v1695, 7
      %v1697 = vsub.s32 0, %v1696
      %v1698 = vrot.slane %v1693, %v1697
      %v1700 = vadd.f32 %v1688, %v1698
      %v1701 = vld [vmem:[%s903] sm:$0x1]
      %v1703 = vlaneseq
      %v1704 = vshrl.u32 %v1703, 7
      %v1705 = vsub.s32 0, %v1704
      %v1706 = vrot.slane %v1701, %v1705
      %v1708 = vmul.f32 %v1700, %v1706
      %v1709 = vadd.f32 %v945, %v1708
      %v1710 = vld [vmem:[%s906] sm:$0x1]
      %v1711 = vld [vmem:[%s909] sm:$0x1]
      %1712 = vadd.xlane.f32.xlu0 %v1709
      %v1713 = vpop.xlane.xlu0 %1712
      %v1714 = vmul.f32 %v1713, 0.0078125
      %v1715 = vmul.f32 %v1709, %v1709
      %1716 = vadd.xlane.f32.xlu0 %v1715
      %v1717 = vpop.xlane.xlu0 %1716
      %v1718 = vmul.f32 %v1717, 0.0078125
      %v1719 = vmul.f32 %v1714, %v1714
      %v1720 = vsub.f32 %v1718, %v1719
      %v1721 = vmax.f32 %v1720, 0.0
      %v1722 = vsub.f32 %v1709, %v1714
      %v1723 = vadd.f32 %v1721, 1e-06
      %v1724 = vrsqrt.pop %v1723
      %v1725 = vmul.f32 %v1722, %v1724
      %v1727 = vlaneseq
      %v1728 = vshrl.u32 %v1727, 7
      %v1729 = vsub.s32 0, %v1728
      %v1730 = vrot.slane %v1710, %v1729
      %v1732 = vmul.f32 %v1725, %v1730
      %v1734 = vlaneseq
      %v1735 = vshrl.u32 %v1734, 7
      %v1736 = vsub.s32 0, %v1735
      %v1737 = vrot.slane %v1711, %v1736
      %v1739 = vadd.f32 %v1732, %v1737
      %v1740 = vpack.c.bf16 %v1739, %v1739
      %v1741 = vld [vmem:[%s914] sm:$0xff]
      %v1742 = vld [vmem:[%s914 + $0x8] sm:$0xff]
      %v1743 = vld [vmem:[%s914 + $0x10] sm:$0xff]
      %v1744 = vld [vmem:[%s914 + $0x18] sm:$0xff]
      %v1745 = vld [vmem:[%s914 + $0x20] sm:$0xff]
      %v1746 = vld [vmem:[%s914 + $0x28] sm:$0xff]
      %v1747 = vld [vmem:[%s914 + $0x30] sm:$0xff]
      %v1748 = vld [vmem:[%s914 + $0x38] sm:$0xff]
      %v1749 = vld [vmem:[%s914 + $0x40] sm:$0xff]
      %v1750 = vld [vmem:[%s914 + $0x48] sm:$0xff]
      %v1751 = vld [vmem:[%s914 + $0x50] sm:$0xff]
      %v1752 = vld [vmem:[%s914 + $0x58] sm:$0xff]
      %v1753 = vld [vmem:[%s914 + $0x60] sm:$0xff]
      %v1754 = vld [vmem:[%s914 + $0x68] sm:$0xff]
      %v1755 = vld [vmem:[%s914 + $0x70] sm:$0xff]
      %v1756 = vld [vmem:[%s914 + $0x78] sm:$0xff]
      %v1757 = vld [vmem:[%s914 + $0x80] sm:$0xff]
      %v1758 = vld [vmem:[%s914 + $0x88] sm:$0xff]
      %v1759 = vld [vmem:[%s914 + $0x90] sm:$0xff]
      %v1760 = vld [vmem:[%s914 + $0x98] sm:$0xff]
      %v1761 = vld [vmem:[%s914 + $0xa0] sm:$0xff]
      %v1762 = vld [vmem:[%s914 + $0xa8] sm:$0xff]
      %v1763 = vld [vmem:[%s914 + $0xb0] sm:$0xff]
      %v1764 = vld [vmem:[%s914 + $0xb8] sm:$0xff]
      %v1765 = vld [vmem:[%s914 + $0xc0] sm:$0xff]
      %v1766 = vld [vmem:[%s914 + $0xc8] sm:$0xff]
      %v1767 = vld [vmem:[%s914 + $0xd0] sm:$0xff]
      %v1768 = vld [vmem:[%s914 + $0xd8] sm:$0xff]
      %v1769 = vld [vmem:[%s914 + $0xe0] sm:$0xff]
      %v1770 = vld [vmem:[%s914 + $0xe8] sm:$0xff]
      %v1771 = vld [vmem:[%s914 + $0xf0] sm:$0xff]
      %v1772 = vld [vmem:[%s914 + $0xf8] sm:$0xff]
      %v1773 = vld [vmem:[%s918] sm:$0xf]
      %v1775 = vlaneseq
      %v1776 = vshrl.u32 %v1775, 7
      %v1777 = vsub.s32 0, %v1776
      %v1778 = vrot.slane %v1773, %v1777
      %v1779 = vlaneseq
      %v1780 = vshrl.u32 %v1779, 7
      %v1781 = vsub.s32 1, %v1780
      %v1782 = vrot.slane %v1773, %v1781
      %v1783 = vlaneseq
      %v1784 = vshrl.u32 %v1783, 7
      %v1785 = vsub.s32 2, %v1784
      %v1786 = vrot.slane %v1773, %v1785
      %v1787 = vlaneseq
      %v1788 = vshrl.u32 %v1787, 7
      %v1789 = vsub.s32 3, %v1788
      %v1790 = vrot.slane %v1773, %v1789
      %v1827 = vunpack.c.l.b16 %v1741
      %v1828 = vunpack.c.h.b16 %v1741
      %v1829 = vunpack.c.l.b16 %v1742
      %v1830 = vunpack.c.h.b16 %v1742
      %v1831 = vunpack.c.l.b16 %v1743
      %v1832 = vunpack.c.h.b16 %v1743
      %v1833 = vunpack.c.l.b16 %v1744
      %v1834 = vunpack.c.h.b16 %v1744
      %v1835 = vunpack.c.l.b16 %v1745
      %v1836 = vunpack.c.h.b16 %v1745
      %v1837 = vunpack.c.l.b16 %v1746
      %v1838 = vunpack.c.h.b16 %v1746
      %v1839 = vunpack.c.l.b16 %v1747
      %v1840 = vunpack.c.h.b16 %v1747
      %v1841 = vunpack.c.l.b16 %v1748
      %v1842 = vunpack.c.h.b16 %v1748
      %v1843 = vunpack.c.l.b16 %v1749
      %v1844 = vunpack.c.h.b16 %v1749
      %v1845 = vunpack.c.l.b16 %v1750
      %v1846 = vunpack.c.h.b16 %v1750
      %v1847 = vunpack.c.l.b16 %v1751
      %v1848 = vunpack.c.h.b16 %v1751
      %v1849 = vunpack.c.l.b16 %v1752
      %v1850 = vunpack.c.h.b16 %v1752
      %v1851 = vunpack.c.l.b16 %v1753
      %v1852 = vunpack.c.h.b16 %v1753
      %v1853 = vunpack.c.l.b16 %v1754
      %v1854 = vunpack.c.h.b16 %v1754
      %v1855 = vunpack.c.l.b16 %v1755
      %v1856 = vunpack.c.h.b16 %v1755
      %v1857 = vunpack.c.l.b16 %v1756
      %v1858 = vunpack.c.h.b16 %v1756
      %v1859 = vunpack.c.l.b16 %v1757
      %v1860 = vunpack.c.h.b16 %v1757
      %v1861 = vunpack.c.l.b16 %v1758
      %v1862 = vunpack.c.h.b16 %v1758
      %v1863 = vunpack.c.l.b16 %v1759
      %v1864 = vunpack.c.h.b16 %v1759
      %v1865 = vunpack.c.l.b16 %v1760
      %v1866 = vunpack.c.h.b16 %v1760
      %v1867 = vunpack.c.l.b16 %v1761
      %v1868 = vunpack.c.h.b16 %v1761
      %v1869 = vunpack.c.l.b16 %v1762
      %v1870 = vunpack.c.h.b16 %v1762
      %v1871 = vunpack.c.l.b16 %v1763
      %v1872 = vunpack.c.h.b16 %v1763
      %v1873 = vunpack.c.l.b16 %v1764
      %v1874 = vunpack.c.h.b16 %v1764
      %v1875 = vunpack.c.l.b16 %v1765
      %v1876 = vunpack.c.h.b16 %v1765
      %v1877 = vunpack.c.l.b16 %v1766
      %v1878 = vunpack.c.h.b16 %v1766
      %v1879 = vunpack.c.l.b16 %v1767
      %v1880 = vunpack.c.h.b16 %v1767
      %v1881 = vunpack.c.l.b16 %v1768
      %v1882 = vunpack.c.h.b16 %v1768
      %v1883 = vunpack.c.l.b16 %v1769
      %v1884 = vunpack.c.h.b16 %v1769
      %v1885 = vunpack.c.l.b16 %v1770
      %v1886 = vunpack.c.h.b16 %v1770
      %v1887 = vunpack.c.l.b16 %v1771
      %v1888 = vunpack.c.h.b16 %v1771
      %v1889 = vunpack.c.l.b16 %v1772
      %v1890 = vunpack.c.h.b16 %v1772
      %v1891 = vpack.c.b16 %v1831, %v1827
      %v1892 = vpack.c.b16 %v1832, %v1828
      %v1893 = vpack.c.b16 %v1833, %v1829
      %v1894 = vpack.c.b16 %v1834, %v1830
      %v1895 = vpack.c.b16 %v1839, %v1835
      %v1896 = vpack.c.b16 %v1840, %v1836
      %v1897 = vpack.c.b16 %v1841, %v1837
      %v1898 = vpack.c.b16 %v1842, %v1838
      %v1899 = vpack.c.b16 %v1847, %v1843
      %v1900 = vpack.c.b16 %v1848, %v1844
      %v1901 = vpack.c.b16 %v1849, %v1845
      %v1902 = vpack.c.b16 %v1850, %v1846
      %v1903 = vpack.c.b16 %v1855, %v1851
      %v1904 = vpack.c.b16 %v1856, %v1852
      %v1905 = vpack.c.b16 %v1857, %v1853
      %v1906 = vpack.c.b16 %v1858, %v1854
      %v1907 = vpack.c.b16 %v1863, %v1859
      %v1908 = vpack.c.b16 %v1864, %v1860
      %v1909 = vpack.c.b16 %v1865, %v1861
      %v1910 = vpack.c.b16 %v1866, %v1862
      %v1911 = vpack.c.b16 %v1871, %v1867
      %v1912 = vpack.c.b16 %v1872, %v1868
      %v1913 = vpack.c.b16 %v1873, %v1869
      %v1914 = vpack.c.b16 %v1874, %v1870
      %v1915 = vpack.c.b16 %v1879, %v1875
      %v1916 = vpack.c.b16 %v1880, %v1876
      %v1917 = vpack.c.b16 %v1881, %v1877
      %v1918 = vpack.c.b16 %v1882, %v1878
      %v1919 = vpack.c.b16 %v1887, %v1883
      %v1920 = vpack.c.b16 %v1888, %v1884
      %v1921 = vpack.c.b16 %v1889, %v1885
      %v1922 = vpack.c.b16 %v1890, %v1886
      %1955 = vmatprep.subr.bf16.mxu0 %v1892
      %1956 = vmatpush1.bf16.msra.mxu0 %v1891
      %1957 = vmatprep.subr.bf16.mxu0 %v1896
      %1958 = vmatpush1.bf16.msra.mxu0 %v1895
      %1959 = vmatprep.subr.bf16.mxu0 %v1900
      %1960 = vmatpush1.bf16.msra.mxu0 %v1899
      %1961 = vmatprep.subr.bf16.mxu0 %v1904
      %1962 = vmatpush1.bf16.msra.mxu0 %v1903
      %1963 = vmatprep.subr.bf16.mxu0 %v1908
      %1964 = vmatpush1.bf16.msra.mxu0 %v1907
      %1965 = vmatprep.subr.bf16.mxu0 %v1912
      %1966 = vmatpush1.bf16.msra.mxu0 %v1911
      %1967 = vmatprep.subr.bf16.mxu0 %v1916
      %1968 = vmatpush1.bf16.msra.mxu0 %v1915
      %1969 = vmatprep.subr.bf16.mxu0 %v1920
      %1970 = vmatpush1.bf16.msra.mxu0 %v1919
      %1971 = vmatprep.subr.bf16.mxu0 0
      %1972 = vmatpush1.bf16.msra.mxu0 0
      %1973 = vmatprep.subr.bf16.mxu0 0
      %1974 = vmatpush1.bf16.msra.mxu0 0
      %1975 = vmatprep.subr.bf16.mxu0 0
      %1976 = vmatpush1.bf16.msra.mxu0 0
      %1977 = vmatprep.subr.bf16.mxu0 0
      %1978 = vmatpush1.bf16.msra.mxu0 0
      %1979 = vmatprep.subr.bf16.mxu0 0
      %1980 = vmatpush1.bf16.msra.mxu0 0
      %1981 = vmatprep.subr.bf16.mxu0 0
      %1982 = vmatpush1.bf16.msra.mxu0 0
      %1983 = vmatprep.subr.bf16.mxu0 0
      %1984 = vmatpush1.bf16.msra.mxu0 0
      %1985 = vmatprep.subr.bf16.mxu0 0
      %1986 = vmatpush1.bf16.msra.mxu0 0
      %1987 = vmatprep.mubr.bf16.mxu0 0
      %1988 = vmatmul.mubr.bf16.gmra.mrb[0].mxu0 %v1740
      %v1989 = vpop.f32.mrb[0].mxu0
      %v1990 = vadd.f32 %v1778, %v1989
      %v1991 = vpop.f32.mrb[0].mxu0
      %v1992 = vadd.f32 %v1782, %v1991
      %v1993 = vpop.f32.mrb[0].mxu0
      %v1994 = vpop.f32.mrb[0].mxu0
      %1995 = vdwg.mxu0
      %1996 = vmatprep.subr.bf16.mxu0 %v1894
      %1997 = vmatpush1.bf16.msra.mxu0 %v1893
      %1998 = vmatprep.subr.bf16.mxu0 %v1898
      %1999 = vmatpush1.bf16.msra.mxu0 %v1897
      %2000 = vmatprep.subr.bf16.mxu0 %v1902
      %2001 = vmatpush1.bf16.msra.mxu0 %v1901
      %2002 = vmatprep.subr.bf16.mxu0 %v1906
      %2003 = vmatpush1.bf16.msra.mxu0 %v1905
      %2004 = vmatprep.subr.bf16.mxu0 %v1910
      %2005 = vmatpush1.bf16.msra.mxu0 %v1909
      %2006 = vmatprep.subr.bf16.mxu0 %v1914
      %2007 = vmatpush1.bf16.msra.mxu0 %v1913
      %2008 = vmatprep.subr.bf16.mxu0 %v1918
      %2009 = vmatpush1.bf16.msra.mxu0 %v1917
      %2010 = vmatprep.subr.bf16.mxu0 %v1922
      %2011 = vmatpush1.bf16.msra.mxu0 %v1921
      %2012 = vmatprep.subr.bf16.mxu0 0
      %2013 = vmatpush1.bf16.msra.mxu0 0
      %2014 = vmatprep.subr.bf16.mxu0 0
      %2015 = vmatpush1.bf16.msra.mxu0 0
      %2016 = vmatprep.subr.bf16.mxu0 0
      %2017 = vmatpush1.bf16.msra.mxu0 0
      %2018 = vmatprep.subr.bf16.mxu0 0
      %2019 = vmatpush1.bf16.msra.mxu0 0
      %2020 = vmatprep.subr.bf16.mxu0 0
      %2021 = vmatpush1.bf16.msra.mxu0 0
      %2022 = vmatprep.subr.bf16.mxu0 0
      %2023 = vmatpush1.bf16.msra.mxu0 0
      %2024 = vmatprep.subr.bf16.mxu0 0
      %2025 = vmatpush1.bf16.msra.mxu0 0
      %2026 = vmatprep.subr.bf16.mxu0 0
      %2027 = vmatpush1.bf16.msra.mxu0 0
      %2028 = vmatprep.mubr.bf16.mxu0 0
      %2029 = vmatmul.mubr.bf16.gmra.mrb[0].mxu0 %v1740
      %v2030 = vpop.f32.mrb[0].mxu0
      %v2031 = vadd.f32 %v1786, %v2030
      %v2032 = vpop.f32.mrb[0].mxu0
      %v2033 = vadd.f32 %v1790, %v2032
      %v2034 = vpop.f32.mrb[0].mxu0
      %v2035 = vpop.f32.mrb[0].mxu0
      %2036 = vdwg.mxu0
      %v2037 = vmul.f32 %v1990, %v1990
      %v2038 = vmul.f32 %v1992, %v1992
      %v2039 = vmul.f32 %v2031, %v2031
      %v2040 = vmul.f32 %v2033, %v2033
      %v2041 = vmul.f32 %v1990, %v2037
      %v2042 = vmul.f32 %v1992, %v2038
      %v2043 = vmul.f32 %v2031, %v2039
      %v2044 = vmul.f32 %v2033, %v2040
      %v2045 = vmul.f32 %v2041, 0.044715
      %v2046 = vmul.f32 %v2042, 0.044715
      %v2047 = vmul.f32 %v2043, 0.044715
      %v2048 = vmul.f32 %v2044, 0.044715
      %v2049 = vadd.f32 %v1990, %v2045
      %v2050 = vadd.f32 %v1992, %v2046
      %v2051 = vadd.f32 %v2031, %v2047
      %v2052 = vadd.f32 %v2033, %v2048
      %v2053 = vmul.f32 %v2049, 0.7978846
      %v2054 = vmul.f32 %v2050, 0.7978846
      %v2055 = vmul.f32 %v2051, 0.7978846
      %v2056 = vmul.f32 %v2052, 0.7978846
      %v2057 = vtanh.pop %v2053
      %v2058 = vtanh.pop %v2054
      %v2059 = vtanh.pop %v2055
      %v2060 = vtanh.pop %v2056
      %v2061 = vadd.f32 %v2057, 1.0
      %v2062 = vadd.f32 %v2058, 1.0
      %v2063 = vadd.f32 %v2059, 1.0
      %v2064 = vadd.f32 %v2060, 1.0
      %v2065 = vmul.f32 %v2061, 0.5
      %v2066 = vmul.f32 %v2062, 0.5
      %v2067 = vmul.f32 %v2063, 0.5
      %v2068 = vmul.f32 %v2064, 0.5
      %v2069 = vmul.f32 %v1990, %v2065
      %v2070 = vmul.f32 %v1992, %v2066
      %v2071 = vmul.f32 %v2031, %v2067
      %v2072 = vmul.f32 %v2033, %v2068
      %v2073 = vpack.c.bf16 %v2069, %v2069
      %v2074 = vpack.c.bf16 %v2070, %v2070
      %v2075 = vpack.c.bf16 %v2071, %v2071
      %v2076 = vpack.c.bf16 %v2072, %v2072
      %v2077 = vld [vmem:[%s923] sm:$0xf]
      %v2078 = vld [vmem:[%s923 + $0x4] sm:$0xf]
      %v2079 = vld [vmem:[%s923 + $0x8] sm:$0xf]
      %v2080 = vld [vmem:[%s923 + $0xc] sm:$0xf]
      %v2081 = vld [vmem:[%s923 + $0x10] sm:$0xf]
      %v2082 = vld [vmem:[%s923 + $0x14] sm:$0xf]
      %v2083 = vld [vmem:[%s923 + $0x18] sm:$0xf]
      %v2084 = vld [vmem:[%s923 + $0x1c] sm:$0xf]
      %v2085 = vld [vmem:[%s923 + $0x20] sm:$0xf]
      %v2086 = vld [vmem:[%s923 + $0x24] sm:$0xf]
      %v2087 = vld [vmem:[%s923 + $0x28] sm:$0xf]
      %v2088 = vld [vmem:[%s923 + $0x2c] sm:$0xf]
      %v2089 = vld [vmem:[%s923 + $0x30] sm:$0xf]
      %v2090 = vld [vmem:[%s923 + $0x34] sm:$0xf]
      %v2091 = vld [vmem:[%s923 + $0x38] sm:$0xf]
      %v2092 = vld [vmem:[%s923 + $0x3c] sm:$0xf]
      %v2093 = vld [vmem:[%s923 + $0x40] sm:$0xf]
      %v2094 = vld [vmem:[%s923 + $0x44] sm:$0xf]
      %v2095 = vld [vmem:[%s923 + $0x48] sm:$0xf]
      %v2096 = vld [vmem:[%s923 + $0x4c] sm:$0xf]
      %v2097 = vld [vmem:[%s923 + $0x50] sm:$0xf]
      %v2098 = vld [vmem:[%s923 + $0x54] sm:$0xf]
      %v2099 = vld [vmem:[%s923 + $0x58] sm:$0xf]
      %v2100 = vld [vmem:[%s923 + $0x5c] sm:$0xf]
      %v2101 = vld [vmem:[%s923 + $0x60] sm:$0xf]
      %v2102 = vld [vmem:[%s923 + $0x64] sm:$0xf]
      %v2103 = vld [vmem:[%s923 + $0x68] sm:$0xf]
      %v2104 = vld [vmem:[%s923 + $0x6c] sm:$0xf]
      %v2105 = vld [vmem:[%s923 + $0x70] sm:$0xf]
      %v2106 = vld [vmem:[%s923 + $0x74] sm:$0xf]
      %v2107 = vld [vmem:[%s923 + $0x78] sm:$0xf]
      %v2108 = vld [vmem:[%s923 + $0x7c] sm:$0xf]
      %v2109 = vld [vmem:[%s923 + $0x80] sm:$0xf]
      %v2110 = vld [vmem:[%s923 + $0x84] sm:$0xf]
      %v2111 = vld [vmem:[%s923 + $0x88] sm:$0xf]
      %v2112 = vld [vmem:[%s923 + $0x8c] sm:$0xf]
      %v2113 = vld [vmem:[%s923 + $0x90] sm:$0xf]
      %v2114 = vld [vmem:[%s923 + $0x94] sm:$0xf]
      %v2115 = vld [vmem:[%s923 + $0x98] sm:$0xf]
      %v2116 = vld [vmem:[%s923 + $0x9c] sm:$0xf]
      %v2117 = vld [vmem:[%s923 + $0xa0] sm:$0xf]
      %v2118 = vld [vmem:[%s923 + $0xa4] sm:$0xf]
      %v2119 = vld [vmem:[%s923 + $0xa8] sm:$0xf]
      %v2120 = vld [vmem:[%s923 + $0xac] sm:$0xf]
      %v2121 = vld [vmem:[%s923 + $0xb0] sm:$0xf]
      %v2122 = vld [vmem:[%s923 + $0xb4] sm:$0xf]
      %v2123 = vld [vmem:[%s923 + $0xb8] sm:$0xf]
      %v2124 = vld [vmem:[%s923 + $0xbc] sm:$0xf]
      %v2125 = vld [vmem:[%s923 + $0xc0] sm:$0xf]
      %v2126 = vld [vmem:[%s923 + $0xc4] sm:$0xf]
      %v2127 = vld [vmem:[%s923 + $0xc8] sm:$0xf]
      %v2128 = vld [vmem:[%s923 + $0xcc] sm:$0xf]
      %v2129 = vld [vmem:[%s923 + $0xd0] sm:$0xf]
      %v2130 = vld [vmem:[%s923 + $0xd4] sm:$0xf]
      %v2131 = vld [vmem:[%s923 + $0xd8] sm:$0xf]
      %v2132 = vld [vmem:[%s923 + $0xdc] sm:$0xf]
      %v2133 = vld [vmem:[%s923 + $0xe0] sm:$0xf]
      %v2134 = vld [vmem:[%s923 + $0xe4] sm:$0xf]
      %v2135 = vld [vmem:[%s923 + $0xe8] sm:$0xf]
      %v2136 = vld [vmem:[%s923 + $0xec] sm:$0xf]
      %v2137 = vld [vmem:[%s923 + $0xf0] sm:$0xf]
      %v2138 = vld [vmem:[%s923 + $0xf4] sm:$0xf]
      %v2139 = vld [vmem:[%s923 + $0xf8] sm:$0xf]
      %v2140 = vld [vmem:[%s923 + $0xfc] sm:$0xf]
      %v2141 = vld [vmem:[%s926] sm:$0x1]
      %v2143 = vlaneseq
      %v2144 = vshrl.u32 %v2143, 7
      %v2145 = vsub.s32 0, %v2144
      %v2146 = vrot.slane %v2141, %v2145
      %v2212 = vunpack.c.l.b16 %v2077
      %v2213 = vunpack.c.l.b16 %v2078
      %v2214 = vunpack.c.l.b16 %v2079
      %v2215 = vunpack.c.l.b16 %v2080
      %v2216 = vunpack.c.l.b16 %v2081
      %v2217 = vunpack.c.l.b16 %v2082
      %v2218 = vunpack.c.l.b16 %v2083
      %v2219 = vunpack.c.l.b16 %v2084
      %v2220 = vunpack.c.l.b16 %v2085
      %v2221 = vunpack.c.l.b16 %v2086
      %v2222 = vunpack.c.l.b16 %v2087
      %v2223 = vunpack.c.l.b16 %v2088
      %v2224 = vunpack.c.l.b16 %v2089
      %v2225 = vunpack.c.l.b16 %v2090
      %v2226 = vunpack.c.l.b16 %v2091
      %v2227 = vunpack.c.l.b16 %v2092
      %v2228 = vunpack.c.l.b16 %v2093
      %v2229 = vunpack.c.l.b16 %v2094
      %v2230 = vunpack.c.l.b16 %v2095
      %v2231 = vunpack.c.l.b16 %v2096
      %v2232 = vunpack.c.l.b16 %v2097
      %v2233 = vunpack.c.l.b16 %v2098
      %v2234 = vunpack.c.l.b16 %v2099
      %v2235 = vunpack.c.l.b16 %v2100
      %v2236 = vunpack.c.l.b16 %v2101
      %v2237 = vunpack.c.l.b16 %v2102
      %v2238 = vunpack.c.l.b16 %v2103
      %v2239 = vunpack.c.l.b16 %v2104
      %v2240 = vunpack.c.l.b16 %v2105
      %v2241 = vunpack.c.l.b16 %v2106
      %v2242 = vunpack.c.l.b16 %v2107
      %v2243 = vunpack.c.l.b16 %v2108
      %v2244 = vunpack.c.l.b16 %v2109
      %v2245 = vunpack.c.l.b16 %v2110
      %v2246 = vunpack.c.l.b16 %v2111
      %v2247 = vunpack.c.l.b16 %v2112
      %v2248 = vunpack.c.l.b16 %v2113
      %v2249 = vunpack.c.l.b16 %v2114
      %v2250 = vunpack.c.l.b16 %v2115
      %v2251 = vunpack.c.l.b16 %v2116
      %v2252 = vunpack.c.l.b16 %v2117
      %v2253 = vunpack.c.l.b16 %v2118
      %v2254 = vunpack.c.l.b16 %v2119
      %v2255 = vunpack.c.l.b16 %v2120
      %v2256 = vunpack.c.l.b16 %v2121
      %v2257 = vunpack.c.l.b16 %v2122
      %v2258 = vunpack.c.l.b16 %v2123
      %v2259 = vunpack.c.l.b16 %v2124
      %v2260 = vunpack.c.l.b16 %v2125
      %v2261 = vunpack.c.l.b16 %v2126
      %v2262 = vunpack.c.l.b16 %v2127
      %v2263 = vunpack.c.l.b16 %v2128
      %v2264 = vunpack.c.l.b16 %v2129
      %v2265 = vunpack.c.l.b16 %v2130
      %v2266 = vunpack.c.l.b16 %v2131
      %v2267 = vunpack.c.l.b16 %v2132
      %v2268 = vunpack.c.l.b16 %v2133
      %v2269 = vunpack.c.l.b16 %v2134
      %v2270 = vunpack.c.l.b16 %v2135
      %v2271 = vunpack.c.l.b16 %v2136
      %v2272 = vunpack.c.l.b16 %v2137
      %v2273 = vunpack.c.l.b16 %v2138
      %v2274 = vunpack.c.l.b16 %v2139
      %v2275 = vunpack.c.l.b16 %v2140
      %v2276 = vpack.c.b16 %v2213, %v2212
      %v2277 = vpack.c.b16 %v2215, %v2214
      %v2278 = vpack.c.b16 %v2217, %v2216
      %v2279 = vpack.c.b16 %v2219, %v2218
      %v2280 = vpack.c.b16 %v2221, %v2220
      %v2281 = vpack.c.b16 %v2223, %v2222
      %v2282 = vpack.c.b16 %v2225, %v2224
      %v2283 = vpack.c.b16 %v2227, %v2226
      %v2284 = vpack.c.b16 %v2229, %v2228
      %v2285 = vpack.c.b16 %v2231, %v2230
      %v2286 = vpack.c.b16 %v2233, %v2232
      %v2287 = vpack.c.b16 %v2235, %v2234
      %v2288 = vpack.c.b16 %v2237, %v2236
      %v2289 = vpack.c.b16 %v2239, %v2238
      %v2290 = vpack.c.b16 %v2241, %v2240
      %v2291 = vpack.c.b16 %v2243, %v2242
      %v2292 = vpack.c.b16 %v2245, %v2244
      %v2293 = vpack.c.b16 %v2247, %v2246
      %v2294 = vpack.c.b16 %v2249, %v2248
      %v2295 = vpack.c.b16 %v2251, %v2250
      %v2296 = vpack.c.b16 %v2253, %v2252
      %v2297 = vpack.c.b16 %v2255, %v2254
      %v2298 = vpack.c.b16 %v2257, %v2256
      %v2299 = vpack.c.b16 %v2259, %v2258
      %v2300 = vpack.c.b16 %v2261, %v2260
      %v2301 = vpack.c.b16 %v2263, %v2262
      %v2302 = vpack.c.b16 %v2265, %v2264
      %v2303 = vpack.c.b16 %v2267, %v2266
      %v2304 = vpack.c.b16 %v2269, %v2268
      %v2305 = vpack.c.b16 %v2271, %v2270
      %v2306 = vpack.c.b16 %v2273, %v2272
      %v2307 = vpack.c.b16 %v2275, %v2274
      %2340 = vmatprep.subr.bf16.mxu0 0
      %2341 = vmatpush1.bf16.msra.mxu0 %v2276
      %2342 = vmatprep.subr.bf16.mxu0 0
      %2343 = vmatpush1.bf16.msra.mxu0 %v2277
      %2344 = vmatprep.subr.bf16.mxu0 0
      %2345 = vmatpush1.bf16.msra.mxu0 %v2278
      %2346 = vmatprep.subr.bf16.mxu0 0
      %2347 = vmatpush1.bf16.msra.mxu0 %v2279
      %2348 = vmatprep.subr.bf16.mxu0 0
      %2349 = vmatpush1.bf16.msra.mxu0 %v2280
      %2350 = vmatprep.subr.bf16.mxu0 0
      %2351 = vmatpush1.bf16.msra.mxu0 %v2281
      %2352 = vmatprep.subr.bf16.mxu0 0
      %2353 = vmatpush1.bf16.msra.mxu0 %v2282
      %2354 = vmatprep.subr.bf16.mxu0 0
      %2355 = vmatpush1.bf16.msra.mxu0 %v2283
      %2356 = vmatprep.subr.bf16.mxu0 0
      %2357 = vmatpush1.bf16.msra.mxu0 %v2284
      %2358 = vmatprep.subr.bf16.mxu0 0
      %2359 = vmatpush1.bf16.msra.mxu0 %v2285
      %2360 = vmatprep.subr.bf16.mxu0 0
      %2361 = vmatpush1.bf16.msra.mxu0 %v2286
      %2362 = vmatprep.subr.bf16.mxu0 0
      %2363 = vmatpush1.bf16.msra.mxu0 %v2287
      %2364 = vmatprep.subr.bf16.mxu0 0
      %2365 = vmatpush1.bf16.msra.mxu0 %v2288
      %2366 = vmatprep.subr.bf16.mxu0 0
      %2367 = vmatpush1.bf16.msra.mxu0 %v2289
      %2368 = vmatprep.subr.bf16.mxu0 0
      %2369 = vmatpush1.bf16.msra.mxu0 %v2290
      %2370 = vmatprep.subr.bf16.mxu0 0
      %2371 = vmatpush1.bf16.msra.mxu0 %v2291
      %2372 = vmatprep.mubr.bf16.mxu0 %v2074
      %2373 = vmatmul.mubr.bf16.gmra.mrb[0].mxu0 %v2073
      %v2374 = vpop.f32.mrb[0].mxu0
      %v2375 = vadd.f32 %v2146, %v2374
      %v2376 = vpop.f32.mrb[0].mxu0
      %v2377 = vpop.f32.mrb[0].mxu0
      %v2378 = vpop.f32.mrb[0].mxu0
      %2379 = vdwg.mxu0
      %2380 = vmatprep.subr.bf16.mxu0 0
      %2381 = vmatpush1.bf16.msra.mxu0 %v2292
      %2382 = vmatprep.subr.bf16.mxu0 0
      %2383 = vmatpush1.bf16.msra.mxu0 %v2293
      %2384 = vmatprep.subr.bf16.mxu0 0
      %2385 = vmatpush1.bf16.msra.mxu0 %v2294
      %2386 = vmatprep.subr.bf16.mxu0 0
      %2387 = vmatpush1.bf16.msra.mxu0 %v2295
      %2388 = vmatprep.subr.bf16.mxu0 0
      %2389 = vmatpush1.bf16.msra.mxu0 %v2296
      %2390 = vmatprep.subr.bf16.mxu0 0
      %2391 = vmatpush1.bf16.msra.mxu0 %v2297
      %2392 = vmatprep.subr.bf16.mxu0 0
      %2393 = vmatpush1.bf16.msra.mxu0 %v2298
      %2394 = vmatprep.subr.bf16.mxu0 0
      %2395 = vmatpush1.bf16.msra.mxu0 %v2299
      %2396 = vmatprep.subr.bf16.mxu0 0
      %2397 = vmatpush1.bf16.msra.mxu0 %v2300
      %2398 = vmatprep.subr.bf16.mxu0 0
      %2399 = vmatpush1.bf16.msra.mxu0 %v2301
      %2400 = vmatprep.subr.bf16.mxu0 0
      %2401 = vmatpush1.bf16.msra.mxu0 %v2302
      %2402 = vmatprep.subr.bf16.mxu0 0
      %2403 = vmatpush1.bf16.msra.mxu0 %v2303
      %2404 = vmatprep.subr.bf16.mxu0 0
      %2405 = vmatpush1.bf16.msra.mxu0 %v2304
      %2406 = vmatprep.subr.bf16.mxu0 0
      %2407 = vmatpush1.bf16.msra.mxu0 %v2305
      %2408 = vmatprep.subr.bf16.mxu0 0
      %2409 = vmatpush1.bf16.msra.mxu0 %v2306
      %2410 = vmatprep.subr.bf16.mxu0 0
      %2411 = vmatpush1.bf16.msra.mxu0 %v2307
      %2412 = vmatprep.mubr.bf16.mxu0 %v2076
      %2413 = vmatmul.mubr.bf16.gmra.mrb[0].mxu0 %v2075
      %v2414 = vpop.f32.mrb[0].mxu0
      %v2415 = vadd.f32 %v2375, %v2414
      %v2416 = vpop.f32.mrb[0].mxu0
      %v2417 = vpop.f32.mrb[0].mxu0
      %v2418 = vpop.f32.mrb[0].mxu0
      %2419 = vdwg.mxu0
      %v2420 = vld [vmem:[%s929] sm:$0x1]
      %v2422 = vlaneseq
      %v2423 = vshrl.u32 %v2422, 7
      %v2424 = vsub.s32 0, %v2423
      %v2425 = vrot.slane %v2420, %v2424
      %v2427 = vmul.f32 %v2415, %v2425
      %v2428 = vadd.f32 %v1709, %v2427
      %2429 = vst [vmem:[#allocation2] sm:$0xff] %v2428
      %2430 = vst [vmem:[%s937] sm:$0xff] %v2428
      %p2431 = scmp.lt.s32.totalorder %s35, 1
      %s2432 = scalar_select %p2431, %s35, 1
      %p2433 = scmp.lt.s32.totalorder %s36, 11
      %s2434 = scalar_select %p2433, %s36, 11
      %s2435 = smul.addr %s2432, 12
      %s2436 = sadd.s32 %s2434, %s2435
      %s2437 = smul.addr %s2436, 8
      %s2438 = scalar_lea.vmem %s20, %s2437
      // Predicated region
      $region105: #{_lambda_.3} parent=99 // pred_check
        %p2439 = pneg %p578
      $region106: #{_lambda_.3} parent=99 // pred_check_branch
        %2441 = sbr.rel (%p2439) target = $region108
      $region107: #{_lambda_.3} parent=99 // pred_region
        _
      $region108: #{_lambda_.3} parent=99 // pred_fallthru
        _
    $region100: #{_lambda_.3} parent=5 // pred_fallthru
      _
    %p2442 = scmp.le.s32.totalorder 2, %s26
    // Predicated region
    $region109: #{_lambda_.3} parent=5 // pred_check
      %p2443 = pneg %p2442
    $region110: #{_lambda_.3} parent=5 // pred_check_branch
      %2445 = sbr.rel (%p2443) target = $region112
    $region111: #{_lambda_.3} parent=5 // pred_region
      %s2446 = ssub.s32 %s26, 2
      // Predicated region
      $region113: #{_lambda_.3} parent=111 // pred_check
        %p2447 = pneg %p584
      $region114: #{_lambda_.3} parent=111 // pred_check_branch
        %2449 = sbr.rel (%p2447) target = $region116
      $region115: #{_lambda_.3} parent=111 // pred_region
        %p2450 = scmp.lt.s32.totalorder %s37, 1
        %s2451 = scalar_select %p2450, %s37, 1
        %p2452 = scmp.lt.s32.totalorder %s38, 11
        %s2453 = scalar_select %p2452, %s38, 11
        %s2454 = smul.addr %s2451, 12
        %s2455 = sadd.s32 %s2453, %s2454
        %s2456 = smul.addr %s2455, 8
        %s2457 = scalar_lea.vmem %s20, %s2456
      $region116: #{_lambda_.3} parent=111 // pred_fallthru
        _
    $region112: #{_lambda_.3} parent=5 // pred_fallthru
      _
  $region6: #{_lambda_.3} parent=0 // loop_footer
    %s30 = sadd.s32 1, %s26
  $region7: #{_lambda_.3} parent=0 // loop_footer_branch
    %25 = sbr.rel target = $region3
  $region8: #{_lambda_.3} parent=0 // loop_exit
    _

</llo_original>
